<compile_context>
chip_gen: v7x
topology: tpu7x:2x2x1
jax: 0.10.0
libtpu: 0.0.40
codegen_flags: <defaults>
</compile_context>

<pallas_src>
import math

import jax
import jax.numpy as jnp
from jax.experimental import pallas as pl
from jax.experimental.pallas import tpu as pltpu

# ----------------------------- model config ---------------------------------
HIDDEN = 32
NUM_HEADS = 4
HEAD_DIM = HIDDEN // NUM_HEADS
INTERMEDIATE = 64
LN_EPS = 1e-12
NEG_INF = -1e30

BATCH = 2
TEXT_LEN = 8
IMG_LEN = 16


# ------------------------------ fused kernel --------------------------------
def _fused_kernel(
    x_ref, img_ref,
    tab_ref,        # (TEXT_LEN + 8, H): [pos+tok emb rows | ln_gamma rows | ln_beta rows]
    wqkv_ref,       # (H, 3H)   fused self-attn QKV
    w64_ref,        # (2H, 2H)  [ca_wkv ; ff_w1]
    ffw2_ref,       # (2H, H)
    whh_ref,        # (4H, H)   [sa_wo ; ca_wq ; ca_wo ; pool_w]
    bias_ref,       # (8, 3H)   zero-padded bias table
    hidden_ref, pooled_ref,
):
    f32 = jnp.float32
    B, St, Si = BATCH, TEXT_LEN, IMG_LEN
    H, nH, dH = HIDDEN, NUM_HEADS, HEAD_DIM
    scale = 1.0 / math.sqrt(dH)

    # ---- unpack packed parameter tables (static, aligned slices => free) ----
    emb_add = tab_ref[0:St, :]                     # (St, H)
    sa_wqkv = wqkv_ref[...]                        # (H, 3H)
    ca_wkv = w64_ref[0:H, :]                       # (H, 2H)
    ff_w1 = w64_ref[H:2 * H, :]                    # (H, 2H)
    ff_w2 = ffw2_ref[...]                          # (2H, H)
    sa_wo = whh_ref[0:H, :]
    ca_wq = whh_ref[H:2 * H, :]
    ca_wo = whh_ref[2 * H:3 * H, :]
    pool_w = whh_ref[3 * H:4 * H, :]
    sa_bqkv = bias_ref[0:1, :]                     # (1, 3H)
    ca_bkv = bias_ref[1:2, :2 * H]
    ff_b1 = bias_ref[2:3, :2 * H]
    sa_bo = bias_ref[3:4, :H]
    ca_bq = bias_ref[4:5, :H]
    ca_bo = bias_ref[5:6, :H]
    ff_b2 = bias_ref[6:7, :H]
    pool_b = bias_ref[7:8, :H]

    def layernorm(x2d, idx):
        g = tab_ref[St + idx:St + idx + 1, :]          # (1, H)
        b = tab_ref[St + 4 + idx:St + 5 + idx, :]      # (1, H)
        mu = jnp.mean(x2d, axis=-1, keepdims=True)
        xc = x2d - mu
        var = jnp.mean(xc * xc, axis=-1, keepdims=True)
        return xc * jax.lax.rsqrt(var + LN_EPS) * g + b

    def softmax(s):
        s = s - jnp.max(s, axis=-1, keepdims=True)
        p = jnp.exp(s)
        return p * pl.reciprocal(jnp.sum(p, axis=-1, keepdims=True), approx=True)

    def mha(q2d, k2d, v2d, Sq, Sk, mask):
        # q2d: (B*Sq, H); k2d, v2d: (B*Sk, H); mask: (Sq, Sk) additive or None.
        q3 = q2d.reshape(B, Sq, H)
        k3 = k2d.reshape(B, Sk, H)
        v3 = v2d.reshape(B, Sk, H)
        ctx_heads = []
        for h in range(nH):                    # static unrolled head loop
            sl = slice(h * dH, (h + 1) * dH)
            s = jnp.einsum('bqd,bkd->bqk', q3[..., sl], k3[..., sl],
                           preferred_element_type=f32) * scale
            if mask is not None:
                s = s + mask[None, :, :]
            p = softmax(s)
            ctx_heads.append(jnp.einsum('bqk,bkd->bqd', p, v3[..., sl],
                                        preferred_element_type=f32))
        ctx = jnp.concatenate(ctx_heads, axis=-1)        # (B, Sq, H)
        return ctx.reshape(B * Sq, H)

    # ---- embeddings: inputs_embeds + (pos + token_type(0)) -> LayerNorm
    x3 = x_ref[...].reshape(B, St, H) + emb_add[None, :, :]
    x = layernorm(x3.reshape(B * St, H), 0)

    # ---- causal self-attention (is_decoder=True), fused QKV projection
    qkv = jnp.dot(x, sa_wqkv, preferred_element_type=f32) + sa_bqkv
    q, k, v = qkv[:, :H], qkv[:, H:2 * H], qkv[:, 2 * H:]
    rows = jax.lax.broadcasted_iota(jnp.int32, (St, St), 0)
    cols = jax.lax.broadcasted_iota(jnp.int32, (St, St), 1)
    causal_mask = jnp.where(rows >= cols, 0.0, NEG_INF).astype(f32)
    ctx = mha(q, k, v, St, St, causal_mask)
    attn_out = jnp.dot(ctx, sa_wo, preferred_element_type=f32) + sa_bo
    h1 = layernorm(attn_out + x, 1)

    # ---- cross-attention over image features (encoder mask of ones => no mask)
    img = img_ref[...]                                   # (B*Si, H)
    qc = jnp.dot(h1, ca_wq, preferred_element_type=f32) + ca_bq
    kvc = jnp.dot(img, ca_wkv, preferred_element_type=f32) + ca_bkv
    kc, vc = kvc[:, :H], kvc[:, H:]
    ctx_c = mha(qc, kc, vc, St, Si, None)
    cross_out = jnp.dot(ctx_c, ca_wo, preferred_element_type=f32) + ca_bo
    h2 = layernorm(cross_out + h1, 2)

    # ---- feed-forward (exact erf-gelu, as in BERT)
    inter = jnp.dot(h2, ff_w1, preferred_element_type=f32) + ff_b1
    inter = 0.5 * inter * (1.0 + jax.lax.erf(inter * (1.0 / math.sqrt(2.0))))
    ffn_out = jnp.dot(inter, ff_w2, preferred_element_type=f32) + ff_b2
    h3 = layernorm(ffn_out + h2, 3)

    hidden_ref[...] = h3.astype(hidden_ref.dtype)

    # ---- pooler: tanh(dense(h3[:, 0])) -- read CLS rows straight from VMEM h3
    cls = jnp.concatenate([h3[b * St:b * St + 1, :] for b in range(B)], axis=0)
    pooled = jnp.tanh(jnp.dot(cls, pool_w, preferred_element_type=f32) + pool_b)
    pooled_ref[...] = pooled.astype(pooled_ref.dtype)


# --------------------------- parameter init ----------------------------------
def init_params(key):
    std = 0.02

    def w(k, shape):
        return std * jax.random.normal(k, shape, dtype=jnp.float32)

    keys = jax.random.split(key, 13)
    pos_emb = w(keys[0], (TEXT_LEN, HIDDEN))
    tok_emb = w(keys[1], (HIDDEN,))            # token_type_id == 0 row

    z_h = jnp.zeros((1, HIDDEN), jnp.float32)
    p = {
        # precomputed position + token-type additive embedding table
        "emb_add": pos_emb + tok_emb[None, :],
        # fused self-attention QKV projection
        "sa_wqkv": jnp.concatenate([w(keys[2], (HIDDEN, HIDDEN)),
                                    w(keys[3], (HIDDEN, HIDDEN)),
                                    w(keys[4], (HIDDEN, HIDDEN))], axis=1),
        "sa_bqkv": jnp.zeros((1, 3 * HIDDEN), jnp.float32),
        "sa_wo": w(keys[5], (HIDDEN, HIDDEN)), "sa_bo": z_h,
        # cross-attention: Q from text, fused KV from image
        "ca_wq": w(keys[6], (HIDDEN, HIDDEN)), "ca_bq": z_h,
        "ca_wkv": jnp.concatenate([w(keys[7], (HIDDEN, HIDDEN)),
                                   w(keys[8], (HIDDEN, HIDDEN))], axis=1),
        "ca_bkv": jnp.zeros((1, 2 * HIDDEN), jnp.float32),
        "ca_wo": w(keys[9], (HIDDEN, HIDDEN)), "ca_bo": z_h,
        # feed-forward
        "ff_w1": w(keys[10], (HIDDEN, INTERMEDIATE)),
        "ff_b1": jnp.zeros((1, INTERMEDIATE), jnp.float32),
        "ff_w2": w(keys[11], (INTERMEDIATE, HIDDEN)), "ff_b2": z_h,
        # pooler
        "pool_w": w(keys[12], (HIDDEN, HIDDEN)), "pool_b": z_h,
        # stacked LayerNorm params: rows = [emb, self-attn, cross-attn, ffn]
        "ln_g": jnp.ones((4, HIDDEN), jnp.float32),
        "ln_b": jnp.zeros((4, HIDDEN), jnp.float32),
    }

    # ---- pack for the kernel (done ONCE at init; every in-kernel unpack slice
    #      is sublane-aligned or starts at lane 0, so unpacking is free) ------
    def padrow(b, width=3 * HIDDEN):
        return jnp.pad(b, ((0, 0), (0, width - b.shape[1])))

    p["tab32"] = jnp.concatenate([p["emb_add"], p["ln_g"], p["ln_b"]], axis=0)
    p["w64"] = jnp.concatenate([p["ca_wkv"], p["ff_w1"]], axis=0)
    p["w_hh"] = jnp.concatenate([p["sa_wo"], p["ca_wq"],
                                 p["ca_wo"], p["pool_w"]], axis=0)
    p["bias_tab"] = jnp.concatenate([
        padrow(p["sa_bqkv"]), padrow(p["ca_bkv"]), padrow(p["ff_b1"]),
        padrow(p["sa_bo"]), padrow(p["ca_bq"]), padrow(p["ca_bo"]),
        padrow(p["ff_b2"]), padrow(p["pool_b"])], axis=0)
    return p


# ------------------------------- forward -------------------------------------
def cross_attention_forward(p, text_feature, image_feature):
    B, St, H = text_feature.shape
    Si = image_feature.shape[1]

    x2d = text_feature.reshape(B * St, H)
    img2d = image_feature.reshape(B * Si, H)

    vmem = pl.BlockSpec(memory_space=pltpu.MemorySpace.VMEM)
    inputs = (x2d, img2d, p["tab32"], p["sa_wqkv"], p["w64"], p["ff_w2"],
              p["w_hh"], p["bias_tab"])

    last_hidden2d, pooled = pl.pallas_call(
        _fused_kernel,
        out_shape=(jax.ShapeDtypeStruct((B * St, H), jnp.float32),
                   jax.ShapeDtypeStruct((B, H), jnp.float32)),
        in_specs=[vmem] * len(inputs),
        out_specs=(vmem, vmem),
    )(*inputs)

    return last_hidden2d.reshape(B, St, H), pooled


# ------------------------- pure-JAX reference ---------------------------------
def reference_forward(p, text_feature, image_feature):
    B, St, H = text_feature.shape
    Si = image_feature.shape[1]
    nH, dH = NUM_HEADS, HEAD_DIM
    scale = 1.0 / math.sqrt(dH)

    def ln(x, i):
        mu = jnp.mean(x, -1, keepdims=True)
        var = jnp.mean((x - mu) ** 2, -1, keepdims=True)
        return (x - mu) * jax.lax.rsqrt(var + LN_EPS) * p["ln_g"][i] + p["ln_b"][i]

    def heads(x2d, S):
        return x2d.reshape(B, S, nH, dH).transpose(0, 2, 1, 3)

    def attn(q2, k2, v2, Sq, Sk, mask):
        q, k, v = heads(q2, Sq), heads(k2, Sk), heads(v2, Sk)
        s = jnp.einsum('bhqd,bhkd->bhqk', q, k) * scale
        if mask is not None:
            s = s + mask
        pr = jax.nn.softmax(s, axis=-1)
        ctx = jnp.einsum('bhqk,bhkd->bhqd', pr, v)
        return ctx.transpose(0, 2, 1, 3).reshape(B * Sq, H)

    x = ln((text_feature + p["emb_add"][None]).reshape(B * St, H), 0)
    qkv = x @ p["sa_wqkv"] + p["sa_bqkv"]
    causal = jnp.where(jnp.arange(St)[:, None] >= jnp.arange(St)[None, :],
                       0.0, NEG_INF).astype(jnp.float32)
    ctx = attn(qkv[:, :H], qkv[:, H:2 * H], qkv[:, 2 * H:], St, St, causal)
    h1 = ln(ctx @ p["sa_wo"] + p["sa_bo"] + x, 1)
    img2d = image_feature.reshape(B * Si, H)
    qc = h1 @ p["ca_wq"] + p["ca_bq"]
    kvc = img2d @ p["ca_wkv"] + p["ca_bkv"]
    ctx_c = attn(qc, kvc[:, :H], kvc[:, H:], St, Si, None)
    h2 = ln(ctx_c @ p["ca_wo"] + p["ca_bo"] + h1, 2)
    inter = h2 @ p["ff_w1"] + p["ff_b1"]
    inter = 0.5 * inter * (1.0 + jax.lax.erf(inter * (1.0 / math.sqrt(2.0))))
    h3 = ln(inter @ p["ff_w2"] + p["ff_b2"] + h2, 3)
    last = h3.reshape(B, St, H)
    pooled = jnp.tanh(last[:, 0, :] @ p["pool_w"] + p["pool_b"])
    return last, pooled


# --------------------------------- main ---------------------------------------
if __name__ == "__main__":
    key = jax.random.PRNGKey(0)
    k_param, k_text, k_img = jax.random.split(key, 3)

    params = init_params(k_param)
    text_feature = jax.random.normal(k_text, (BATCH, TEXT_LEN, HIDDEN), jnp.float32)
    image_feature = jax.random.normal(k_img, (BATCH, IMG_LEN, HIDDEN), jnp.float32)

    fwd = jax.jit(cross_attention_forward)
    last_hidden_state, pooler_output = fwd(params, text_feature, image_feature)
    jax.block_until_ready((last_hidden_state, pooler_output))

    assert last_hidden_state.shape == (BATCH, TEXT_LEN, HIDDEN)
    assert pooler_output.shape == (BATCH, HIDDEN)
    assert bool(jnp.all(jnp.isfinite(last_hidden_state)))
    assert bool(jnp.all(jnp.isfinite(pooler_output)))

    # correctness check vs. pure-JAX reference (loose tol for approx reciprocal)
    ref_hidden, ref_pooled = reference_forward(params, text_feature, image_feature)
    assert bool(jnp.max(jnp.abs(last_hidden_state - ref_hidden)) < 2e-2)
    assert bool(jnp.max(jnp.abs(pooler_output - ref_pooled)) < 2e-2)

    print("KERNEL_OK")
</pallas_src>

<mosaic_0001>
module attributes {stable_mosaic.version = 11 : i64} {
  func.func @_fused_kernel(%arg0: memref<16x32xf32, #tpu.memory_space<vmem>>, %arg1: memref<32x32xf32, #tpu.memory_space<vmem>>, %arg2: memref<16x32xf32, #tpu.memory_space<vmem>>, %arg3: memref<32x96xf32, #tpu.memory_space<vmem>>, %arg4: memref<64x64xf32, #tpu.memory_space<vmem>>, %arg5: memref<64x32xf32, #tpu.memory_space<vmem>>, %arg6: memref<128x32xf32, #tpu.memory_space<vmem>>, %arg7: memref<8x96xf32, #tpu.memory_space<vmem>>, %arg8: memref<16x32xf32, #tpu.memory_space<vmem>>, %arg9: memref<2x32xf32, #tpu.memory_space<vmem>>) attributes {dimension_semantics = [], scalar_prefetch = 0 : i64, scratch_operands = 0 : i64, tpu.core_type = #tpu.core_type<tc>} {
    %c0 = arith.constant 0 : index
    %c0_0 = arith.constant 0 : index
    %0 = vector.load %arg2[%c0, %c0_0] : memref<16x32xf32, #tpu.memory_space<vmem>>, vector<8x32xf32>
    %c0_1 = arith.constant 0 : index
    %c0_2 = arith.constant 0 : index
    %1 = vector.load %arg3[%c0_1, %c0_2] : memref<32x96xf32, #tpu.memory_space<vmem>>, vector<32x96xf32>
    %c0_3 = arith.constant 0 : index
    %c0_4 = arith.constant 0 : index
    %2 = vector.load %arg4[%c0_3, %c0_4] : memref<64x64xf32, #tpu.memory_space<vmem>>, vector<32x64xf32>
    %c32 = arith.constant 32 : index
    %c0_5 = arith.constant 0 : index
    %3 = vector.load %arg4[%c32, %c0_5] : memref<64x64xf32, #tpu.memory_space<vmem>>, vector<32x64xf32>
    %c0_6 = arith.constant 0 : index
    %c0_7 = arith.constant 0 : index
    %4 = vector.load %arg5[%c0_6, %c0_7] : memref<64x32xf32, #tpu.memory_space<vmem>>, vector<64x32xf32>
    %c0_8 = arith.constant 0 : index
    %c0_9 = arith.constant 0 : index
    %5 = vector.load %arg6[%c0_8, %c0_9] : memref<128x32xf32, #tpu.memory_space<vmem>>, vector<32x32xf32>
    %c32_10 = arith.constant 32 : index
    %c0_11 = arith.constant 0 : index
    %6 = vector.load %arg6[%c32_10, %c0_11] : memref<128x32xf32, #tpu.memory_space<vmem>>, vector<32x32xf32>
    %c64 = arith.constant 64 : index
    %c0_12 = arith.constant 0 : index
    %7 = vector.load %arg6[%c64, %c0_12] : memref<128x32xf32, #tpu.memory_space<vmem>>, vector<32x32xf32>
    %c96 = arith.constant 96 : index
    %c0_13 = arith.constant 0 : index
    %8 = vector.load %arg6[%c96, %c0_13] : memref<128x32xf32, #tpu.memory_space<vmem>>, vector<32x32xf32>
    %c0_14 = arith.constant 0 : index
    %c0_15 = arith.constant 0 : index
    %9 = vector.load %arg7[%c0_14, %c0_15] : memref<8x96xf32, #tpu.memory_space<vmem>>, vector<1x96xf32>
    %c1 = arith.constant 1 : index
    %c0_16 = arith.constant 0 : index
    %10 = vector.load %arg7[%c1, %c0_16] : memref<8x96xf32, #tpu.memory_space<vmem>>, vector<1x64xf32>
    %c2 = arith.constant 2 : index
    %c0_17 = arith.constant 0 : index
    %11 = vector.load %arg7[%c2, %c0_17] : memref<8x96xf32, #tpu.memory_space<vmem>>, vector<1x64xf32>
    %c3 = arith.constant 3 : index
    %c0_18 = arith.constant 0 : index
    %12 = vector.load %arg7[%c3, %c0_18] : memref<8x96xf32, #tpu.memory_space<vmem>>, vector<1x32xf32>
    %c4 = arith.constant 4 : index
    %c0_19 = arith.constant 0 : index
    %13 = vector.load %arg7[%c4, %c0_19] : memref<8x96xf32, #tpu.memory_space<vmem>>, vector<1x32xf32>
    %c5 = arith.constant 5 : index
    %c0_20 = arith.constant 0 : index
    %14 = vector.load %arg7[%c5, %c0_20] : memref<8x96xf32, #tpu.memory_space<vmem>>, vector<1x32xf32>
    %c6 = arith.constant 6 : index
    %c0_21 = arith.constant 0 : index
    %15 = vector.load %arg7[%c6, %c0_21] : memref<8x96xf32, #tpu.memory_space<vmem>>, vector<1x32xf32>
    %c7 = arith.constant 7 : index
    %c0_22 = arith.constant 0 : index
    %16 = vector.load %arg7[%c7, %c0_22] : memref<8x96xf32, #tpu.memory_space<vmem>>, vector<1x32xf32>
    %c0_23 = arith.constant 0 : index
    %c0_24 = arith.constant 0 : index
    %17 = vector.load %arg0[%c0_23, %c0_24] : memref<16x32xf32, #tpu.memory_space<vmem>>, vector<16x32xf32>
    %18 = vector.shape_cast %17 : vector<16x32xf32> to vector<2x8x32xf32>
    %19 = vector.shape_cast %0 : vector<8x32xf32> to vector<1x8x32xf32>
    %20 = vector.broadcast %19 : vector<1x8x32xf32> to vector<2x8x32xf32>
    %21 = arith.addf %18, %20 : vector<2x8x32xf32>
    %22 = vector.shape_cast %21 : vector<2x8x32xf32> to vector<16x32xf32>
    %c8 = arith.constant 8 : index
    %c0_25 = arith.constant 0 : index
    %23 = vector.load %arg2[%c8, %c0_25] : memref<16x32xf32, #tpu.memory_space<vmem>>, vector<1x32xf32>
    %c12 = arith.constant 12 : index
    %c0_26 = arith.constant 0 : index
    %24 = vector.load %arg2[%c12, %c0_26] : memref<16x32xf32, #tpu.memory_space<vmem>>, vector<1x32xf32>
    %cst = arith.constant dense<0.000000e+00> : vector<16xf32>
    %25 = vector.multi_reduction <add>, %22, %cst [1] : vector<16x32xf32> to vector<16xf32>
    %26 = vector.shape_cast %25 : vector<16xf32> to vector<16x1xf32>
    %cst_27 = arith.constant 3.200000e+01 : f32
    %27 = vector.broadcast %cst_27 : f32 to vector<16x1xf32>
    %28 = arith.divf %26, %27 : vector<16x1xf32>
    %29 = vector.broadcast %28 : vector<16x1xf32> to vector<16x32xf32>
    %30 = arith.subf %22, %29 : vector<16x32xf32>
    %31 = arith.mulf %30, %30 : vector<16x32xf32>
    %cst_28 = arith.constant dense<0.000000e+00> : vector<16xf32>
    %32 = vector.multi_reduction <add>, %31, %cst_28 [1] : vector<16x32xf32> to vector<16xf32>
    %33 = vector.shape_cast %32 : vector<16xf32> to vector<16x1xf32>
    %cst_29 = arith.constant 3.200000e+01 : f32
    %34 = vector.broadcast %cst_29 : f32 to vector<16x1xf32>
    %35 = arith.divf %33, %34 : vector<16x1xf32>
    %cst_30 = arith.constant 9.99999996E-13 : f32
    %36 = vector.broadcast %cst_30 : f32 to vector<16x1xf32>
    %37 = arith.addf %35, %36 : vector<16x1xf32>
    %38 = math.rsqrt %37 : vector<16x1xf32>
    %39 = vector.broadcast %38 : vector<16x1xf32> to vector<16x32xf32>
    %40 = arith.mulf %30, %39 : vector<16x32xf32>
    %41 = vector.broadcast %23 : vector<1x32xf32> to vector<16x32xf32>
    %42 = arith.mulf %40, %41 : vector<16x32xf32>
    %43 = vector.broadcast %24 : vector<1x32xf32> to vector<16x32xf32>
    %44 = arith.addf %42, %43 : vector<16x32xf32>
    %cst_31 = arith.constant dense<0.000000e+00> : vector<16x96xf32>
    %45 = tpu.matmul %44, %1, %cst_31 {dimension_numbers = #tpu.dot_dimension_numbers<[1], [0], [0], [1], [0, 0, 1, 1], [], []>} : vector<16x32xf32>, vector<32x96xf32>, vector<16x96xf32> -> vector<16x96xf32>
    %46 = vector.broadcast %9 : vector<1x96xf32> to vector<16x96xf32>
    %47 = arith.addf %45, %46 : vector<16x96xf32>
    %48 = vector.extract_strided_slice %47 {offsets = [0, 0], sizes = [16, 32], strides = [1, 1]} : vector<16x96xf32> to vector<16x32xf32>
    %49 = vector.extract_strided_slice %47 {offsets = [0, 32], sizes = [16, 32], strides = [1, 1]} : vector<16x96xf32> to vector<16x32xf32>
    %50 = vector.extract_strided_slice %47 {offsets = [0, 64], sizes = [16, 32], strides = [1, 1]} : vector<16x96xf32> to vector<16x32xf32>
    %51 = tpu.iota {dimensions = array<i32: 0>} : vector<8x8xi32>
    %52 = tpu.iota {dimensions = array<i32: 1>} : vector<8x8xi32>
    %53 = arith.cmpi sge, %51, %52 : vector<8x8xi32>
    %cst_32 = arith.constant 0.000000e+00 : f32
    %cst_33 = arith.constant -1.000000e+30 : f32
    %54 = vector.broadcast %cst_32 : f32 to vector<8x8xf32>
    %55 = vector.broadcast %cst_33 : f32 to vector<8x8xf32>
    %56 = arith.select %53, %54, %55 : vector<8x8xi1>, vector<8x8xf32>
    %57 = vector.shape_cast %48 : vector<16x32xf32> to vector<2x8x32xf32>
    %58 = vector.shape_cast %49 : vector<16x32xf32> to vector<2x8x32xf32>
    %59 = vector.shape_cast %50 : vector<16x32xf32> to vector<2x8x32xf32>
    %60 = vector.extract_strided_slice %57 {offsets = [0, 0, 0], sizes = [2, 8, 8], strides = [1, 1, 1]} : vector<2x8x32xf32> to vector<2x8x8xf32>
    %61 = vector.extract_strided_slice %58 {offsets = [0, 0, 0], sizes = [2, 8, 8], strides = [1, 1, 1]} : vector<2x8x32xf32> to vector<2x8x8xf32>
    "tpu.trace_start"() <{level = 10 : i32, message = "bqd,bkd->bqk"}> : () -> ()
    %cst_34 = arith.constant dense<0.000000e+00> : vector<2x8x8xf32>
    %62 = tpu.matmul %60, %61, %cst_34 {dimension_numbers = #tpu.dot_dimension_numbers<[2], [2], [1], [1], [0, 0, 0, 1, 1, 1], [0], [0]>} : vector<2x8x8xf32>, vector<2x8x8xf32>, vector<2x8x8xf32> -> vector<2x8x8xf32>
    "tpu.trace_stop"() : () -> ()
    %cst_35 = arith.constant 0.353553385 : f32
    %63 = vector.broadcast %cst_35 : f32 to vector<2x8x8xf32>
    %64 = arith.mulf %62, %63 : vector<2x8x8xf32>
    %65 = vector.shape_cast %56 : vector<8x8xf32> to vector<1x8x8xf32>
    %66 = vector.broadcast %65 : vector<1x8x8xf32> to vector<2x8x8xf32>
    %67 = arith.addf %64, %66 : vector<2x8x8xf32>
    %cst_36 = arith.constant dense<0xFF800000> : vector<2x8xf32>
    %68 = vector.multi_reduction <maximumf>, %67, %cst_36 [2] : vector<2x8x8xf32> to vector<2x8xf32>
    %69 = vector.shape_cast %68 : vector<2x8xf32> to vector<2x8x1xf32>
    %70 = vector.broadcast %69 : vector<2x8x1xf32> to vector<2x8x8xf32>
    %71 = arith.subf %67, %70 : vector<2x8x8xf32>
    %72 = math.exp %71 : vector<2x8x8xf32>
    %cst_37 = arith.constant dense<0.000000e+00> : vector<2x8xf32>
    %73 = vector.multi_reduction <add>, %72, %cst_37 [2] : vector<2x8x8xf32> to vector<2x8xf32>
    %74 = vector.shape_cast %73 : vector<2x8xf32> to vector<2x8x1xf32>
    %75 = tpu.reciprocal %74 {approx = true} : vector<2x8x1xf32> -> vector<2x8x1xf32>
    %76 = vector.broadcast %75 : vector<2x8x1xf32> to vector<2x8x8xf32>
    %77 = arith.mulf %72, %76 : vector<2x8x8xf32>
    %78 = vector.extract_strided_slice %59 {offsets = [0, 0, 0], sizes = [2, 8, 8], strides = [1, 1, 1]} : vector<2x8x32xf32> to vector<2x8x8xf32>
    "tpu.trace_start"() <{level = 10 : i32, message = "bqk,bkd->bqd"}> : () -> ()
    %cst_38 = arith.constant dense<0.000000e+00> : vector<2x8x8xf32>
    %79 = tpu.matmul %77, %78, %cst_38 {dimension_numbers = #tpu.dot_dimension_numbers<[2], [1], [1], [2], [0, 0, 0, 1, 1, 2], [0], [0]>} : vector<2x8x8xf32>, vector<2x8x8xf32>, vector<2x8x8xf32> -> vector<2x8x8xf32>
    "tpu.trace_stop"() : () -> ()
    %80 = vector.extract_strided_slice %57 {offsets = [0, 0, 8], sizes = [2, 8, 8], strides = [1, 1, 1]} : vector<2x8x32xf32> to vector<2x8x8xf32>
    %81 = vector.extract_strided_slice %58 {offsets = [0, 0, 8], sizes = [2, 8, 8], strides = [1, 1, 1]} : vector<2x8x32xf32> to vector<2x8x8xf32>
    "tpu.trace_start"() <{level = 10 : i32, message = "bqd,bkd->bqk"}> : () -> ()
    %cst_39 = arith.constant dense<0.000000e+00> : vector<2x8x8xf32>
    %82 = tpu.matmul %80, %81, %cst_39 {dimension_numbers = #tpu.dot_dimension_numbers<[2], [2], [1], [1], [0, 0, 0, 1, 1, 1], [0], [0]>} : vector<2x8x8xf32>, vector<2x8x8xf32>, vector<2x8x8xf32> -> vector<2x8x8xf32>
    "tpu.trace_stop"() : () -> ()
    %cst_40 = arith.constant 0.353553385 : f32
    %83 = vector.broadcast %cst_40 : f32 to vector<2x8x8xf32>
    %84 = arith.mulf %82, %83 : vector<2x8x8xf32>
    %85 = vector.shape_cast %56 : vector<8x8xf32> to vector<1x8x8xf32>
    %86 = vector.broadcast %85 : vector<1x8x8xf32> to vector<2x8x8xf32>
    %87 = arith.addf %84, %86 : vector<2x8x8xf32>
    %cst_41 = arith.constant dense<0xFF800000> : vector<2x8xf32>
    %88 = vector.multi_reduction <maximumf>, %87, %cst_41 [2] : vector<2x8x8xf32> to vector<2x8xf32>
    %89 = vector.shape_cast %88 : vector<2x8xf32> to vector<2x8x1xf32>
    %90 = vector.broadcast %89 : vector<2x8x1xf32> to vector<2x8x8xf32>
    %91 = arith.subf %87, %90 : vector<2x8x8xf32>
    %92 = math.exp %91 : vector<2x8x8xf32>
    %cst_42 = arith.constant dense<0.000000e+00> : vector<2x8xf32>
    %93 = vector.multi_reduction <add>, %92, %cst_42 [2] : vector<2x8x8xf32> to vector<2x8xf32>
    %94 = vector.shape_cast %93 : vector<2x8xf32> to vector<2x8x1xf32>
    %95 = tpu.reciprocal %94 {approx = true} : vector<2x8x1xf32> -> vector<2x8x1xf32>
    %96 = vector.broadcast %95 : vector<2x8x1xf32> to vector<2x8x8xf32>
    %97 = arith.mulf %92, %96 : vector<2x8x8xf32>
    %98 = vector.extract_strided_slice %59 {offsets = [0, 0, 8], sizes = [2, 8, 8], strides = [1, 1, 1]} : vector<2x8x32xf32> to vector<2x8x8xf32>
    "tpu.trace_start"() <{level = 10 : i32, message = "bqk,bkd->bqd"}> : () -> ()
    %cst_43 = arith.constant dense<0.000000e+00> : vector<2x8x8xf32>
    %99 = tpu.matmul %97, %98, %cst_43 {dimension_numbers = #tpu.dot_dimension_numbers<[2], [1], [1], [2], [0, 0, 0, 1, 1, 2], [0], [0]>} : vector<2x8x8xf32>, vector<2x8x8xf32>, vector<2x8x8xf32> -> vector<2x8x8xf32>
    "tpu.trace_stop"() : () -> ()
    %100 = vector.extract_strided_slice %57 {offsets = [0, 0, 16], sizes = [2, 8, 8], strides = [1, 1, 1]} : vector<2x8x32xf32> to vector<2x8x8xf32>
    %101 = vector.extract_strided_slice %58 {offsets = [0, 0, 16], sizes = [2, 8, 8], strides = [1, 1, 1]} : vector<2x8x32xf32> to vector<2x8x8xf32>
    "tpu.trace_start"() <{level = 10 : i32, message = "bqd,bkd->bqk"}> : () -> ()
    %cst_44 = arith.constant dense<0.000000e+00> : vector<2x8x8xf32>
    %102 = tpu.matmul %100, %101, %cst_44 {dimension_numbers = #tpu.dot_dimension_numbers<[2], [2], [1], [1], [0, 0, 0, 1, 1, 1], [0], [0]>} : vector<2x8x8xf32>, vector<2x8x8xf32>, vector<2x8x8xf32> -> vector<2x8x8xf32>
    "tpu.trace_stop"() : () -> ()
    %cst_45 = arith.constant 0.353553385 : f32
    %103 = vector.broadcast %cst_45 : f32 to vector<2x8x8xf32>
    %104 = arith.mulf %102, %103 : vector<2x8x8xf32>
    %105 = vector.shape_cast %56 : vector<8x8xf32> to vector<1x8x8xf32>
    %106 = vector.broadcast %105 : vector<1x8x8xf32> to vector<2x8x8xf32>
    %107 = arith.addf %104, %106 : vector<2x8x8xf32>
    %cst_46 = arith.constant dense<0xFF800000> : vector<2x8xf32>
    %108 = vector.multi_reduction <maximumf>, %107, %cst_46 [2] : vector<2x8x8xf32> to vector<2x8xf32>
    %109 = vector.shape_cast %108 : vector<2x8xf32> to vector<2x8x1xf32>
    %110 = vector.broadcast %109 : vector<2x8x1xf32> to vector<2x8x8xf32>
    %111 = arith.subf %107, %110 : vector<2x8x8xf32>
    %112 = math.exp %111 : vector<2x8x8xf32>
    %cst_47 = arith.constant dense<0.000000e+00> : vector<2x8xf32>
    %113 = vector.multi_reduction <add>, %112, %cst_47 [2] : vector<2x8x8xf32> to vector<2x8xf32>
    %114 = vector.shape_cast %113 : vector<2x8xf32> to vector<2x8x1xf32>
    %115 = tpu.reciprocal %114 {approx = true} : vector<2x8x1xf32> -> vector<2x8x1xf32>
    %116 = vector.broadcast %115 : vector<2x8x1xf32> to vector<2x8x8xf32>
    %117 = arith.mulf %112, %116 : vector<2x8x8xf32>
    %118 = vector.extract_strided_slice %59 {offsets = [0, 0, 16], sizes = [2, 8, 8], strides = [1, 1, 1]} : vector<2x8x32xf32> to vector<2x8x8xf32>
    "tpu.trace_start"() <{level = 10 : i32, message = "bqk,bkd->bqd"}> : () -> ()
    %cst_48 = arith.constant dense<0.000000e+00> : vector<2x8x8xf32>
    %119 = tpu.matmul %117, %118, %cst_48 {dimension_numbers = #tpu.dot_dimension_numbers<[2], [1], [1], [2], [0, 0, 0, 1, 1, 2], [0], [0]>} : vector<2x8x8xf32>, vector<2x8x8xf32>, vector<2x8x8xf32> -> vector<2x8x8xf32>
    "tpu.trace_stop"() : () -> ()
    %120 = vector.extract_strided_slice %57 {offsets = [0, 0, 24], sizes = [2, 8, 8], strides = [1, 1, 1]} : vector<2x8x32xf32> to vector<2x8x8xf32>
    %121 = vector.extract_strided_slice %58 {offsets = [0, 0, 24], sizes = [2, 8, 8], strides = [1, 1, 1]} : vector<2x8x32xf32> to vector<2x8x8xf32>
    "tpu.trace_start"() <{level = 10 : i32, message = "bqd,bkd->bqk"}> : () -> ()
    %cst_49 = arith.constant dense<0.000000e+00> : vector<2x8x8xf32>
    %122 = tpu.matmul %120, %121, %cst_49 {dimension_numbers = #tpu.dot_dimension_numbers<[2], [2], [1], [1], [0, 0, 0, 1, 1, 1], [0], [0]>} : vector<2x8x8xf32>, vector<2x8x8xf32>, vector<2x8x8xf32> -> vector<2x8x8xf32>
    "tpu.trace_stop"() : () -> ()
    %cst_50 = arith.constant 0.353553385 : f32
    %123 = vector.broadcast %cst_50 : f32 to vector<2x8x8xf32>
    %124 = arith.mulf %122, %123 : vector<2x8x8xf32>
    %125 = vector.shape_cast %56 : vector<8x8xf32> to vector<1x8x8xf32>
    %126 = vector.broadcast %125 : vector<1x8x8xf32> to vector<2x8x8xf32>
    %127 = arith.addf %124, %126 : vector<2x8x8xf32>
    %cst_51 = arith.constant dense<0xFF800000> : vector<2x8xf32>
    %128 = vector.multi_reduction <maximumf>, %127, %cst_51 [2] : vector<2x8x8xf32> to vector<2x8xf32>
    %129 = vector.shape_cast %128 : vector<2x8xf32> to vector<2x8x1xf32>
    %130 = vector.broadcast %129 : vector<2x8x1xf32> to vector<2x8x8xf32>
    %131 = arith.subf %127, %130 : vector<2x8x8xf32>
    %132 = math.exp %131 : vector<2x8x8xf32>
    %cst_52 = arith.constant dense<0.000000e+00> : vector<2x8xf32>
    %133 = vector.multi_reduction <add>, %132, %cst_52 [2] : vector<2x8x8xf32> to vector<2x8xf32>
    %134 = vector.shape_cast %133 : vector<2x8xf32> to vector<2x8x1xf32>
    %135 = tpu.reciprocal %134 {approx = true} : vector<2x8x1xf32> -> vector<2x8x1xf32>
    %136 = vector.broadcast %135 : vector<2x8x1xf32> to vector<2x8x8xf32>
    %137 = arith.mulf %132, %136 : vector<2x8x8xf32>
    %138 = vector.extract_strided_slice %59 {offsets = [0, 0, 24], sizes = [2, 8, 8], strides = [1, 1, 1]} : vector<2x8x32xf32> to vector<2x8x8xf32>
    "tpu.trace_start"() <{level = 10 : i32, message = "bqk,bkd->bqd"}> : () -> ()
    %cst_53 = arith.constant dense<0.000000e+00> : vector<2x8x8xf32>
    %139 = tpu.matmul %137, %138, %cst_53 {dimension_numbers = #tpu.dot_dimension_numbers<[2], [1], [1], [2], [0, 0, 0, 1, 1, 2], [0], [0]>} : vector<2x8x8xf32>, vector<2x8x8xf32>, vector<2x8x8xf32> -> vector<2x8x8xf32>
    "tpu.trace_stop"() : () -> ()
    %140 = tpu.concatenate %79, %99, %119, %139 in 2 : vector<2x8x8xf32>, vector<2x8x8xf32>, vector<2x8x8xf32>, vector<2x8x8xf32> -> vector<2x8x32xf32>
    %141 = vector.shape_cast %140 : vector<2x8x32xf32> to vector<16x32xf32>
    %cst_54 = arith.constant dense<0.000000e+00> : vector<16x32xf32>
    %142 = tpu.matmul %141, %5, %cst_54 {dimension_numbers = #tpu.dot_dimension_numbers<[1], [0], [0], [1], [0, 0, 1, 1], [], []>} : vector<16x32xf32>, vector<32x32xf32>, vector<16x32xf32> -> vector<16x32xf32>
    %143 = vector.broadcast %12 : vector<1x32xf32> to vector<16x32xf32>
    %144 = arith.addf %142, %143 : vector<16x32xf32>
    %145 = arith.addf %144, %44 : vector<16x32xf32>
    %c9 = arith.constant 9 : index
    %c0_55 = arith.constant 0 : index
    %146 = vector.load %arg2[%c9, %c0_55] : memref<16x32xf32, #tpu.memory_space<vmem>>, vector<1x32xf32>
    %c13 = arith.constant 13 : index
    %c0_56 = arith.constant 0 : index
    %147 = vector.load %arg2[%c13, %c0_56] : memref<16x32xf32, #tpu.memory_space<vmem>>, vector<1x32xf32>
    %cst_57 = arith.constant dense<0.000000e+00> : vector<16xf32>
    %148 = vector.multi_reduction <add>, %145, %cst_57 [1] : vector<16x32xf32> to vector<16xf32>
    %149 = vector.shape_cast %148 : vector<16xf32> to vector<16x1xf32>
    %cst_58 = arith.constant 3.200000e+01 : f32
    %150 = vector.broadcast %cst_58 : f32 to vector<16x1xf32>
    %151 = arith.divf %149, %150 : vector<16x1xf32>
    %152 = vector.broadcast %151 : vector<16x1xf32> to vector<16x32xf32>
    %153 = arith.subf %145, %152 : vector<16x32xf32>
    %154 = arith.mulf %153, %153 : vector<16x32xf32>
    %cst_59 = arith.constant dense<0.000000e+00> : vector<16xf32>
    %155 = vector.multi_reduction <add>, %154, %cst_59 [1] : vector<16x32xf32> to vector<16xf32>
    %156 = vector.shape_cast %155 : vector<16xf32> to vector<16x1xf32>
    %cst_60 = arith.constant 3.200000e+01 : f32
    %157 = vector.broadcast %cst_60 : f32 to vector<16x1xf32>
    %158 = arith.divf %156, %157 : vector<16x1xf32>
    %cst_61 = arith.constant 9.99999996E-13 : f32
    %159 = vector.broadcast %cst_61 : f32 to vector<16x1xf32>
    %160 = arith.addf %158, %159 : vector<16x1xf32>
    %161 = math.rsqrt %160 : vector<16x1xf32>
    %162 = vector.broadcast %161 : vector<16x1xf32> to vector<16x32xf32>
    %163 = arith.mulf %153, %162 : vector<16x32xf32>
    %164 = vector.broadcast %146 : vector<1x32xf32> to vector<16x32xf32>
    %165 = arith.mulf %163, %164 : vector<16x32xf32>
    %166 = vector.broadcast %147 : vector<1x32xf32> to vector<16x32xf32>
    %167 = arith.addf %165, %166 : vector<16x32xf32>
    %c0_62 = arith.constant 0 : index
    %c0_63 = arith.constant 0 : index
    %168 = vector.load %arg1[%c0_62, %c0_63] : memref<32x32xf32, #tpu.memory_space<vmem>>, vector<32x32xf32>
    %cst_64 = arith.constant dense<0.000000e+00> : vector<16x32xf32>
    %169 = tpu.matmul %167, %6, %cst_64 {dimension_numbers = #tpu.dot_dimension_numbers<[1], [0], [0], [1], [0, 0, 1, 1], [], []>} : vector<16x32xf32>, vector<32x32xf32>, vector<16x32xf32> -> vector<16x32xf32>
    %170 = vector.broadcast %13 : vector<1x32xf32> to vector<16x32xf32>
    %171 = arith.addf %169, %170 : vector<16x32xf32>
    %cst_65 = arith.constant dense<0.000000e+00> : vector<32x64xf32>
    %172 = tpu.matmul %168, %2, %cst_65 {dimension_numbers = #tpu.dot_dimension_numbers<[1], [0], [0], [1], [0, 0, 1, 1], [], []>} : vector<32x32xf32>, vector<32x64xf32>, vector<32x64xf32> -> vector<32x64xf32>
    %173 = vector.broadcast %10 : vector<1x64xf32> to vector<32x64xf32>
    %174 = arith.addf %172, %173 : vector<32x64xf32>
    %175 = vector.extract_strided_slice %174 {offsets = [0, 0], sizes = [32, 32], strides = [1, 1]} : vector<32x64xf32> to vector<32x32xf32>
    %176 = vector.extract_strided_slice %174 {offsets = [0, 32], sizes = [32, 32], strides = [1, 1]} : vector<32x64xf32> to vector<32x32xf32>
    %177 = vector.shape_cast %171 : vector<16x32xf32> to vector<2x8x32xf32>
    %178 = vector.shape_cast %175 : vector<32x32xf32> to vector<2x16x32xf32>
    %179 = vector.shape_cast %176 : vector<32x32xf32> to vector<2x16x32xf32>
    %180 = vector.extract_strided_slice %177 {offsets = [0, 0, 0], sizes = [2, 8, 8], strides = [1, 1, 1]} : vector<2x8x32xf32> to vector<2x8x8xf32>
    %181 = vector.extract_strided_slice %178 {offsets = [0, 0, 0], sizes = [2, 16, 8], strides = [1, 1, 1]} : vector<2x16x32xf32> to vector<2x16x8xf32>
    "tpu.trace_start"() <{level = 10 : i32, message = "bqd,bkd->bqk"}> : () -> ()
    %cst_66 = arith.constant dense<0.000000e+00> : vector<2x8x16xf32>
    %182 = tpu.matmul %180, %181, %cst_66 {dimension_numbers = #tpu.dot_dimension_numbers<[2], [2], [1], [1], [0, 0, 0, 1, 1, 1], [0], [0]>} : vector<2x8x8xf32>, vector<2x16x8xf32>, vector<2x8x16xf32> -> vector<2x8x16xf32>
    "tpu.trace_stop"() : () -> ()
    %cst_67 = arith.constant 0.353553385 : f32
    %183 = vector.broadcast %cst_67 : f32 to vector<2x8x16xf32>
    %184 = arith.mulf %182, %183 : vector<2x8x16xf32>
    %cst_68 = arith.constant dense<0xFF800000> : vector<2x8xf32>
    %185 = vector.multi_reduction <maximumf>, %184, %cst_68 [2] : vector<2x8x16xf32> to vector<2x8xf32>
    %186 = vector.shape_cast %185 : vector<2x8xf32> to vector<2x8x1xf32>
    %187 = vector.broadcast %186 : vector<2x8x1xf32> to vector<2x8x16xf32>
    %188 = arith.subf %184, %187 : vector<2x8x16xf32>
    %189 = math.exp %188 : vector<2x8x16xf32>
    %cst_69 = arith.constant dense<0.000000e+00> : vector<2x8xf32>
    %190 = vector.multi_reduction <add>, %189, %cst_69 [2] : vector<2x8x16xf32> to vector<2x8xf32>
    %191 = vector.shape_cast %190 : vector<2x8xf32> to vector<2x8x1xf32>
    %192 = tpu.reciprocal %191 {approx = true} : vector<2x8x1xf32> -> vector<2x8x1xf32>
    %193 = vector.broadcast %192 : vector<2x8x1xf32> to vector<2x8x16xf32>
    %194 = arith.mulf %189, %193 : vector<2x8x16xf32>
    %195 = vector.extract_strided_slice %179 {offsets = [0, 0, 0], sizes = [2, 16, 8], strides = [1, 1, 1]} : vector<2x16x32xf32> to vector<2x16x8xf32>
    "tpu.trace_start"() <{level = 10 : i32, message = "bqk,bkd->bqd"}> : () -> ()
    %cst_70 = arith.constant dense<0.000000e+00> : vector<2x8x8xf32>
    %196 = tpu.matmul %194, %195, %cst_70 {dimension_numbers = #tpu.dot_dimension_numbers<[2], [1], [1], [2], [0, 0, 0, 1, 1, 2], [0], [0]>} : vector<2x8x16xf32>, vector<2x16x8xf32>, vector<2x8x8xf32> -> vector<2x8x8xf32>
    "tpu.trace_stop"() : () -> ()
    %197 = vector.extract_strided_slice %177 {offsets = [0, 0, 8], sizes = [2, 8, 8], strides = [1, 1, 1]} : vector<2x8x32xf32> to vector<2x8x8xf32>
    %198 = vector.extract_strided_slice %178 {offsets = [0, 0, 8], sizes = [2, 16, 8], strides = [1, 1, 1]} : vector<2x16x32xf32> to vector<2x16x8xf32>
    "tpu.trace_start"() <{level = 10 : i32, message = "bqd,bkd->bqk"}> : () -> ()
    %cst_71 = arith.constant dense<0.000000e+00> : vector<2x8x16xf32>
    %199 = tpu.matmul %197, %198, %cst_71 {dimension_numbers = #tpu.dot_dimension_numbers<[2], [2], [1], [1], [0, 0, 0, 1, 1, 1], [0], [0]>} : vector<2x8x8xf32>, vector<2x16x8xf32>, vector<2x8x16xf32> -> vector<2x8x16xf32>
    "tpu.trace_stop"() : () -> ()
    %cst_72 = arith.constant 0.353553385 : f32
    %200 = vector.broadcast %cst_72 : f32 to vector<2x8x16xf32>
    %201 = arith.mulf %199, %200 : vector<2x8x16xf32>
    %cst_73 = arith.constant dense<0xFF800000> : vector<2x8xf32>
    %202 = vector.multi_reduction <maximumf>, %201, %cst_73 [2] : vector<2x8x16xf32> to vector<2x8xf32>
    %203 = vector.shape_cast %202 : vector<2x8xf32> to vector<2x8x1xf32>
    %204 = vector.broadcast %203 : vector<2x8x1xf32> to vector<2x8x16xf32>
    %205 = arith.subf %201, %204 : vector<2x8x16xf32>
    %206 = math.exp %205 : vector<2x8x16xf32>
    %cst_74 = arith.constant dense<0.000000e+00> : vector<2x8xf32>
    %207 = vector.multi_reduction <add>, %206, %cst_74 [2] : vector<2x8x16xf32> to vector<2x8xf32>
    %208 = vector.shape_cast %207 : vector<2x8xf32> to vector<2x8x1xf32>
    %209 = tpu.reciprocal %208 {approx = true} : vector<2x8x1xf32> -> vector<2x8x1xf32>
    %210 = vector.broadcast %209 : vector<2x8x1xf32> to vector<2x8x16xf32>
    %211 = arith.mulf %206, %210 : vector<2x8x16xf32>
    %212 = vector.extract_strided_slice %179 {offsets = [0, 0, 8], sizes = [2, 16, 8], strides = [1, 1, 1]} : vector<2x16x32xf32> to vector<2x16x8xf32>
    "tpu.trace_start"() <{level = 10 : i32, message = "bqk,bkd->bqd"}> : () -> ()
    %cst_75 = arith.constant dense<0.000000e+00> : vector<2x8x8xf32>
    %213 = tpu.matmul %211, %212, %cst_75 {dimension_numbers = #tpu.dot_dimension_numbers<[2], [1], [1], [2], [0, 0, 0, 1, 1, 2], [0], [0]>} : vector<2x8x16xf32>, vector<2x16x8xf32>, vector<2x8x8xf32> -> vector<2x8x8xf32>
    "tpu.trace_stop"() : () -> ()
    %214 = vector.extract_strided_slice %177 {offsets = [0, 0, 16], sizes = [2, 8, 8], strides = [1, 1, 1]} : vector<2x8x32xf32> to vector<2x8x8xf32>
    %215 = vector.extract_strided_slice %178 {offsets = [0, 0, 16], sizes = [2, 16, 8], strides = [1, 1, 1]} : vector<2x16x32xf32> to vector<2x16x8xf32>
    "tpu.trace_start"() <{level = 10 : i32, message = "bqd,bkd->bqk"}> : () -> ()
    %cst_76 = arith.constant dense<0.000000e+00> : vector<2x8x16xf32>
    %216 = tpu.matmul %214, %215, %cst_76 {dimension_numbers = #tpu.dot_dimension_numbers<[2], [2], [1], [1], [0, 0, 0, 1, 1, 1], [0], [0]>} : vector<2x8x8xf32>, vector<2x16x8xf32>, vector<2x8x16xf32> -> vector<2x8x16xf32>
    "tpu.trace_stop"() : () -> ()
    %cst_77 = arith.constant 0.353553385 : f32
    %217 = vector.broadcast %cst_77 : f32 to vector<2x8x16xf32>
    %218 = arith.mulf %216, %217 : vector<2x8x16xf32>
    %cst_78 = arith.constant dense<0xFF800000> : vector<2x8xf32>
    %219 = vector.multi_reduction <maximumf>, %218, %cst_78 [2] : vector<2x8x16xf32> to vector<2x8xf32>
    %220 = vector.shape_cast %219 : vector<2x8xf32> to vector<2x8x1xf32>
    %221 = vector.broadcast %220 : vector<2x8x1xf32> to vector<2x8x16xf32>
    %222 = arith.subf %218, %221 : vector<2x8x16xf32>
    %223 = math.exp %222 : vector<2x8x16xf32>
    %cst_79 = arith.constant dense<0.000000e+00> : vector<2x8xf32>
    %224 = vector.multi_reduction <add>, %223, %cst_79 [2] : vector<2x8x16xf32> to vector<2x8xf32>
    %225 = vector.shape_cast %224 : vector<2x8xf32> to vector<2x8x1xf32>
    %226 = tpu.reciprocal %225 {approx = true} : vector<2x8x1xf32> -> vector<2x8x1xf32>
    %227 = vector.broadcast %226 : vector<2x8x1xf32> to vector<2x8x16xf32>
    %228 = arith.mulf %223, %227 : vector<2x8x16xf32>
    %229 = vector.extract_strided_slice %179 {offsets = [0, 0, 16], sizes = [2, 16, 8], strides = [1, 1, 1]} : vector<2x16x32xf32> to vector<2x16x8xf32>
    "tpu.trace_start"() <{level = 10 : i32, message = "bqk,bkd->bqd"}> : () -> ()
    %cst_80 = arith.constant dense<0.000000e+00> : vector<2x8x8xf32>
    %230 = tpu.matmul %228, %229, %cst_80 {dimension_numbers = #tpu.dot_dimension_numbers<[2], [1], [1], [2], [0, 0, 0, 1, 1, 2], [0], [0]>} : vector<2x8x16xf32>, vector<2x16x8xf32>, vector<2x8x8xf32> -> vector<2x8x8xf32>
    "tpu.trace_stop"() : () -> ()
    %231 = vector.extract_strided_slice %177 {offsets = [0, 0, 24], sizes = [2, 8, 8], strides = [1, 1, 1]} : vector<2x8x32xf32> to vector<2x8x8xf32>
    %232 = vector.extract_strided_slice %178 {offsets = [0, 0, 24], sizes = [2, 16, 8], strides = [1, 1, 1]} : vector<2x16x32xf32> to vector<2x16x8xf32>
    "tpu.trace_start"() <{level = 10 : i32, message = "bqd,bkd->bqk"}> : () -> ()
    %cst_81 = arith.constant dense<0.000000e+00> : vector<2x8x16xf32>
    %233 = tpu.matmul %231, %232, %cst_81 {dimension_numbers = #tpu.dot_dimension_numbers<[2], [2], [1], [1], [0, 0, 0, 1, 1, 1], [0], [0]>} : vector<2x8x8xf32>, vector<2x16x8xf32>, vector<2x8x16xf32> -> vector<2x8x16xf32>
    "tpu.trace_stop"() : () -> ()
    %cst_82 = arith.constant 0.353553385 : f32
    %234 = vector.broadcast %cst_82 : f32 to vector<2x8x16xf32>
    %235 = arith.mulf %233, %234 : vector<2x8x16xf32>
    %cst_83 = arith.constant dense<0xFF800000> : vector<2x8xf32>
    %236 = vector.multi_reduction <maximumf>, %235, %cst_83 [2] : vector<2x8x16xf32> to vector<2x8xf32>
    %237 = vector.shape_cast %236 : vector<2x8xf32> to vector<2x8x1xf32>
    %238 = vector.broadcast %237 : vector<2x8x1xf32> to vector<2x8x16xf32>
    %239 = arith.subf %235, %238 : vector<2x8x16xf32>
    %240 = math.exp %239 : vector<2x8x16xf32>
    %cst_84 = arith.constant dense<0.000000e+00> : vector<2x8xf32>
    %241 = vector.multi_reduction <add>, %240, %cst_84 [2] : vector<2x8x16xf32> to vector<2x8xf32>
    %242 = vector.shape_cast %241 : vector<2x8xf32> to vector<2x8x1xf32>
    %243 = tpu.reciprocal %242 {approx = true} : vector<2x8x1xf32> -> vector<2x8x1xf32>
    %244 = vector.broadcast %243 : vector<2x8x1xf32> to vector<2x8x16xf32>
    %245 = arith.mulf %240, %244 : vector<2x8x16xf32>
    %246 = vector.extract_strided_slice %179 {offsets = [0, 0, 24], sizes = [2, 16, 8], strides = [1, 1, 1]} : vector<2x16x32xf32> to vector<2x16x8xf32>
    "tpu.trace_start"() <{level = 10 : i32, message = "bqk,bkd->bqd"}> : () -> ()
    %cst_85 = arith.constant dense<0.000000e+00> : vector<2x8x8xf32>
    %247 = tpu.matmul %245, %246, %cst_85 {dimension_numbers = #tpu.dot_dimension_numbers<[2], [1], [1], [2], [0, 0, 0, 1, 1, 2], [0], [0]>} : vector<2x8x16xf32>, vector<2x16x8xf32>, vector<2x8x8xf32> -> vector<2x8x8xf32>
    "tpu.trace_stop"() : () -> ()
    %248 = tpu.concatenate %196, %213, %230, %247 in 2 : vector<2x8x8xf32>, vector<2x8x8xf32>, vector<2x8x8xf32>, vector<2x8x8xf32> -> vector<2x8x32xf32>
    %249 = vector.shape_cast %248 : vector<2x8x32xf32> to vector<16x32xf32>
    %cst_86 = arith.constant dense<0.000000e+00> : vector<16x32xf32>
    %250 = tpu.matmul %249, %7, %cst_86 {dimension_numbers = #tpu.dot_dimension_numbers<[1], [0], [0], [1], [0, 0, 1, 1], [], []>} : vector<16x32xf32>, vector<32x32xf32>, vector<16x32xf32> -> vector<16x32xf32>
    %251 = vector.broadcast %14 : vector<1x32xf32> to vector<16x32xf32>
    %252 = arith.addf %250, %251 : vector<16x32xf32>
    %253 = arith.addf %252, %167 : vector<16x32xf32>
    %c10 = arith.constant 10 : index
    %c0_87 = arith.constant 0 : index
    %254 = vector.load %arg2[%c10, %c0_87] : memref<16x32xf32, #tpu.memory_space<vmem>>, vector<1x32xf32>
    %c14 = arith.constant 14 : index
    %c0_88 = arith.constant 0 : index
    %255 = vector.load %arg2[%c14, %c0_88] : memref<16x32xf32, #tpu.memory_space<vmem>>, vector<1x32xf32>
    %cst_89 = arith.constant dense<0.000000e+00> : vector<16xf32>
    %256 = vector.multi_reduction <add>, %253, %cst_89 [1] : vector<16x32xf32> to vector<16xf32>
    %257 = vector.shape_cast %256 : vector<16xf32> to vector<16x1xf32>
    %cst_90 = arith.constant 3.200000e+01 : f32
    %258 = vector.broadcast %cst_90 : f32 to vector<16x1xf32>
    %259 = arith.divf %257, %258 : vector<16x1xf32>
    %260 = vector.broadcast %259 : vector<16x1xf32> to vector<16x32xf32>
    %261 = arith.subf %253, %260 : vector<16x32xf32>
    %262 = arith.mulf %261, %261 : vector<16x32xf32>
    %cst_91 = arith.constant dense<0.000000e+00> : vector<16xf32>
    %263 = vector.multi_reduction <add>, %262, %cst_91 [1] : vector<16x32xf32> to vector<16xf32>
    %264 = vector.shape_cast %263 : vector<16xf32> to vector<16x1xf32>
    %cst_92 = arith.constant 3.200000e+01 : f32
    %265 = vector.broadcast %cst_92 : f32 to vector<16x1xf32>
    %266 = arith.divf %264, %265 : vector<16x1xf32>
    %cst_93 = arith.constant 9.99999996E-13 : f32
    %267 = vector.broadcast %cst_93 : f32 to vector<16x1xf32>
    %268 = arith.addf %266, %267 : vector<16x1xf32>
    %269 = math.rsqrt %268 : vector<16x1xf32>
    %270 = vector.broadcast %269 : vector<16x1xf32> to vector<16x32xf32>
    %271 = arith.mulf %261, %270 : vector<16x32xf32>
    %272 = vector.broadcast %254 : vector<1x32xf32> to vector<16x32xf32>
    %273 = arith.mulf %271, %272 : vector<16x32xf32>
    %274 = vector.broadcast %255 : vector<1x32xf32> to vector<16x32xf32>
    %275 = arith.addf %273, %274 : vector<16x32xf32>
    %cst_94 = arith.constant dense<0.000000e+00> : vector<16x64xf32>
    %276 = tpu.matmul %275, %3, %cst_94 {dimension_numbers = #tpu.dot_dimension_numbers<[1], [0], [0], [1], [0, 0, 1, 1], [], []>} : vector<16x32xf32>, vector<32x64xf32>, vector<16x64xf32> -> vector<16x64xf32>
    %277 = vector.broadcast %11 : vector<1x64xf32> to vector<16x64xf32>
    %278 = arith.addf %276, %277 : vector<16x64xf32>
    %cst_95 = arith.constant 5.000000e-01 : f32
    %279 = vector.broadcast %cst_95 : f32 to vector<16x64xf32>
    %280 = arith.mulf %279, %278 : vector<16x64xf32>
    %cst_96 = arith.constant 0.707106769 : f32
    %281 = vector.broadcast %cst_96 : f32 to vector<16x64xf32>
    %282 = arith.mulf %278, %281 : vector<16x64xf32>
    %283 = math.erf %282 : vector<16x64xf32>
    %cst_97 = arith.constant 1.000000e+00 : f32
    %284 = vector.broadcast %cst_97 : f32 to vector<16x64xf32>
    %285 = arith.addf %284, %283 : vector<16x64xf32>
    %286 = arith.mulf %280, %285 : vector<16x64xf32>
    %cst_98 = arith.constant dense<0.000000e+00> : vector<16x32xf32>
    %287 = tpu.matmul %286, %4, %cst_98 {dimension_numbers = #tpu.dot_dimension_numbers<[1], [0], [0], [1], [0, 0, 1, 1], [], []>} : vector<16x64xf32>, vector<64x32xf32>, vector<16x32xf32> -> vector<16x32xf32>
    %288 = vector.broadcast %15 : vector<1x32xf32> to vector<16x32xf32>
    %289 = arith.addf %287, %288 : vector<16x32xf32>
    %290 = arith.addf %289, %275 : vector<16x32xf32>
    %c11 = arith.constant 11 : index
    %c0_99 = arith.constant 0 : index
    %291 = vector.load %arg2[%c11, %c0_99] : memref<16x32xf32, #tpu.memory_space<vmem>>, vector<1x32xf32>
    %c15 = arith.constant 15 : index
    %c0_100 = arith.constant 0 : index
    %292 = vector.load %arg2[%c15, %c0_100] : memref<16x32xf32, #tpu.memory_space<vmem>>, vector<1x32xf32>
    %cst_101 = arith.constant dense<0.000000e+00> : vector<16xf32>
    %293 = vector.multi_reduction <add>, %290, %cst_101 [1] : vector<16x32xf32> to vector<16xf32>
    %294 = vector.shape_cast %293 : vector<16xf32> to vector<16x1xf32>
    %cst_102 = arith.constant 3.200000e+01 : f32
    %295 = vector.broadcast %cst_102 : f32 to vector<16x1xf32>
    %296 = arith.divf %294, %295 : vector<16x1xf32>
    %297 = vector.broadcast %296 : vector<16x1xf32> to vector<16x32xf32>
    %298 = arith.subf %290, %297 : vector<16x32xf32>
    %299 = arith.mulf %298, %298 : vector<16x32xf32>
    %cst_103 = arith.constant dense<0.000000e+00> : vector<16xf32>
    %300 = vector.multi_reduction <add>, %299, %cst_103 [1] : vector<16x32xf32> to vector<16xf32>
    %301 = vector.shape_cast %300 : vector<16xf32> to vector<16x1xf32>
    %cst_104 = arith.constant 3.200000e+01 : f32
    %302 = vector.broadcast %cst_104 : f32 to vector<16x1xf32>
    %303 = arith.divf %301, %302 : vector<16x1xf32>
    %cst_105 = arith.constant 9.99999996E-13 : f32
    %304 = vector.broadcast %cst_105 : f32 to vector<16x1xf32>
    %305 = arith.addf %303, %304 : vector<16x1xf32>
    %306 = math.rsqrt %305 : vector<16x1xf32>
    %307 = vector.broadcast %306 : vector<16x1xf32> to vector<16x32xf32>
    %308 = arith.mulf %298, %307 : vector<16x32xf32>
    %309 = vector.broadcast %291 : vector<1x32xf32> to vector<16x32xf32>
    %310 = arith.mulf %308, %309 : vector<16x32xf32>
    %311 = vector.broadcast %292 : vector<1x32xf32> to vector<16x32xf32>
    %312 = arith.addf %310, %311 : vector<16x32xf32>
    %c0_106 = arith.constant 0 : index
    %c0_107 = arith.constant 0 : index
    %313 = vector.load %arg8[%c0_106, %c0_107] : memref<16x32xf32, #tpu.memory_space<vmem>>, vector<16x32xf32>
    tpu.vector_store %arg8[%c0_106, %c0_107], %312 {strides = array<i32>} : memref<16x32xf32, #tpu.memory_space<vmem>>, vector<16x32xf32>,
    %314 = vector.extract_strided_slice %312 {offsets = [0, 0], sizes = [1, 32], strides = [1, 1]} : vector<16x32xf32> to vector<1x32xf32>
    %315 = vector.extract_strided_slice %312 {offsets = [8, 0], sizes = [1, 32], strides = [1, 1]} : vector<16x32xf32> to vector<1x32xf32>
    %316 = tpu.concatenate %314, %315 in 0 : vector<1x32xf32>, vector<1x32xf32> -> vector<2x32xf32>
    %cst_108 = arith.constant dense<0.000000e+00> : vector<2x32xf32>
    %317 = tpu.matmul %316, %8, %cst_108 {dimension_numbers = #tpu.dot_dimension_numbers<[1], [0], [0], [1], [0, 0, 1, 1], [], []>} : vector<2x32xf32>, vector<32x32xf32>, vector<2x32xf32> -> vector<2x32xf32>
    %318 = vector.broadcast %16 : vector<1x32xf32> to vector<2x32xf32>
    %319 = arith.addf %317, %318 : vector<2x32xf32>
    %320 = math.tanh %319 : vector<2x32xf32>
    %c0_109 = arith.constant 0 : index
    %c0_110 = arith.constant 0 : index
    %321 = vector.load %arg9[%c0_109, %c0_110] : memref<2x32xf32, #tpu.memory_space<vmem>>, vector<2x32xf32>
    tpu.vector_store %arg9[%c0_109, %c0_110], %320 {strides = array<i32>} : memref<2x32xf32, #tpu.memory_space<vmem>>, vector<2x32xf32>,
    return
  }
}

</mosaic_0001>

<llo_original>
// kernel: cross_attention_forward.1
$region0: #{cross_attention_forward.1}
  #allocation0 [shape = 'u32[]', space=smem, size = 0x4, offset = 0x4, fixed_abs, tag = 'smem constant byte address 0x4 - core index']
  #allocation1 [shape = 'u32[144,128]{1,0:T(1,128)}', space=vmem, size = 0x12000, scoped, tag = 'internal scratch']
  %s0 = inlined_call_operand.vmem [shape: f32[16,32], index: 0, kind: input, shape index: {}]
  %s1 = inlined_call_operand.vmem [shape: f32[32,32], index: 1, kind: input, shape index: {}]
  %s2 = inlined_call_operand.vmem [shape: f32[16,32], index: 2, kind: input, shape index: {}]
  %s3 = inlined_call_operand.vmem [shape: f32[32,96], index: 3, kind: input, shape index: {}]
  %s4 = inlined_call_operand.vmem [shape: f32[64,64], index: 4, kind: input, shape index: {}]
  %s5 = inlined_call_operand.vmem [shape: f32[64,32], index: 5, kind: input, shape index: {}]
  %s6 = inlined_call_operand.vmem [shape: f32[128,32], index: 6, kind: input, shape index: {}]
  %s7 = inlined_call_operand.vmem [shape: f32[8,96], index: 7, kind: input, shape index: {}]
  %s8 = inlined_call_operand.hbm [shape: f32[16,32], index: 8, kind: output, shape index: {0}]
  %s9 = inlined_call_operand.hbm [shape: f32[2,32], index: 9, kind: output, shape index: {1}]
  %10 = xla_tuple %s8, %s9
  %s11 = sld [smem:[#allocation0]]
  $region50: #{cross_attention_forward.1} parent=0
    _
  %s13 = ssub.s32 1, %s11
  %s14 = scalar_select 0, %s13, %s11
  $region1: #{cross_attention_forward.1} parent=0
    #allocation2 [shape = 'u8[8192]{0}', space=vmem, size = 0x2000, scoped, tag = 'output window, operand 0, single buffered']
    #allocation3 [shape = 's32[1]{0}', space=sflag, size = 0x4, scoped, tag = 'scoped memory for cross_attention_forward.1']
    #allocation4 [shape = 'u8[1024]{0}', space=vmem, size = 0x400, scoped, tag = 'output window, operand 1, single buffered']
    #allocation5 [shape = 's32[1]{0}', space=sflag, size = 0x4, scoped, tag = 'scoped memory for cross_attention_forward.1']
    %15 = vsyncpa [#allocation3], 0
    %16 = vsyncpa [#allocation5], 0
    // Predicated region
    $region2: #{cross_attention_forward.1} parent=1 // pred_check
      _
    $region3: #{cross_attention_forward.1} parent=1 // pred_check_branch
      %18 = sbr.rel (0) target = $region5
    $region4: #{cross_attention_forward.1} parent=1 // pred_region
      _
    $region5: #{cross_attention_forward.1} parent=1 // pred_fallthru
      _
    // Predicated region
    $region6: #{cross_attention_forward.1} parent=1 // pred_check
      _
    $region7: #{cross_attention_forward.1} parent=1 // pred_check_branch
      %20 = sbr.rel (0) target = $region9
    $region8: #{cross_attention_forward.1} parent=1 // pred_region
      _
    $region9: #{cross_attention_forward.1} parent=1 // pred_fallthru
      _
    // Predicated region
    $region10: #{cross_attention_forward.1} parent=1 // pred_check
      _
    $region11: #{cross_attention_forward.1} parent=1 // pred_check_branch
      %22 = sbr.rel (0) target = $region13
    $region12: #{cross_attention_forward.1} parent=1 // pred_region
      _
    $region13: #{cross_attention_forward.1} parent=1 // pred_fallthru
      _
    // Predicated region
    $region14: #{cross_attention_forward.1} parent=1 // pred_check
      _
    $region15: #{cross_attention_forward.1} parent=1 // pred_check_branch
      %24 = sbr.rel (0) target = $region17
    $region16: #{cross_attention_forward.1} parent=1 // pred_region
      _
    $region17: #{cross_attention_forward.1} parent=1 // pred_fallthru
      _
    // Predicated region
    $region18: #{cross_attention_forward.1} parent=1 // pred_check
      _
    $region19: #{cross_attention_forward.1} parent=1 // pred_check_branch
      %26 = sbr.rel (0) target = $region21
    $region20: #{cross_attention_forward.1} parent=1 // pred_region
      _
    $region21: #{cross_attention_forward.1} parent=1 // pred_fallthru
      _
    // Predicated region
    $region22: #{cross_attention_forward.1} parent=1 // pred_check
      _
    $region23: #{cross_attention_forward.1} parent=1 // pred_check_branch
      %28 = sbr.rel (0) target = $region25
    $region24: #{cross_attention_forward.1} parent=1 // pred_region
      _
    $region25: #{cross_attention_forward.1} parent=1 // pred_fallthru
      _
    // Predicated region
    $region26: #{cross_attention_forward.1} parent=1 // pred_check
      _
    $region27: #{cross_attention_forward.1} parent=1 // pred_check_branch
      %30 = sbr.rel (0) target = $region29
    $region28: #{cross_attention_forward.1} parent=1 // pred_region
      _
    $region29: #{cross_attention_forward.1} parent=1 // pred_fallthru
      _
    // Predicated region
    $region30: #{cross_attention_forward.1} parent=1 // pred_check
      _
    $region31: #{cross_attention_forward.1} parent=1 // pred_check_branch
      %32 = sbr.rel (0) target = $region33
    $region32: #{cross_attention_forward.1} parent=1 // pred_region
      _
    $region33: #{cross_attention_forward.1} parent=1 // pred_fallthru
      _
    %v33 = vld [vmem:[%s2] sm:$0xff]
    %v34 = vld [vmem:[%s3] sm:$0xff]
    %v35 = vld [vmem:[%s3 + $0x8] sm:$0xff]
    %v36 = vld [vmem:[%s3 + $0x10] sm:$0xff]
    %v37 = vld [vmem:[%s3 + $0x18] sm:$0xff]
    %v38 = vld [vmem:[%s4] sm:$0xff]
    %v39 = vld [vmem:[%s4 + $0x8] sm:$0xff]
    %v40 = vld [vmem:[%s4 + $0x10] sm:$0xff]
    %v41 = vld [vmem:[%s4 + $0x18] sm:$0xff]
    %v42 = vld [vmem:[%s4 + $0x20] sm:$0xff]
    %v43 = vld [vmem:[%s4 + $0x28] sm:$0xff]
    %v44 = vld [vmem:[%s4 + $0x30] sm:$0xff]
    %v45 = vld [vmem:[%s4 + $0x38] sm:$0xff]
    %v46 = vld [vmem:[%s5] sm:$0xff]
    %v47 = vld [vmem:[%s5 + $0x8] sm:$0xff]
    %v48 = vld [vmem:[%s5 + $0x10] sm:$0xff]
    %v49 = vld [vmem:[%s5 + $0x18] sm:$0xff]
    %v50 = vld [vmem:[%s5 + $0x20] sm:$0xff]
    %v51 = vld [vmem:[%s5 + $0x28] sm:$0xff]
    %v52 = vld [vmem:[%s5 + $0x30] sm:$0xff]
    %v53 = vld [vmem:[%s5 + $0x38] sm:$0xff]
    %v54 = vld [vmem:[%s6] sm:$0xff]
    %v55 = vld [vmem:[%s6 + $0x8] sm:$0xff]
    %v56 = vld [vmem:[%s6 + $0x10] sm:$0xff]
    %v57 = vld [vmem:[%s6 + $0x18] sm:$0xff]
    %v58 = vld [vmem:[%s6 + $0x20] sm:$0xff]
    %v59 = vld [vmem:[%s6 + $0x28] sm:$0xff]
    %v60 = vld [vmem:[%s6 + $0x30] sm:$0xff]
    %v61 = vld [vmem:[%s6 + $0x38] sm:$0xff]
    %v62 = vld [vmem:[%s6 + $0x40] sm:$0xff]
    %v63 = vld [vmem:[%s6 + $0x48] sm:$0xff]
    %v64 = vld [vmem:[%s6 + $0x50] sm:$0xff]
    %v65 = vld [vmem:[%s6 + $0x58] sm:$0xff]
    %v66 = vld [vmem:[%s6 + $0x60] sm:$0xff]
    %v67 = vld [vmem:[%s6 + $0x68] sm:$0xff]
    %v68 = vld [vmem:[%s6 + $0x70] sm:$0xff]
    %v69 = vld [vmem:[%s6 + $0x78] sm:$0xff]
    %v70 = vld [vmem:[%s7] sm:$0x1]
    %v71 = vld [vmem:[%s7 + $0x1] sm:$0x1]
    %v72 = vld [vmem:[%s7 + $0x2] sm:$0x1]
    %v73 = vld [vmem:[%s7 + $0x3] sm:$0x1]
    %v74 = vld [vmem:[%s7 + $0x4] sm:$0x1]
    %v75 = vld [vmem:[%s7 + $0x5] sm:$0x1]
    %v76 = vld [vmem:[%s7 + $0x6] sm:$0x1]
    %v77 = vld [vmem:[%s7 + $0x7] sm:$0x1]
    %v78 = vld [vmem:[%s0] sm:$0xff]
    %v79 = vld [vmem:[%s0 + $0x8] sm:$0xff]
    %v80 = vadd.f32 %v78, %v33
    %v81 = vadd.f32 %v79, %v33
    %v82 = vld [vmem:[%s2 + $0x8] sm:$0x1]
    %v83 = vld [vmem:[%s2 + $0xc] sm:$0x1]
    %vm84 = vcmask 261120
    %v85 = vsel %vm84, %v80, 0.0
    %86 = vadd.xlane.f32.xlu0 %v85
    %v87 = vpop.xlane.xlu0 %86
    %v88 = vsel %vm84, %v81, 0.0
    %89 = vadd.xlane.f32.xlu0 %v88
    %v90 = vpop.xlane.xlu0 %89
    %v91 = vrcp.pop 32.0
    %v92 = vmul.f32 %v87, %v91
    %v93 = vmul.f32 %v90, %v91
    %v94 = vsub.f32 %v80, %v92
    %v95 = vsub.f32 %v81, %v93
    %v96 = vmul.f32 %v94, %v94
    %v97 = vmul.f32 %v95, %v95
    %v98 = vsel %vm84, %v96, 0.0
    %99 = vadd.xlane.f32.xlu0 %v98
    %v100 = vpop.xlane.xlu0 %99
    %v101 = vsel %vm84, %v97, 0.0
    %102 = vadd.xlane.f32.xlu0 %v101
    %v103 = vpop.xlane.xlu0 %102
    %v104 = vmul.f32 %v100, %v91
    %v105 = vmul.f32 %v103, %v91
    %v106 = vadd.f32 %v104, 1e-12
    %v107 = vadd.f32 %v105, 1e-12
    %v108 = vrsqrt.pop %v106
    %v109 = vrsqrt.pop %v107
    %v110 = vmul.f32 %v94, %v108
    %v111 = vmul.f32 %v95, %v109
    %v112 = vlaneseq
    %v113 = vshrl.u32 %v112, 7
    %v114 = vsub.s32 0, %v113
    %v115 = vrot.slane %v82, %v114
    %v116 = vmul.f32 %v110, %v115
    %v117 = vmul.f32 %v111, %v115
    %v118 = vlaneseq
    %v119 = vshrl.u32 %v118, 7
    %v120 = vsub.s32 0, %v119
    %v121 = vrot.slane %v83, %v120
    %v122 = vadd.f32 %v116, %v121
    %v123 = vadd.f32 %v117, %v121
    %v124 = vlaneseq
    %v125 = vshrl.u32 %v124, 7
    %v126 = vsub.s32 0, %v125
    %v127 = vrot.slane %v70, %v126
    %v129 = vsel %vm84, %v122, 0
    %v132 = vsel %vm84, %v123, 0
    %134 = vmatprep.subr.mxu0 0.0
    %135 = vmatpush1.msra.mxu0 %v34
    %136 = vmatprep.subr.mxu0 0.0
    %137 = vmatpush1.msra.mxu0 %v35
    %138 = vmatprep.subr.mxu0 0.0
    %139 = vmatpush1.msra.mxu0 %v36
    %140 = vmatprep.subr.mxu0 0.0
    %141 = vmatpush1.msra.mxu0 %v37
    %142 = vmatprep.subr.mxu0 0.0
    %143 = vmatpush1.msra.mxu0 0.0
    %144 = vmatprep.subr.mxu0 0.0
    %145 = vmatpush1.msra.mxu0 0.0
    %146 = vmatprep.subr.mxu0 0.0
    %147 = vmatpush1.msra.mxu0 0.0
    %148 = vmatprep.subr.mxu0 0.0
    %149 = vmatpush1.msra.mxu0 0.0
    %150 = vmatprep.subr.mxu0 0.0
    %151 = vmatpush1.msra.mxu0 0.0
    %152 = vmatprep.subr.mxu0 0.0
    %153 = vmatpush1.msra.mxu0 0.0
    %154 = vmatprep.subr.mxu0 0.0
    %155 = vmatpush1.msra.mxu0 0.0
    %156 = vmatprep.subr.mxu0 0.0
    %157 = vmatpush1.msra.mxu0 0.0
    %158 = vmatprep.subr.mxu0 0.0
    %159 = vmatpush1.msra.mxu0 0.0
    %160 = vmatprep.subr.mxu0 0.0
    %161 = vmatpush1.msra.mxu0 0.0
    %162 = vmatprep.subr.mxu0 0.0
    %163 = vmatpush1.msra.mxu0 0.0
    %164 = vmatprep.subr.mxu0 0.0
    %165 = vmatpush1.msra.mxu0 0.0
    %166 = vmatprep.subr.mxu0 0.0
    %167 = vmatpush1.msra.mxu0 0.0
    %168 = vmatprep.subr.mxu0 0.0
    %169 = vmatpush1.msra.mxu0 0.0
    %170 = vmatprep.subr.mxu0 0.0
    %171 = vmatpush1.msra.mxu0 0.0
    %172 = vmatprep.subr.mxu0 0.0
    %173 = vmatpush1.msra.mxu0 0.0
    %174 = vmatprep.subr.mxu0 0.0
    %175 = vmatpush1.msra.mxu0 0.0
    %176 = vmatprep.subr.mxu0 0.0
    %177 = vmatpush1.msra.mxu0 0.0
    %178 = vmatprep.subr.mxu0 0.0
    %179 = vmatpush1.msra.mxu0 0.0
    %180 = vmatprep.subr.mxu0 0.0
    %181 = vmatpush1.msra.mxu0 0.0
    %182 = vmatprep.subr.mxu0 0.0
    %183 = vmatpush1.msra.mxu0 0.0
    %184 = vmatprep.subr.mxu0 0.0
    %185 = vmatpush1.msra.mxu0 0.0
    %186 = vmatprep.subr.mxu0 0.0
    %187 = vmatpush1.msra.mxu0 0.0
    %188 = vmatprep.subr.mxu0 0.0
    %189 = vmatpush1.msra.mxu0 0.0
    %190 = vmatprep.subr.mxu0 0.0
    %191 = vmatpush1.msra.mxu0 0.0
    %192 = vmatprep.subr.mxu0 0.0
    %193 = vmatpush1.msra.mxu0 0.0
    %194 = vmatprep.subr.mxu0 0.0
    %195 = vmatpush1.msra.mxu0 0.0
    %196 = vmatprep.subr.mxu0 0.0
    %197 = vmatpush1.msra.mxu0 0.0
    %198 = vmatprep.mubr.f32.mxu0 0.0
    %199 = vmatmul.mubr.f32.gmra.mrb[0].mxu0 %v129
    %v200 = vpop.f32.mrb[0].mxu0
    %v201 = vadd.f32 %v127, %v200
    %v202 = vpop.f32.mrb[0].mxu0
    %203 = vmatprep.mubr.f32.mxu0 0.0
    %204 = vmatmul.mubr.f32.gmra.mrb[0].mxu0 %v132
    %v205 = vpop.f32.mrb[0].mxu0
    %v206 = vadd.f32 %v127, %v205
    %v207 = vpop.f32.mrb[0].mxu0
    %208 = vdwg.mxu0
    %v209 = vlaneseq
    %v210 = vshrl.u32 %v209, 7
    %v211 = vlaneseq
    %v212 = vand.u32 %v211, 127
    %vm213 = vcmp.ge.s32.totalorder %v210, %v212
    %v214 = vsel %vm213, 0.0, -1e+30
    %216 = vrot.lane.b32.xlu0 %v201, 96
    %v217 = vpop.permute.xlu0 %216
    %vm218 = vcmask 64512
    %v219 = vsel %vm218, %v201, 0
    %v221 = vsel %vm218, %v217, 0
    %223 = vmatprep.subr.mxu0 0.0
    %224 = vmatpush1.xpose.msra.mxu0 %v221
    %225 = vmatprep.subr.mxu0 0.0
    %226 = vmatpush1.xpose.msra.mxu0 0.0
    %227 = vmatprep.subr.mxu0 0.0
    %228 = vmatpush1.xpose.msra.mxu0 0.0
    %229 = vmatprep.subr.mxu0 0.0
    %230 = vmatpush1.xpose.msra.mxu0 0.0
    %231 = vmatprep.subr.mxu0 0.0
    %232 = vmatpush1.xpose.msra.mxu0 0.0
    %233 = vmatprep.subr.mxu0 0.0
    %234 = vmatpush1.xpose.msra.mxu0 0.0
    %235 = vmatprep.subr.mxu0 0.0
    %236 = vmatpush1.xpose.msra.mxu0 0.0
    %237 = vmatprep.subr.mxu0 0.0
    %238 = vmatpush1.xpose.msra.mxu0 0.0
    %239 = vmatprep.subr.mxu0 0.0
    %240 = vmatpush1.xpose.msra.mxu0 0.0
    %241 = vmatprep.subr.mxu0 0.0
    %242 = vmatpush1.xpose.msra.mxu0 0.0
    %243 = vmatprep.subr.mxu0 0.0
    %244 = vmatpush1.xpose.msra.mxu0 0.0
    %245 = vmatprep.subr.mxu0 0.0
    %246 = vmatpush1.xpose.msra.mxu0 0.0
    %247 = vmatprep.subr.mxu0 0.0
    %248 = vmatpush1.xpose.msra.mxu0 0.0
    %249 = vmatprep.subr.mxu0 0.0
    %250 = vmatpush1.xpose.msra.mxu0 0.0
    %251 = vmatprep.subr.mxu0 0.0
    %252 = vmatpush1.xpose.msra.mxu0 0.0
    %253 = vmatprep.subr.mxu0 0.0
    %254 = vmatpush1.xpose.msra.mxu0 0.0
    %255 = vmatprep.subr.mxu0 0.0
    %256 = vmatpush1.xpose.msra.mxu0 0.0
    %257 = vmatprep.subr.mxu0 0.0
    %258 = vmatpush1.xpose.msra.mxu0 0.0
    %259 = vmatprep.subr.mxu0 0.0
    %260 = vmatpush1.xpose.msra.mxu0 0.0
    %261 = vmatprep.subr.mxu0 0.0
    %262 = vmatpush1.xpose.msra.mxu0 0.0
    %263 = vmatprep.subr.mxu0 0.0
    %264 = vmatpush1.xpose.msra.mxu0 0.0
    %265 = vmatprep.subr.mxu0 0.0
    %266 = vmatpush1.xpose.msra.mxu0 0.0
    %267 = vmatprep.subr.mxu0 0.0
    %268 = vmatpush1.xpose.msra.mxu0 0.0
    %269 = vmatprep.subr.mxu0 0.0
    %270 = vmatpush1.xpose.msra.mxu0 0.0
    %271 = vmatprep.subr.mxu0 0.0
    %272 = vmatpush1.xpose.msra.mxu0 0.0
    %273 = vmatprep.subr.mxu0 0.0
    %274 = vmatpush1.xpose.msra.mxu0 0.0
    %275 = vmatprep.subr.mxu0 0.0
    %276 = vmatpush1.xpose.msra.mxu0 0.0
    %277 = vmatprep.subr.mxu0 0.0
    %278 = vmatpush1.xpose.msra.mxu0 0.0
    %279 = vmatprep.subr.mxu0 0.0
    %280 = vmatpush1.xpose.msra.mxu0 0.0
    %281 = vmatprep.subr.mxu0 0.0
    %282 = vmatpush1.xpose.msra.mxu0 0.0
    %283 = vmatprep.subr.mxu0 0.0
    %284 = vmatpush1.xpose.msra.mxu0 0.0
    %285 = vmatprep.subr.mxu0 0.0
    %286 = vmatpush1.xpose.msra.mxu0 0.0
    %287 = vmatprep.mubr.f32.mxu0 0.0
    %288 = vmatmul.mubr.f32.gmra.mrb[0].mxu0 %v219
    %v289 = vpop.f32.mrb[0].mxu0
    %v290 = vadd.f32 0.0, %v289
    %v291 = vpop.f32.mrb[0].mxu0
    %292 = vdwg.mxu0
    %294 = vrot.lane.b32.xlu0 %v206, 96
    %v295 = vpop.permute.xlu0 %294
    %v296 = vsel %vm218, %v206, 0
    %v298 = vsel %vm218, %v295, 0
    %300 = vmatprep.subr.mxu0 0.0
    %301 = vmatpush1.xpose.msra.mxu0 %v298
    %302 = vmatprep.subr.mxu0 0.0
    %303 = vmatpush1.xpose.msra.mxu0 0.0
    %304 = vmatprep.subr.mxu0 0.0
    %305 = vmatpush1.xpose.msra.mxu0 0.0
    %306 = vmatprep.subr.mxu0 0.0
    %307 = vmatpush1.xpose.msra.mxu0 0.0
    %308 = vmatprep.subr.mxu0 0.0
    %309 = vmatpush1.xpose.msra.mxu0 0.0
    %310 = vmatprep.subr.mxu0 0.0
    %311 = vmatpush1.xpose.msra.mxu0 0.0
    %312 = vmatprep.subr.mxu0 0.0
    %313 = vmatpush1.xpose.msra.mxu0 0.0
    %314 = vmatprep.subr.mxu0 0.0
    %315 = vmatpush1.xpose.msra.mxu0 0.0
    %316 = vmatprep.subr.mxu0 0.0
    %317 = vmatpush1.xpose.msra.mxu0 0.0
    %318 = vmatprep.subr.mxu0 0.0
    %319 = vmatpush1.xpose.msra.mxu0 0.0
    %320 = vmatprep.subr.mxu0 0.0
    %321 = vmatpush1.xpose.msra.mxu0 0.0
    %322 = vmatprep.subr.mxu0 0.0
    %323 = vmatpush1.xpose.msra.mxu0 0.0
    %324 = vmatprep.subr.mxu0 0.0
    %325 = vmatpush1.xpose.msra.mxu0 0.0
    %326 = vmatprep.subr.mxu0 0.0
    %327 = vmatpush1.xpose.msra.mxu0 0.0
    %328 = vmatprep.subr.mxu0 0.0
    %329 = vmatpush1.xpose.msra.mxu0 0.0
    %330 = vmatprep.subr.mxu0 0.0
    %331 = vmatpush1.xpose.msra.mxu0 0.0
    %332 = vmatprep.subr.mxu0 0.0
    %333 = vmatpush1.xpose.msra.mxu0 0.0
    %334 = vmatprep.subr.mxu0 0.0
    %335 = vmatpush1.xpose.msra.mxu0 0.0
    %336 = vmatprep.subr.mxu0 0.0
    %337 = vmatpush1.xpose.msra.mxu0 0.0
    %338 = vmatprep.subr.mxu0 0.0
    %339 = vmatpush1.xpose.msra.mxu0 0.0
    %340 = vmatprep.subr.mxu0 0.0
    %341 = vmatpush1.xpose.msra.mxu0 0.0
    %342 = vmatprep.subr.mxu0 0.0
    %343 = vmatpush1.xpose.msra.mxu0 0.0
    %344 = vmatprep.subr.mxu0 0.0
    %345 = vmatpush1.xpose.msra.mxu0 0.0
    %346 = vmatprep.subr.mxu0 0.0
    %347 = vmatpush1.xpose.msra.mxu0 0.0
    %348 = vmatprep.subr.mxu0 0.0
    %349 = vmatpush1.xpose.msra.mxu0 0.0
    %350 = vmatprep.subr.mxu0 0.0
    %351 = vmatpush1.xpose.msra.mxu0 0.0
    %352 = vmatprep.subr.mxu0 0.0
    %353 = vmatpush1.xpose.msra.mxu0 0.0
    %354 = vmatprep.subr.mxu0 0.0
    %355 = vmatpush1.xpose.msra.mxu0 0.0
    %356 = vmatprep.subr.mxu0 0.0
    %357 = vmatpush1.xpose.msra.mxu0 0.0
    %358 = vmatprep.subr.mxu0 0.0
    %359 = vmatpush1.xpose.msra.mxu0 0.0
    %360 = vmatprep.subr.mxu0 0.0
    %361 = vmatpush1.xpose.msra.mxu0 0.0
    %362 = vmatprep.subr.mxu0 0.0
    %363 = vmatpush1.xpose.msra.mxu0 0.0
    %364 = vmatprep.mubr.f32.mxu0 0.0
    %365 = vmatmul.mubr.f32.gmra.mrb[0].mxu0 %v296
    %v366 = vpop.f32.mrb[0].mxu0
    %v367 = vadd.f32 0.0, %v366
    %v368 = vpop.f32.mrb[0].mxu0
    %369 = vdwg.mxu0
    %v370 = vmul.f32 %v290, 0.35355338
    %v371 = vmul.f32 %v367, 0.35355338
    %v372 = vadd.f32 %v370, %v214
    %v373 = vadd.f32 %v371, %v214
    %v374 = vsel %vm218, %v372, -inf
    %375 = vmax.xlane.f32.xlu0 %v374
    %v376 = vpop.xlane.xlu0 %375
    %v377 = vsel %vm218, %v373, -inf
    %378 = vmax.xlane.f32.xlu0 %v377
    %v379 = vpop.xlane.xlu0 %378
    %v380 = vsub.f32 %v372, %v376
    %v381 = vsub.f32 %v373, %v379
    %v382 = vmul.f32 %v380, 1.442695
    %v383 = vpow.pop %v382
    %v384 = vmul.f32 %v381, 1.442695
    %v385 = vpow.pop %v384
    %v386 = vsel %vm218, %v383, 0.0
    %387 = vadd.xlane.f32.xlu0 %v386
    %v388 = vpop.xlane.xlu0 %387
    %v389 = vsel %vm218, %v385, 0.0
    %390 = vadd.xlane.f32.xlu0 %v389
    %v391 = vpop.xlane.xlu0 %390
    %v392 = vrcp.pop %v388
    %v393 = vrcp.pop %v391
    %v394 = vmul.f32 %v383, %v392
    %v395 = vmul.f32 %v385, %v393
    %396 = vrot.lane.b32.xlu0 %v201, 64
    %v397 = vpop.permute.xlu0 %396
    %v400 = vsel %vm218, %v394, 0
    %402 = vmatprep.subr.mxu0 0.0
    %403 = vmatpush1.msra.mxu0 %v397
    %404 = vmatprep.subr.mxu0 0.0
    %405 = vmatpush1.msra.mxu0 0.0
    %406 = vmatprep.subr.mxu0 0.0
    %407 = vmatpush1.msra.mxu0 0.0
    %408 = vmatprep.subr.mxu0 0.0
    %409 = vmatpush1.msra.mxu0 0.0
    %410 = vmatprep.subr.mxu0 0.0
    %411 = vmatpush1.msra.mxu0 0.0
    %412 = vmatprep.subr.mxu0 0.0
    %413 = vmatpush1.msra.mxu0 0.0
    %414 = vmatprep.subr.mxu0 0.0
    %415 = vmatpush1.msra.mxu0 0.0
    %416 = vmatprep.subr.mxu0 0.0
    %417 = vmatpush1.msra.mxu0 0.0
    %418 = vmatprep.subr.mxu0 0.0
    %419 = vmatpush1.msra.mxu0 0.0
    %420 = vmatprep.subr.mxu0 0.0
    %421 = vmatpush1.msra.mxu0 0.0
    %422 = vmatprep.subr.mxu0 0.0
    %423 = vmatpush1.msra.mxu0 0.0
    %424 = vmatprep.subr.mxu0 0.0
    %425 = vmatpush1.msra.mxu0 0.0
    %426 = vmatprep.subr.mxu0 0.0
    %427 = vmatpush1.msra.mxu0 0.0
    %428 = vmatprep.subr.mxu0 0.0
    %429 = vmatpush1.msra.mxu0 0.0
    %430 = vmatprep.subr.mxu0 0.0
    %431 = vmatpush1.msra.mxu0 0.0
    %432 = vmatprep.subr.mxu0 0.0
    %433 = vmatpush1.msra.mxu0 0.0
    %434 = vmatprep.subr.mxu0 0.0
    %435 = vmatpush1.msra.mxu0 0.0
    %436 = vmatprep.subr.mxu0 0.0
    %437 = vmatpush1.msra.mxu0 0.0
    %438 = vmatprep.subr.mxu0 0.0
    %439 = vmatpush1.msra.mxu0 0.0
    %440 = vmatprep.subr.mxu0 0.0
    %441 = vmatpush1.msra.mxu0 0.0
    %442 = vmatprep.subr.mxu0 0.0
    %443 = vmatpush1.msra.mxu0 0.0
    %444 = vmatprep.subr.mxu0 0.0
    %445 = vmatpush1.msra.mxu0 0.0
    %446 = vmatprep.subr.mxu0 0.0
    %447 = vmatpush1.msra.mxu0 0.0
    %448 = vmatprep.subr.mxu0 0.0
    %449 = vmatpush1.msra.mxu0 0.0
    %450 = vmatprep.subr.mxu0 0.0
    %451 = vmatpush1.msra.mxu0 0.0
    %452 = vmatprep.subr.mxu0 0.0
    %453 = vmatpush1.msra.mxu0 0.0
    %454 = vmatprep.subr.mxu0 0.0
    %455 = vmatpush1.msra.mxu0 0.0
    %456 = vmatprep.subr.mxu0 0.0
    %457 = vmatpush1.msra.mxu0 0.0
    %458 = vmatprep.subr.mxu0 0.0
    %459 = vmatpush1.msra.mxu0 0.0
    %460 = vmatprep.subr.mxu0 0.0
    %461 = vmatpush1.msra.mxu0 0.0
    %462 = vmatprep.subr.mxu0 0.0
    %463 = vmatpush1.msra.mxu0 0.0
    %464 = vmatprep.subr.mxu0 0.0
    %465 = vmatpush1.msra.mxu0 0.0
    %466 = vmatprep.mubr.f32.mxu0 0.0
    %467 = vmatmul.mubr.f32.gmra.mrb[0].mxu0 %v400
    %v468 = vpop.f32.mrb[0].mxu0
    %v469 = vadd.f32 0.0, %v468
    %v470 = vpop.f32.mrb[0].mxu0
    %471 = vdwg.mxu0
    %472 = vrot.lane.b32.xlu0 %v206, 64
    %v473 = vpop.permute.xlu0 %472
    %v476 = vsel %vm218, %v395, 0
    %478 = vmatprep.subr.mxu0 0.0
    %479 = vmatpush1.msra.mxu0 %v473
    %480 = vmatprep.subr.mxu0 0.0
    %481 = vmatpush1.msra.mxu0 0.0
    %482 = vmatprep.subr.mxu0 0.0
    %483 = vmatpush1.msra.mxu0 0.0
    %484 = vmatprep.subr.mxu0 0.0
    %485 = vmatpush1.msra.mxu0 0.0
    %486 = vmatprep.subr.mxu0 0.0
    %487 = vmatpush1.msra.mxu0 0.0
    %488 = vmatprep.subr.mxu0 0.0
    %489 = vmatpush1.msra.mxu0 0.0
    %490 = vmatprep.subr.mxu0 0.0
    %491 = vmatpush1.msra.mxu0 0.0
    %492 = vmatprep.subr.mxu0 0.0
    %493 = vmatpush1.msra.mxu0 0.0
    %494 = vmatprep.subr.mxu0 0.0
    %495 = vmatpush1.msra.mxu0 0.0
    %496 = vmatprep.subr.mxu0 0.0
    %497 = vmatpush1.msra.mxu0 0.0
    %498 = vmatprep.subr.mxu0 0.0
    %499 = vmatpush1.msra.mxu0 0.0
    %500 = vmatprep.subr.mxu0 0.0
    %501 = vmatpush1.msra.mxu0 0.0
    %502 = vmatprep.subr.mxu0 0.0
    %503 = vmatpush1.msra.mxu0 0.0
    %504 = vmatprep.subr.mxu0 0.0
    %505 = vmatpush1.msra.mxu0 0.0
    %506 = vmatprep.subr.mxu0 0.0
    %507 = vmatpush1.msra.mxu0 0.0
    %508 = vmatprep.subr.mxu0 0.0
    %509 = vmatpush1.msra.mxu0 0.0
    %510 = vmatprep.subr.mxu0 0.0
    %511 = vmatpush1.msra.mxu0 0.0
    %512 = vmatprep.subr.mxu0 0.0
    %513 = vmatpush1.msra.mxu0 0.0
    %514 = vmatprep.subr.mxu0 0.0
    %515 = vmatpush1.msra.mxu0 0.0
    %516 = vmatprep.subr.mxu0 0.0
    %517 = vmatpush1.msra.mxu0 0.0
    %518 = vmatprep.subr.mxu0 0.0
    %519 = vmatpush1.msra.mxu0 0.0
    %520 = vmatprep.subr.mxu0 0.0
    %521 = vmatpush1.msra.mxu0 0.0
    %522 = vmatprep.subr.mxu0 0.0
    %523 = vmatpush1.msra.mxu0 0.0
    %524 = vmatprep.subr.mxu0 0.0
    %525 = vmatpush1.msra.mxu0 0.0
    %526 = vmatprep.subr.mxu0 0.0
    %527 = vmatpush1.msra.mxu0 0.0
    %528 = vmatprep.subr.mxu0 0.0
    %529 = vmatpush1.msra.mxu0 0.0
    %530 = vmatprep.subr.mxu0 0.0
    %531 = vmatpush1.msra.mxu0 0.0
    %532 = vmatprep.subr.mxu0 0.0
    %533 = vmatpush1.msra.mxu0 0.0
    %534 = vmatprep.subr.mxu0 0.0
    %535 = vmatpush1.msra.mxu0 0.0
    %536 = vmatprep.subr.mxu0 0.0
    %537 = vmatpush1.msra.mxu0 0.0
    %538 = vmatprep.subr.mxu0 0.0
    %539 = vmatpush1.msra.mxu0 0.0
    %540 = vmatprep.subr.mxu0 0.0
    %541 = vmatpush1.msra.mxu0 0.0
    %542 = vmatprep.mubr.f32.mxu0 0.0
    %543 = vmatmul.mubr.f32.gmra.mrb[0].mxu0 %v476
    %v544 = vpop.f32.mrb[0].mxu0
    %v545 = vadd.f32 0.0, %v544
    %v546 = vpop.f32.mrb[0].mxu0
    %547 = vdwg.mxu0
    %548 = vrot.lane.b32.xlu0 %v201, 120
    %v549 = vpop.permute.xlu0 %548
    %550 = vrot.lane.b32.xlu0 %v201, 88
    %v551 = vpop.permute.xlu0 %550
    %v552 = vsel %vm218, %v549, 0
    %v554 = vsel %vm218, %v551, 0
    %556 = vmatprep.subr.mxu0 0.0
    %557 = vmatpush1.xpose.msra.mxu0 %v554
    %558 = vmatprep.subr.mxu0 0.0
    %559 = vmatpush1.xpose.msra.mxu0 0.0
    %560 = vmatprep.subr.mxu0 0.0
    %561 = vmatpush1.xpose.msra.mxu0 0.0
    %562 = vmatprep.subr.mxu0 0.0
    %563 = vmatpush1.xpose.msra.mxu0 0.0
    %564 = vmatprep.subr.mxu0 0.0
    %565 = vmatpush1.xpose.msra.mxu0 0.0
    %566 = vmatprep.subr.mxu0 0.0
    %567 = vmatpush1.xpose.msra.mxu0 0.0
    %568 = vmatprep.subr.mxu0 0.0
    %569 = vmatpush1.xpose.msra.mxu0 0.0
    %570 = vmatprep.subr.mxu0 0.0
    %571 = vmatpush1.xpose.msra.mxu0 0.0
    %572 = vmatprep.subr.mxu0 0.0
    %573 = vmatpush1.xpose.msra.mxu0 0.0
    %574 = vmatprep.subr.mxu0 0.0
    %575 = vmatpush1.xpose.msra.mxu0 0.0
    %576 = vmatprep.subr.mxu0 0.0
    %577 = vmatpush1.xpose.msra.mxu0 0.0
    %578 = vmatprep.subr.mxu0 0.0
    %579 = vmatpush1.xpose.msra.mxu0 0.0
    %580 = vmatprep.subr.mxu0 0.0
    %581 = vmatpush1.xpose.msra.mxu0 0.0
    %582 = vmatprep.subr.mxu0 0.0
    %583 = vmatpush1.xpose.msra.mxu0 0.0
    %584 = vmatprep.subr.mxu0 0.0
    %585 = vmatpush1.xpose.msra.mxu0 0.0
    %586 = vmatprep.subr.mxu0 0.0
    %587 = vmatpush1.xpose.msra.mxu0 0.0
    %588 = vmatprep.subr.mxu0 0.0
    %589 = vmatpush1.xpose.msra.mxu0 0.0
    %590 = vmatprep.subr.mxu0 0.0
    %591 = vmatpush1.xpose.msra.mxu0 0.0
    %592 = vmatprep.subr.mxu0 0.0
    %593 = vmatpush1.xpose.msra.mxu0 0.0
    %594 = vmatprep.subr.mxu0 0.0
    %595 = vmatpush1.xpose.msra.mxu0 0.0
    %596 = vmatprep.subr.mxu0 0.0
    %597 = vmatpush1.xpose.msra.mxu0 0.0
    %598 = vmatprep.subr.mxu0 0.0
    %599 = vmatpush1.xpose.msra.mxu0 0.0
    %600 = vmatprep.subr.mxu0 0.0
    %601 = vmatpush1.xpose.msra.mxu0 0.0
    %602 = vmatprep.subr.mxu0 0.0
    %603 = vmatpush1.xpose.msra.mxu0 0.0
    %604 = vmatprep.subr.mxu0 0.0
    %605 = vmatpush1.xpose.msra.mxu0 0.0
    %606 = vmatprep.subr.mxu0 0.0
    %607 = vmatpush1.xpose.msra.mxu0 0.0
    %608 = vmatprep.subr.mxu0 0.0
    %609 = vmatpush1.xpose.msra.mxu0 0.0
    %610 = vmatprep.subr.mxu0 0.0
    %611 = vmatpush1.xpose.msra.mxu0 0.0
    %612 = vmatprep.subr.mxu0 0.0
    %613 = vmatpush1.xpose.msra.mxu0 0.0
    %614 = vmatprep.subr.mxu0 0.0
    %615 = vmatpush1.xpose.msra.mxu0 0.0
    %616 = vmatprep.subr.mxu0 0.0
    %617 = vmatpush1.xpose.msra.mxu0 0.0
    %618 = vmatprep.subr.mxu0 0.0
    %619 = vmatpush1.xpose.msra.mxu0 0.0
    %620 = vmatprep.mubr.f32.mxu0 0.0
    %621 = vmatmul.mubr.f32.gmra.mrb[0].mxu0 %v552
    %v622 = vpop.f32.mrb[0].mxu0
    %v623 = vadd.f32 0.0, %v622
    %v624 = vpop.f32.mrb[0].mxu0
    %625 = vdwg.mxu0
    %626 = vrot.lane.b32.xlu0 %v206, 120
    %v627 = vpop.permute.xlu0 %626
    %628 = vrot.lane.b32.xlu0 %v206, 88
    %v629 = vpop.permute.xlu0 %628
    %v630 = vsel %vm218, %v627, 0
    %v632 = vsel %vm218, %v629, 0
    %634 = vmatprep.subr.mxu0 0.0
    %635 = vmatpush1.xpose.msra.mxu0 %v632
    %636 = vmatprep.subr.mxu0 0.0
    %637 = vmatpush1.xpose.msra.mxu0 0.0
    %638 = vmatprep.subr.mxu0 0.0
    %639 = vmatpush1.xpose.msra.mxu0 0.0
    %640 = vmatprep.subr.mxu0 0.0
    %641 = vmatpush1.xpose.msra.mxu0 0.0
    %642 = vmatprep.subr.mxu0 0.0
    %643 = vmatpush1.xpose.msra.mxu0 0.0
    %644 = vmatprep.subr.mxu0 0.0
    %645 = vmatpush1.xpose.msra.mxu0 0.0
    %646 = vmatprep.subr.mxu0 0.0
    %647 = vmatpush1.xpose.msra.mxu0 0.0
    %648 = vmatprep.subr.mxu0 0.0
    %649 = vmatpush1.xpose.msra.mxu0 0.0
    %650 = vmatprep.subr.mxu0 0.0
    %651 = vmatpush1.xpose.msra.mxu0 0.0
    %652 = vmatprep.subr.mxu0 0.0
    %653 = vmatpush1.xpose.msra.mxu0 0.0
    %654 = vmatprep.subr.mxu0 0.0
    %655 = vmatpush1.xpose.msra.mxu0 0.0
    %656 = vmatprep.subr.mxu0 0.0
    %657 = vmatpush1.xpose.msra.mxu0 0.0
    %658 = vmatprep.subr.mxu0 0.0
    %659 = vmatpush1.xpose.msra.mxu0 0.0
    %660 = vmatprep.subr.mxu0 0.0
    %661 = vmatpush1.xpose.msra.mxu0 0.0
    %662 = vmatprep.subr.mxu0 0.0
    %663 = vmatpush1.xpose.msra.mxu0 0.0
    %664 = vmatprep.subr.mxu0 0.0
    %665 = vmatpush1.xpose.msra.mxu0 0.0
    %666 = vmatprep.subr.mxu0 0.0
    %667 = vmatpush1.xpose.msra.mxu0 0.0
    %668 = vmatprep.subr.mxu0 0.0
    %669 = vmatpush1.xpose.msra.mxu0 0.0
    %670 = vmatprep.subr.mxu0 0.0
    %671 = vmatpush1.xpose.msra.mxu0 0.0
    %672 = vmatprep.subr.mxu0 0.0
    %673 = vmatpush1.xpose.msra.mxu0 0.0
    %674 = vmatprep.subr.mxu0 0.0
    %675 = vmatpush1.xpose.msra.mxu0 0.0
    %676 = vmatprep.subr.mxu0 0.0
    %677 = vmatpush1.xpose.msra.mxu0 0.0
    %678 = vmatprep.subr.mxu0 0.0
    %679 = vmatpush1.xpose.msra.mxu0 0.0
    %680 = vmatprep.subr.mxu0 0.0
    %681 = vmatpush1.xpose.msra.mxu0 0.0
    %682 = vmatprep.subr.mxu0 0.0
    %683 = vmatpush1.xpose.msra.mxu0 0.0
    %684 = vmatprep.subr.mxu0 0.0
    %685 = vmatpush1.xpose.msra.mxu0 0.0
    %686 = vmatprep.subr.mxu0 0.0
    %687 = vmatpush1.xpose.msra.mxu0 0.0
    %688 = vmatprep.subr.mxu0 0.0
    %689 = vmatpush1.xpose.msra.mxu0 0.0
    %690 = vmatprep.subr.mxu0 0.0
    %691 = vmatpush1.xpose.msra.mxu0 0.0
    %692 = vmatprep.subr.mxu0 0.0
    %693 = vmatpush1.xpose.msra.mxu0 0.0
    %694 = vmatprep.subr.mxu0 0.0
    %695 = vmatpush1.xpose.msra.mxu0 0.0
    %696 = vmatprep.subr.mxu0 0.0
    %697 = vmatpush1.xpose.msra.mxu0 0.0
    %698 = vmatprep.mubr.f32.mxu0 0.0
    %699 = vmatmul.mubr.f32.gmra.mrb[0].mxu0 %v630
    %v700 = vpop.f32.mrb[0].mxu0
    %v701 = vadd.f32 0.0, %v700
    %v702 = vpop.f32.mrb[0].mxu0
    %703 = vdwg.mxu0
    %v704 = vmul.f32 %v623, 0.35355338
    %v705 = vmul.f32 %v701, 0.35355338
    %v706 = vadd.f32 %v704, %v214
    %v707 = vadd.f32 %v705, %v214
    %v708 = vsel %vm218, %v706, -inf
    %709 = vmax.xlane.f32.xlu0 %v708
    %v710 = vpop.xlane.xlu0 %709
    %v711 = vsel %vm218, %v707, -inf
    %712 = vmax.xlane.f32.xlu0 %v711
    %v713 = vpop.xlane.xlu0 %712
    %v714 = vsub.f32 %v706, %v710
    %v715 = vsub.f32 %v707, %v713
    %v716 = vmul.f32 %v714, 1.442695
    %v717 = vpow.pop %v716
    %v718 = vmul.f32 %v715, 1.442695
    %v719 = vpow.pop %v718
    %v720 = vsel %vm218, %v717, 0.0
    %721 = vadd.xlane.f32.xlu0 %v720
    %v722 = vpop.xlane.xlu0 %721
    %v723 = vsel %vm218, %v719, 0.0
    %724 = vadd.xlane.f32.xlu0 %v723
    %v725 = vpop.xlane.xlu0 %724
    %v726 = vrcp.pop %v722
    %v727 = vrcp.pop %v725
    %v728 = vmul.f32 %v717, %v726
    %v729 = vmul.f32 %v719, %v727
    %730 = vrot.lane.b32.xlu0 %v201, 56
    %v731 = vpop.permute.xlu0 %730
    %v734 = vsel %vm218, %v728, 0
    %736 = vmatprep.subr.mxu0 0.0
    %737 = vmatpush1.msra.mxu0 %v731
    %738 = vmatprep.subr.mxu0 0.0
    %739 = vmatpush1.msra.mxu0 0.0
    %740 = vmatprep.subr.mxu0 0.0
    %741 = vmatpush1.msra.mxu0 0.0
    %742 = vmatprep.subr.mxu0 0.0
    %743 = vmatpush1.msra.mxu0 0.0
    %744 = vmatprep.subr.mxu0 0.0
    %745 = vmatpush1.msra.mxu0 0.0
    %746 = vmatprep.subr.mxu0 0.0
    %747 = vmatpush1.msra.mxu0 0.0
    %748 = vmatprep.subr.mxu0 0.0
    %749 = vmatpush1.msra.mxu0 0.0
    %750 = vmatprep.subr.mxu0 0.0
    %751 = vmatpush1.msra.mxu0 0.0
    %752 = vmatprep.subr.mxu0 0.0
    %753 = vmatpush1.msra.mxu0 0.0
    %754 = vmatprep.subr.mxu0 0.0
    %755 = vmatpush1.msra.mxu0 0.0
    %756 = vmatprep.subr.mxu0 0.0
    %757 = vmatpush1.msra.mxu0 0.0
    %758 = vmatprep.subr.mxu0 0.0
    %759 = vmatpush1.msra.mxu0 0.0
    %760 = vmatprep.subr.mxu0 0.0
    %761 = vmatpush1.msra.mxu0 0.0
    %762 = vmatprep.subr.mxu0 0.0
    %763 = vmatpush1.msra.mxu0 0.0
    %764 = vmatprep.subr.mxu0 0.0
    %765 = vmatpush1.msra.mxu0 0.0
    %766 = vmatprep.subr.mxu0 0.0
    %767 = vmatpush1.msra.mxu0 0.0
    %768 = vmatprep.subr.mxu0 0.0
    %769 = vmatpush1.msra.mxu0 0.0
    %770 = vmatprep.subr.mxu0 0.0
    %771 = vmatpush1.msra.mxu0 0.0
    %772 = vmatprep.subr.mxu0 0.0
    %773 = vmatpush1.msra.mxu0 0.0
    %774 = vmatprep.subr.mxu0 0.0
    %775 = vmatpush1.msra.mxu0 0.0
    %776 = vmatprep.subr.mxu0 0.0
    %777 = vmatpush1.msra.mxu0 0.0
    %778 = vmatprep.subr.mxu0 0.0
    %779 = vmatpush1.msra.mxu0 0.0
    %780 = vmatprep.subr.mxu0 0.0
    %781 = vmatpush1.msra.mxu0 0.0
    %782 = vmatprep.subr.mxu0 0.0
    %783 = vmatpush1.msra.mxu0 0.0
    %784 = vmatprep.subr.mxu0 0.0
    %785 = vmatpush1.msra.mxu0 0.0
    %786 = vmatprep.subr.mxu0 0.0
    %787 = vmatpush1.msra.mxu0 0.0
    %788 = vmatprep.subr.mxu0 0.0
    %789 = vmatpush1.msra.mxu0 0.0
    %790 = vmatprep.subr.mxu0 0.0
    %791 = vmatpush1.msra.mxu0 0.0
    %792 = vmatprep.subr.mxu0 0.0
    %793 = vmatpush1.msra.mxu0 0.0
    %794 = vmatprep.subr.mxu0 0.0
    %795 = vmatpush1.msra.mxu0 0.0
    %796 = vmatprep.subr.mxu0 0.0
    %797 = vmatpush1.msra.mxu0 0.0
    %798 = vmatprep.subr.mxu0 0.0
    %799 = vmatpush1.msra.mxu0 0.0
    %800 = vmatprep.mubr.f32.mxu0 0.0
    %801 = vmatmul.mubr.f32.gmra.mrb[0].mxu0 %v734
    %v802 = vpop.f32.mrb[0].mxu0
    %v803 = vadd.f32 0.0, %v802
    %v804 = vpop.f32.mrb[0].mxu0
    %805 = vdwg.mxu0
    %806 = vrot.lane.b32.xlu0 %v206, 56
    %v807 = vpop.permute.xlu0 %806
    %v810 = vsel %vm218, %v729, 0
    %812 = vmatprep.subr.mxu0 0.0
    %813 = vmatpush1.msra.mxu0 %v807
    %814 = vmatprep.subr.mxu0 0.0
    %815 = vmatpush1.msra.mxu0 0.0
    %816 = vmatprep.subr.mxu0 0.0
    %817 = vmatpush1.msra.mxu0 0.0
    %818 = vmatprep.subr.mxu0 0.0
    %819 = vmatpush1.msra.mxu0 0.0
    %820 = vmatprep.subr.mxu0 0.0
    %821 = vmatpush1.msra.mxu0 0.0
    %822 = vmatprep.subr.mxu0 0.0
    %823 = vmatpush1.msra.mxu0 0.0
    %824 = vmatprep.subr.mxu0 0.0
    %825 = vmatpush1.msra.mxu0 0.0
    %826 = vmatprep.subr.mxu0 0.0
    %827 = vmatpush1.msra.mxu0 0.0
    %828 = vmatprep.subr.mxu0 0.0
    %829 = vmatpush1.msra.mxu0 0.0
    %830 = vmatprep.subr.mxu0 0.0
    %831 = vmatpush1.msra.mxu0 0.0
    %832 = vmatprep.subr.mxu0 0.0
    %833 = vmatpush1.msra.mxu0 0.0
    %834 = vmatprep.subr.mxu0 0.0
    %835 = vmatpush1.msra.mxu0 0.0
    %836 = vmatprep.subr.mxu0 0.0
    %837 = vmatpush1.msra.mxu0 0.0
    %838 = vmatprep.subr.mxu0 0.0
    %839 = vmatpush1.msra.mxu0 0.0
    %840 = vmatprep.subr.mxu0 0.0
    %841 = vmatpush1.msra.mxu0 0.0
    %842 = vmatprep.subr.mxu0 0.0
    %843 = vmatpush1.msra.mxu0 0.0
    %844 = vmatprep.subr.mxu0 0.0
    %845 = vmatpush1.msra.mxu0 0.0
    %846 = vmatprep.subr.mxu0 0.0
    %847 = vmatpush1.msra.mxu0 0.0
    %848 = vmatprep.subr.mxu0 0.0
    %849 = vmatpush1.msra.mxu0 0.0
    %850 = vmatprep.subr.mxu0 0.0
    %851 = vmatpush1.msra.mxu0 0.0
    %852 = vmatprep.subr.mxu0 0.0
    %853 = vmatpush1.msra.mxu0 0.0
    %854 = vmatprep.subr.mxu0 0.0
    %855 = vmatpush1.msra.mxu0 0.0
    %856 = vmatprep.subr.mxu0 0.0
    %857 = vmatpush1.msra.mxu0 0.0
    %858 = vmatprep.subr.mxu0 0.0
    %859 = vmatpush1.msra.mxu0 0.0
    %860 = vmatprep.subr.mxu0 0.0
    %861 = vmatpush1.msra.mxu0 0.0
    %862 = vmatprep.subr.mxu0 0.0
    %863 = vmatpush1.msra.mxu0 0.0
    %864 = vmatprep.subr.mxu0 0.0
    %865 = vmatpush1.msra.mxu0 0.0
    %866 = vmatprep.subr.mxu0 0.0
    %867 = vmatpush1.msra.mxu0 0.0
    %868 = vmatprep.subr.mxu0 0.0
    %869 = vmatpush1.msra.mxu0 0.0
    %870 = vmatprep.subr.mxu0 0.0
    %871 = vmatpush1.msra.mxu0 0.0
    %872 = vmatprep.subr.mxu0 0.0
    %873 = vmatpush1.msra.mxu0 0.0
    %874 = vmatprep.subr.mxu0 0.0
    %875 = vmatpush1.msra.mxu0 0.0
    %876 = vmatprep.mubr.f32.mxu0 0.0
    %877 = vmatmul.mubr.f32.gmra.mrb[0].mxu0 %v810
    %v878 = vpop.f32.mrb[0].mxu0
    %v879 = vadd.f32 0.0, %v878
    %v880 = vpop.f32.mrb[0].mxu0
    %881 = vdwg.mxu0
    %882 = vrot.lane.b32.xlu0 %v201, 112
    %v883 = vpop.permute.xlu0 %882
    %884 = vrot.lane.b32.xlu0 %v201, 80
    %v885 = vpop.permute.xlu0 %884
    %v886 = vsel %vm218, %v883, 0
    %v888 = vsel %vm218, %v885, 0
    %890 = vmatprep.subr.mxu0 0.0
    %891 = vmatpush1.xpose.msra.mxu0 %v888
    %892 = vmatprep.subr.mxu0 0.0
    %893 = vmatpush1.xpose.msra.mxu0 0.0
    %894 = vmatprep.subr.mxu0 0.0
    %895 = vmatpush1.xpose.msra.mxu0 0.0
    %896 = vmatprep.subr.mxu0 0.0
    %897 = vmatpush1.xpose.msra.mxu0 0.0
    %898 = vmatprep.subr.mxu0 0.0
    %899 = vmatpush1.xpose.msra.mxu0 0.0
    %900 = vmatprep.subr.mxu0 0.0
    %901 = vmatpush1.xpose.msra.mxu0 0.0
    %902 = vmatprep.subr.mxu0 0.0
    %903 = vmatpush1.xpose.msra.mxu0 0.0
    %904 = vmatprep.subr.mxu0 0.0
    %905 = vmatpush1.xpose.msra.mxu0 0.0
    %906 = vmatprep.subr.mxu0 0.0
    %907 = vmatpush1.xpose.msra.mxu0 0.0
    %908 = vmatprep.subr.mxu0 0.0
    %909 = vmatpush1.xpose.msra.mxu0 0.0
    %910 = vmatprep.subr.mxu0 0.0
    %911 = vmatpush1.xpose.msra.mxu0 0.0
    %912 = vmatprep.subr.mxu0 0.0
    %913 = vmatpush1.xpose.msra.mxu0 0.0
    %914 = vmatprep.subr.mxu0 0.0
    %915 = vmatpush1.xpose.msra.mxu0 0.0
    %916 = vmatprep.subr.mxu0 0.0
    %917 = vmatpush1.xpose.msra.mxu0 0.0
    %918 = vmatprep.subr.mxu0 0.0
    %919 = vmatpush1.xpose.msra.mxu0 0.0
    %920 = vmatprep.subr.mxu0 0.0
    %921 = vmatpush1.xpose.msra.mxu0 0.0
    %922 = vmatprep.subr.mxu0 0.0
    %923 = vmatpush1.xpose.msra.mxu0 0.0
    %924 = vmatprep.subr.mxu0 0.0
    %925 = vmatpush1.xpose.msra.mxu0 0.0
    %926 = vmatprep.subr.mxu0 0.0
    %927 = vmatpush1.xpose.msra.mxu0 0.0
    %928 = vmatprep.subr.mxu0 0.0
    %929 = vmatpush1.xpose.msra.mxu0 0.0
    %930 = vmatprep.subr.mxu0 0.0
    %931 = vmatpush1.xpose.msra.mxu0 0.0
    %932 = vmatprep.subr.mxu0 0.0
    %933 = vmatpush1.xpose.msra.mxu0 0.0
    %934 = vmatprep.subr.mxu0 0.0
    %935 = vmatpush1.xpose.msra.mxu0 0.0
    %936 = vmatprep.subr.mxu0 0.0
    %937 = vmatpush1.xpose.msra.mxu0 0.0
    %938 = vmatprep.subr.mxu0 0.0
    %939 = vmatpush1.xpose.msra.mxu0 0.0
    %940 = vmatprep.subr.mxu0 0.0
    %941 = vmatpush1.xpose.msra.mxu0 0.0
    %942 = vmatprep.subr.mxu0 0.0
    %943 = vmatpush1.xpose.msra.mxu0 0.0
    %944 = vmatprep.subr.mxu0 0.0
    %945 = vmatpush1.xpose.msra.mxu0 0.0
    %946 = vmatprep.subr.mxu0 0.0
    %947 = vmatpush1.xpose.msra.mxu0 0.0
    %948 = vmatprep.subr.mxu0 0.0
    %949 = vmatpush1.xpose.msra.mxu0 0.0
    %950 = vmatprep.subr.mxu0 0.0
    %951 = vmatpush1.xpose.msra.mxu0 0.0
    %952 = vmatprep.subr.mxu0 0.0
    %953 = vmatpush1.xpose.msra.mxu0 0.0
    %954 = vmatprep.mubr.f32.mxu0 0.0
    %955 = vmatmul.mubr.f32.gmra.mrb[0].mxu0 %v886
    %v956 = vpop.f32.mrb[0].mxu0
    %v957 = vadd.f32 0.0, %v956
    %v958 = vpop.f32.mrb[0].mxu0
    %959 = vdwg.mxu0
    %960 = vrot.lane.b32.xlu0 %v206, 112
    %v961 = vpop.permute.xlu0 %960
    %962 = vrot.lane.b32.xlu0 %v206, 80
    %v963 = vpop.permute.xlu0 %962
    %v964 = vsel %vm218, %v961, 0
    %v966 = vsel %vm218, %v963, 0
    %968 = vmatprep.subr.mxu0 0.0
    %969 = vmatpush1.xpose.msra.mxu0 %v966
    %970 = vmatprep.subr.mxu0 0.0
    %971 = vmatpush1.xpose.msra.mxu0 0.0
    %972 = vmatprep.subr.mxu0 0.0
    %973 = vmatpush1.xpose.msra.mxu0 0.0
    %974 = vmatprep.subr.mxu0 0.0
    %975 = vmatpush1.xpose.msra.mxu0 0.0
    %976 = vmatprep.subr.mxu0 0.0
    %977 = vmatpush1.xpose.msra.mxu0 0.0
    %978 = vmatprep.subr.mxu0 0.0
    %979 = vmatpush1.xpose.msra.mxu0 0.0
    %980 = vmatprep.subr.mxu0 0.0
    %981 = vmatpush1.xpose.msra.mxu0 0.0
    %982 = vmatprep.subr.mxu0 0.0
    %983 = vmatpush1.xpose.msra.mxu0 0.0
    %984 = vmatprep.subr.mxu0 0.0
    %985 = vmatpush1.xpose.msra.mxu0 0.0
    %986 = vmatprep.subr.mxu0 0.0
    %987 = vmatpush1.xpose.msra.mxu0 0.0
    %988 = vmatprep.subr.mxu0 0.0
    %989 = vmatpush1.xpose.msra.mxu0 0.0
    %990 = vmatprep.subr.mxu0 0.0
    %991 = vmatpush1.xpose.msra.mxu0 0.0
    %992 = vmatprep.subr.mxu0 0.0
    %993 = vmatpush1.xpose.msra.mxu0 0.0
    %994 = vmatprep.subr.mxu0 0.0
    %995 = vmatpush1.xpose.msra.mxu0 0.0
    %996 = vmatprep.subr.mxu0 0.0
    %997 = vmatpush1.xpose.msra.mxu0 0.0
    %998 = vmatprep.subr.mxu0 0.0
    %999 = vmatpush1.xpose.msra.mxu0 0.0
    %1000 = vmatprep.subr.mxu0 0.0
    %1001 = vmatpush1.xpose.msra.mxu0 0.0
    %1002 = vmatprep.subr.mxu0 0.0
    %1003 = vmatpush1.xpose.msra.mxu0 0.0
    %1004 = vmatprep.subr.mxu0 0.0
    %1005 = vmatpush1.xpose.msra.mxu0 0.0
    %1006 = vmatprep.subr.mxu0 0.0
    %1007 = vmatpush1.xpose.msra.mxu0 0.0
    %1008 = vmatprep.subr.mxu0 0.0
    %1009 = vmatpush1.xpose.msra.mxu0 0.0
    %1010 = vmatprep.subr.mxu0 0.0
    %1011 = vmatpush1.xpose.msra.mxu0 0.0
    %1012 = vmatprep.subr.mxu0 0.0
    %1013 = vmatpush1.xpose.msra.mxu0 0.0
    %1014 = vmatprep.subr.mxu0 0.0
    %1015 = vmatpush1.xpose.msra.mxu0 0.0
    %1016 = vmatprep.subr.mxu0 0.0
    %1017 = vmatpush1.xpose.msra.mxu0 0.0
    %1018 = vmatprep.subr.mxu0 0.0
    %1019 = vmatpush1.xpose.msra.mxu0 0.0
    %1020 = vmatprep.subr.mxu0 0.0
    %1021 = vmatpush1.xpose.msra.mxu0 0.0
    %1022 = vmatprep.subr.mxu0 0.0
    %1023 = vmatpush1.xpose.msra.mxu0 0.0
    %1024 = vmatprep.subr.mxu0 0.0
    %1025 = vmatpush1.xpose.msra.mxu0 0.0
    %1026 = vmatprep.subr.mxu0 0.0
    %1027 = vmatpush1.xpose.msra.mxu0 0.0
    %1028 = vmatprep.subr.mxu0 0.0
    %1029 = vmatpush1.xpose.msra.mxu0 0.0
    %1030 = vmatprep.subr.mxu0 0.0
    %1031 = vmatpush1.xpose.msra.mxu0 0.0
    %1032 = vmatprep.mubr.f32.mxu0 0.0
    %1033 = vmatmul.mubr.f32.gmra.mrb[0].mxu0 %v964
    %v1034 = vpop.f32.mrb[0].mxu0
    %v1035 = vadd.f32 0.0, %v1034
    %v1036 = vpop.f32.mrb[0].mxu0
    %1037 = vdwg.mxu0
    %v1038 = vmul.f32 %v957, 0.35355338
    %v1039 = vmul.f32 %v1035, 0.35355338
    %v1040 = vadd.f32 %v1038, %v214
    %v1041 = vadd.f32 %v1039, %v214
    %v1042 = vsel %vm218, %v1040, -inf
    %1043 = vmax.xlane.f32.xlu0 %v1042
    %v1044 = vpop.xlane.xlu0 %1043
    %v1045 = vsel %vm218, %v1041, -inf
    %1046 = vmax.xlane.f32.xlu0 %v1045
    %v1047 = vpop.xlane.xlu0 %1046
    %v1048 = vsub.f32 %v1040, %v1044
    %v1049 = vsub.f32 %v1041, %v1047
    %v1050 = vmul.f32 %v1048, 1.442695
    %v1051 = vpow.pop %v1050
    %v1052 = vmul.f32 %v1049, 1.442695
    %v1053 = vpow.pop %v1052
    %v1054 = vsel %vm218, %v1051, 0.0
    %1055 = vadd.xlane.f32.xlu0 %v1054
    %v1056 = vpop.xlane.xlu0 %1055
    %v1057 = vsel %vm218, %v1053, 0.0
    %1058 = vadd.xlane.f32.xlu0 %v1057
    %v1059 = vpop.xlane.xlu0 %1058
    %v1060 = vrcp.pop %v1056
    %v1061 = vrcp.pop %v1059
    %v1062 = vmul.f32 %v1051, %v1060
    %v1063 = vmul.f32 %v1053, %v1061
    %1064 = vrot.lane.b32.xlu0 %v201, 48
    %v1065 = vpop.permute.xlu0 %1064
    %v1068 = vsel %vm218, %v1062, 0
    %1070 = vmatprep.subr.mxu0 0.0
    %1071 = vmatpush1.msra.mxu0 %v1065
    %1072 = vmatprep.subr.mxu0 0.0
    %1073 = vmatpush1.msra.mxu0 0.0
    %1074 = vmatprep.subr.mxu0 0.0
    %1075 = vmatpush1.msra.mxu0 0.0
    %1076 = vmatprep.subr.mxu0 0.0
    %1077 = vmatpush1.msra.mxu0 0.0
    %1078 = vmatprep.subr.mxu0 0.0
    %1079 = vmatpush1.msra.mxu0 0.0
    %1080 = vmatprep.subr.mxu0 0.0
    %1081 = vmatpush1.msra.mxu0 0.0
    %1082 = vmatprep.subr.mxu0 0.0
    %1083 = vmatpush1.msra.mxu0 0.0
    %1084 = vmatprep.subr.mxu0 0.0
    %1085 = vmatpush1.msra.mxu0 0.0
    %1086 = vmatprep.subr.mxu0 0.0
    %1087 = vmatpush1.msra.mxu0 0.0
    %1088 = vmatprep.subr.mxu0 0.0
    %1089 = vmatpush1.msra.mxu0 0.0
    %1090 = vmatprep.subr.mxu0 0.0
    %1091 = vmatpush1.msra.mxu0 0.0
    %1092 = vmatprep.subr.mxu0 0.0
    %1093 = vmatpush1.msra.mxu0 0.0
    %1094 = vmatprep.subr.mxu0 0.0
    %1095 = vmatpush1.msra.mxu0 0.0
    %1096 = vmatprep.subr.mxu0 0.0
    %1097 = vmatpush1.msra.mxu0 0.0
    %1098 = vmatprep.subr.mxu0 0.0
    %1099 = vmatpush1.msra.mxu0 0.0
    %1100 = vmatprep.subr.mxu0 0.0
    %1101 = vmatpush1.msra.mxu0 0.0
    %1102 = vmatprep.subr.mxu0 0.0
    %1103 = vmatpush1.msra.mxu0 0.0
    %1104 = vmatprep.subr.mxu0 0.0
    %1105 = vmatpush1.msra.mxu0 0.0
    %1106 = vmatprep.subr.mxu0 0.0
    %1107 = vmatpush1.msra.mxu0 0.0
    %1108 = vmatprep.subr.mxu0 0.0
    %1109 = vmatpush1.msra.mxu0 0.0
    %1110 = vmatprep.subr.mxu0 0.0
    %1111 = vmatpush1.msra.mxu0 0.0
    %1112 = vmatprep.subr.mxu0 0.0
    %1113 = vmatpush1.msra.mxu0 0.0
    %1114 = vmatprep.subr.mxu0 0.0
    %1115 = vmatpush1.msra.mxu0 0.0
    %1116 = vmatprep.subr.mxu0 0.0
    %1117 = vmatpush1.msra.mxu0 0.0
    %1118 = vmatprep.subr.mxu0 0.0
    %1119 = vmatpush1.msra.mxu0 0.0
    %1120 = vmatprep.subr.mxu0 0.0
    %1121 = vmatpush1.msra.mxu0 0.0
    %1122 = vmatprep.subr.mxu0 0.0
    %1123 = vmatpush1.msra.mxu0 0.0
    %1124 = vmatprep.subr.mxu0 0.0
    %1125 = vmatpush1.msra.mxu0 0.0
    %1126 = vmatprep.subr.mxu0 0.0
    %1127 = vmatpush1.msra.mxu0 0.0
    %1128 = vmatprep.subr.mxu0 0.0
    %1129 = vmatpush1.msra.mxu0 0.0
    %1130 = vmatprep.subr.mxu0 0.0
    %1131 = vmatpush1.msra.mxu0 0.0
    %1132 = vmatprep.subr.mxu0 0.0
    %1133 = vmatpush1.msra.mxu0 0.0
    %1134 = vmatprep.mubr.f32.mxu0 0.0
    %1135 = vmatmul.mubr.f32.gmra.mrb[0].mxu0 %v1068
    %v1136 = vpop.f32.mrb[0].mxu0
    %v1137 = vadd.f32 0.0, %v1136
    %v1138 = vpop.f32.mrb[0].mxu0
    %1139 = vdwg.mxu0
    %1140 = vrot.lane.b32.xlu0 %v206, 48
    %v1141 = vpop.permute.xlu0 %1140
    %v1144 = vsel %vm218, %v1063, 0
    %1146 = vmatprep.subr.mxu0 0.0
    %1147 = vmatpush1.msra.mxu0 %v1141
    %1148 = vmatprep.subr.mxu0 0.0
    %1149 = vmatpush1.msra.mxu0 0.0
    %1150 = vmatprep.subr.mxu0 0.0
    %1151 = vmatpush1.msra.mxu0 0.0
    %1152 = vmatprep.subr.mxu0 0.0
    %1153 = vmatpush1.msra.mxu0 0.0
    %1154 = vmatprep.subr.mxu0 0.0
    %1155 = vmatpush1.msra.mxu0 0.0
    %1156 = vmatprep.subr.mxu0 0.0
    %1157 = vmatpush1.msra.mxu0 0.0
    %1158 = vmatprep.subr.mxu0 0.0
    %1159 = vmatpush1.msra.mxu0 0.0
    %1160 = vmatprep.subr.mxu0 0.0
    %1161 = vmatpush1.msra.mxu0 0.0
    %1162 = vmatprep.subr.mxu0 0.0
    %1163 = vmatpush1.msra.mxu0 0.0
    %1164 = vmatprep.subr.mxu0 0.0
    %1165 = vmatpush1.msra.mxu0 0.0
    %1166 = vmatprep.subr.mxu0 0.0
    %1167 = vmatpush1.msra.mxu0 0.0
    %1168 = vmatprep.subr.mxu0 0.0
    %1169 = vmatpush1.msra.mxu0 0.0
    %1170 = vmatprep.subr.mxu0 0.0
    %1171 = vmatpush1.msra.mxu0 0.0
    %1172 = vmatprep.subr.mxu0 0.0
    %1173 = vmatpush1.msra.mxu0 0.0
    %1174 = vmatprep.subr.mxu0 0.0
    %1175 = vmatpush1.msra.mxu0 0.0
    %1176 = vmatprep.subr.mxu0 0.0
    %1177 = vmatpush1.msra.mxu0 0.0
    %1178 = vmatprep.subr.mxu0 0.0
    %1179 = vmatpush1.msra.mxu0 0.0
    %1180 = vmatprep.subr.mxu0 0.0
    %1181 = vmatpush1.msra.mxu0 0.0
    %1182 = vmatprep.subr.mxu0 0.0
    %1183 = vmatpush1.msra.mxu0 0.0
    %1184 = vmatprep.subr.mxu0 0.0
    %1185 = vmatpush1.msra.mxu0 0.0
    %1186 = vmatprep.subr.mxu0 0.0
    %1187 = vmatpush1.msra.mxu0 0.0
    %1188 = vmatprep.subr.mxu0 0.0
    %1189 = vmatpush1.msra.mxu0 0.0
    %1190 = vmatprep.subr.mxu0 0.0
    %1191 = vmatpush1.msra.mxu0 0.0
    %1192 = vmatprep.subr.mxu0 0.0
    %1193 = vmatpush1.msra.mxu0 0.0
    %1194 = vmatprep.subr.mxu0 0.0
    %1195 = vmatpush1.msra.mxu0 0.0
    %1196 = vmatprep.subr.mxu0 0.0
    %1197 = vmatpush1.msra.mxu0 0.0
    %1198 = vmatprep.subr.mxu0 0.0
    %1199 = vmatpush1.msra.mxu0 0.0
    %1200 = vmatprep.subr.mxu0 0.0
    %1201 = vmatpush1.msra.mxu0 0.0
    %1202 = vmatprep.subr.mxu0 0.0
    %1203 = vmatpush1.msra.mxu0 0.0
    %1204 = vmatprep.subr.mxu0 0.0
    %1205 = vmatpush1.msra.mxu0 0.0
    %1206 = vmatprep.subr.mxu0 0.0
    %1207 = vmatpush1.msra.mxu0 0.0
    %1208 = vmatprep.subr.mxu0 0.0
    %1209 = vmatpush1.msra.mxu0 0.0
    %1210 = vmatprep.mubr.f32.mxu0 0.0
    %1211 = vmatmul.mubr.f32.gmra.mrb[0].mxu0 %v1144
    %v1212 = vpop.f32.mrb[0].mxu0
    %v1213 = vadd.f32 0.0, %v1212
    %v1214 = vpop.f32.mrb[0].mxu0
    %1215 = vdwg.mxu0
    %1216 = vrot.lane.b32.xlu0 %v201, 104
    %v1217 = vpop.permute.xlu0 %1216
    %1218 = vrot.lane.b32.xlu0 %v201, 72
    %v1219 = vpop.permute.xlu0 %1218
    %v1220 = vsel %vm218, %v1217, 0
    %v1222 = vsel %vm218, %v1219, 0
    %1224 = vmatprep.subr.mxu0 0.0
    %1225 = vmatpush1.xpose.msra.mxu0 %v1222
    %1226 = vmatprep.subr.mxu0 0.0
    %1227 = vmatpush1.xpose.msra.mxu0 0.0
    %1228 = vmatprep.subr.mxu0 0.0
    %1229 = vmatpush1.xpose.msra.mxu0 0.0
    %1230 = vmatprep.subr.mxu0 0.0
    %1231 = vmatpush1.xpose.msra.mxu0 0.0
    %1232 = vmatprep.subr.mxu0 0.0
    %1233 = vmatpush1.xpose.msra.mxu0 0.0
    %1234 = vmatprep.subr.mxu0 0.0
    %1235 = vmatpush1.xpose.msra.mxu0 0.0
    %1236 = vmatprep.subr.mxu0 0.0
    %1237 = vmatpush1.xpose.msra.mxu0 0.0
    %1238 = vmatprep.subr.mxu0 0.0
    %1239 = vmatpush1.xpose.msra.mxu0 0.0
    %1240 = vmatprep.subr.mxu0 0.0
    %1241 = vmatpush1.xpose.msra.mxu0 0.0
    %1242 = vmatprep.subr.mxu0 0.0
    %1243 = vmatpush1.xpose.msra.mxu0 0.0
    %1244 = vmatprep.subr.mxu0 0.0
    %1245 = vmatpush1.xpose.msra.mxu0 0.0
    %1246 = vmatprep.subr.mxu0 0.0
    %1247 = vmatpush1.xpose.msra.mxu0 0.0
    %1248 = vmatprep.subr.mxu0 0.0
    %1249 = vmatpush1.xpose.msra.mxu0 0.0
    %1250 = vmatprep.subr.mxu0 0.0
    %1251 = vmatpush1.xpose.msra.mxu0 0.0
    %1252 = vmatprep.subr.mxu0 0.0
    %1253 = vmatpush1.xpose.msra.mxu0 0.0
    %1254 = vmatprep.subr.mxu0 0.0
    %1255 = vmatpush1.xpose.msra.mxu0 0.0
    %1256 = vmatprep.subr.mxu0 0.0
    %1257 = vmatpush1.xpose.msra.mxu0 0.0
    %1258 = vmatprep.subr.mxu0 0.0
    %1259 = vmatpush1.xpose.msra.mxu0 0.0
    %1260 = vmatprep.subr.mxu0 0.0
    %1261 = vmatpush1.xpose.msra.mxu0 0.0
    %1262 = vmatprep.subr.mxu0 0.0
    %1263 = vmatpush1.xpose.msra.mxu0 0.0
    %1264 = vmatprep.subr.mxu0 0.0
    %1265 = vmatpush1.xpose.msra.mxu0 0.0
    %1266 = vmatprep.subr.mxu0 0.0
    %1267 = vmatpush1.xpose.msra.mxu0 0.0
    %1268 = vmatprep.subr.mxu0 0.0
    %1269 = vmatpush1.xpose.msra.mxu0 0.0
    %1270 = vmatprep.subr.mxu0 0.0
    %1271 = vmatpush1.xpose.msra.mxu0 0.0
    %1272 = vmatprep.subr.mxu0 0.0
    %1273 = vmatpush1.xpose.msra.mxu0 0.0
    %1274 = vmatprep.subr.mxu0 0.0
    %1275 = vmatpush1.xpose.msra.mxu0 0.0
    %1276 = vmatprep.subr.mxu0 0.0
    %1277 = vmatpush1.xpose.msra.mxu0 0.0
    %1278 = vmatprep.subr.mxu0 0.0
    %1279 = vmatpush1.xpose.msra.mxu0 0.0
    %1280 = vmatprep.subr.mxu0 0.0
    %1281 = vmatpush1.xpose.msra.mxu0 0.0
    %1282 = vmatprep.subr.mxu0 0.0
    %1283 = vmatpush1.xpose.msra.mxu0 0.0
    %1284 = vmatprep.subr.mxu0 0.0
    %1285 = vmatpush1.xpose.msra.mxu0 0.0
    %1286 = vmatprep.subr.mxu0 0.0
    %1287 = vmatpush1.xpose.msra.mxu0 0.0
    %1288 = vmatprep.mubr.f32.mxu0 0.0
    %1289 = vmatmul.mubr.f32.gmra.mrb[0].mxu0 %v1220
    %v1290 = vpop.f32.mrb[0].mxu0
    %v1291 = vadd.f32 0.0, %v1290
    %v1292 = vpop.f32.mrb[0].mxu0
    %1293 = vdwg.mxu0
    %1294 = vrot.lane.b32.xlu0 %v206, 104
    %v1295 = vpop.permute.xlu0 %1294
    %1296 = vrot.lane.b32.xlu0 %v206, 72
    %v1297 = vpop.permute.xlu0 %1296
    %v1298 = vsel %vm218, %v1295, 0
    %v1300 = vsel %vm218, %v1297, 0
    %1302 = vmatprep.subr.mxu0 0.0
    %1303 = vmatpush1.xpose.msra.mxu0 %v1300
    %1304 = vmatprep.subr.mxu0 0.0
    %1305 = vmatpush1.xpose.msra.mxu0 0.0
    %1306 = vmatprep.subr.mxu0 0.0
    %1307 = vmatpush1.xpose.msra.mxu0 0.0
    %1308 = vmatprep.subr.mxu0 0.0
    %1309 = vmatpush1.xpose.msra.mxu0 0.0
    %1310 = vmatprep.subr.mxu0 0.0
    %1311 = vmatpush1.xpose.msra.mxu0 0.0
    %1312 = vmatprep.subr.mxu0 0.0
    %1313 = vmatpush1.xpose.msra.mxu0 0.0
    %1314 = vmatprep.subr.mxu0 0.0
    %1315 = vmatpush1.xpose.msra.mxu0 0.0
    %1316 = vmatprep.subr.mxu0 0.0
    %1317 = vmatpush1.xpose.msra.mxu0 0.0
    %1318 = vmatprep.subr.mxu0 0.0
    %1319 = vmatpush1.xpose.msra.mxu0 0.0
    %1320 = vmatprep.subr.mxu0 0.0
    %1321 = vmatpush1.xpose.msra.mxu0 0.0
    %1322 = vmatprep.subr.mxu0 0.0
    %1323 = vmatpush1.xpose.msra.mxu0 0.0
    %1324 = vmatprep.subr.mxu0 0.0
    %1325 = vmatpush1.xpose.msra.mxu0 0.0
    %1326 = vmatprep.subr.mxu0 0.0
    %1327 = vmatpush1.xpose.msra.mxu0 0.0
    %1328 = vmatprep.subr.mxu0 0.0
    %1329 = vmatpush1.xpose.msra.mxu0 0.0
    %1330 = vmatprep.subr.mxu0 0.0
    %1331 = vmatpush1.xpose.msra.mxu0 0.0
    %1332 = vmatprep.subr.mxu0 0.0
    %1333 = vmatpush1.xpose.msra.mxu0 0.0
    %1334 = vmatprep.subr.mxu0 0.0
    %1335 = vmatpush1.xpose.msra.mxu0 0.0
    %1336 = vmatprep.subr.mxu0 0.0
    %1337 = vmatpush1.xpose.msra.mxu0 0.0
    %1338 = vmatprep.subr.mxu0 0.0
    %1339 = vmatpush1.xpose.msra.mxu0 0.0
    %1340 = vmatprep.subr.mxu0 0.0
    %1341 = vmatpush1.xpose.msra.mxu0 0.0
    %1342 = vmatprep.subr.mxu0 0.0
    %1343 = vmatpush1.xpose.msra.mxu0 0.0
    %1344 = vmatprep.subr.mxu0 0.0
    %1345 = vmatpush1.xpose.msra.mxu0 0.0
    %1346 = vmatprep.subr.mxu0 0.0
    %1347 = vmatpush1.xpose.msra.mxu0 0.0
    %1348 = vmatprep.subr.mxu0 0.0
    %1349 = vmatpush1.xpose.msra.mxu0 0.0
    %1350 = vmatprep.subr.mxu0 0.0
    %1351 = vmatpush1.xpose.msra.mxu0 0.0
    %1352 = vmatprep.subr.mxu0 0.0
    %1353 = vmatpush1.xpose.msra.mxu0 0.0
    %1354 = vmatprep.subr.mxu0 0.0
    %1355 = vmatpush1.xpose.msra.mxu0 0.0
    %1356 = vmatprep.subr.mxu0 0.0
    %1357 = vmatpush1.xpose.msra.mxu0 0.0
    %1358 = vmatprep.subr.mxu0 0.0
    %1359 = vmatpush1.xpose.msra.mxu0 0.0
    %1360 = vmatprep.subr.mxu0 0.0
    %1361 = vmatpush1.xpose.msra.mxu0 0.0
    %1362 = vmatprep.subr.mxu0 0.0
    %1363 = vmatpush1.xpose.msra.mxu0 0.0
    %1364 = vmatprep.subr.mxu0 0.0
    %1365 = vmatpush1.xpose.msra.mxu0 0.0
    %1366 = vmatprep.mubr.f32.mxu0 0.0
    %1367 = vmatmul.mubr.f32.gmra.mrb[0].mxu0 %v1298
    %v1368 = vpop.f32.mrb[0].mxu0
    %v1369 = vadd.f32 0.0, %v1368
    %v1370 = vpop.f32.mrb[0].mxu0
    %1371 = vdwg.mxu0
    %v1372 = vmul.f32 %v1291, 0.35355338
    %v1373 = vmul.f32 %v1369, 0.35355338
    %v1374 = vadd.f32 %v1372, %v214
    %v1375 = vadd.f32 %v1373, %v214
    %v1376 = vsel %vm218, %v1374, -inf
    %1377 = vmax.xlane.f32.xlu0 %v1376
    %v1378 = vpop.xlane.xlu0 %1377
    %v1379 = vsel %vm218, %v1375, -inf
    %1380 = vmax.xlane.f32.xlu0 %v1379
    %v1381 = vpop.xlane.xlu0 %1380
    %v1382 = vsub.f32 %v1374, %v1378
    %v1383 = vsub.f32 %v1375, %v1381
    %v1384 = vmul.f32 %v1382, 1.442695
    %v1385 = vpow.pop %v1384
    %v1386 = vmul.f32 %v1383, 1.442695
    %v1387 = vpow.pop %v1386
    %v1388 = vsel %vm218, %v1385, 0.0
    %1389 = vadd.xlane.f32.xlu0 %v1388
    %v1390 = vpop.xlane.xlu0 %1389
    %v1391 = vsel %vm218, %v1387, 0.0
    %1392 = vadd.xlane.f32.xlu0 %v1391
    %v1393 = vpop.xlane.xlu0 %1392
    %v1394 = vrcp.pop %v1390
    %v1395 = vrcp.pop %v1393
    %v1396 = vmul.f32 %v1385, %v1394
    %v1397 = vmul.f32 %v1387, %v1395
    %1398 = vrot.lane.b32.xlu0 %v201, 40
    %v1399 = vpop.permute.xlu0 %1398
    %v1402 = vsel %vm218, %v1396, 0
    %1404 = vmatprep.subr.mxu0 0.0
    %1405 = vmatpush1.msra.mxu0 %v1399
    %1406 = vmatprep.subr.mxu0 0.0
    %1407 = vmatpush1.msra.mxu0 0.0
    %1408 = vmatprep.subr.mxu0 0.0
    %1409 = vmatpush1.msra.mxu0 0.0
    %1410 = vmatprep.subr.mxu0 0.0
    %1411 = vmatpush1.msra.mxu0 0.0
    %1412 = vmatprep.subr.mxu0 0.0
    %1413 = vmatpush1.msra.mxu0 0.0
    %1414 = vmatprep.subr.mxu0 0.0
    %1415 = vmatpush1.msra.mxu0 0.0
    %1416 = vmatprep.subr.mxu0 0.0
    %1417 = vmatpush1.msra.mxu0 0.0
    %1418 = vmatprep.subr.mxu0 0.0
    %1419 = vmatpush1.msra.mxu0 0.0
    %1420 = vmatprep.subr.mxu0 0.0
    %1421 = vmatpush1.msra.mxu0 0.0
    %1422 = vmatprep.subr.mxu0 0.0
    %1423 = vmatpush1.msra.mxu0 0.0
    %1424 = vmatprep.subr.mxu0 0.0
    %1425 = vmatpush1.msra.mxu0 0.0
    %1426 = vmatprep.subr.mxu0 0.0
    %1427 = vmatpush1.msra.mxu0 0.0
    %1428 = vmatprep.subr.mxu0 0.0
    %1429 = vmatpush1.msra.mxu0 0.0
    %1430 = vmatprep.subr.mxu0 0.0
    %1431 = vmatpush1.msra.mxu0 0.0
    %1432 = vmatprep.subr.mxu0 0.0
    %1433 = vmatpush1.msra.mxu0 0.0
    %1434 = vmatprep.subr.mxu0 0.0
    %1435 = vmatpush1.msra.mxu0 0.0
    %1436 = vmatprep.subr.mxu0 0.0
    %1437 = vmatpush1.msra.mxu0 0.0
    %1438 = vmatprep.subr.mxu0 0.0
    %1439 = vmatpush1.msra.mxu0 0.0
    %1440 = vmatprep.subr.mxu0 0.0
    %1441 = vmatpush1.msra.mxu0 0.0
    %1442 = vmatprep.subr.mxu0 0.0
    %1443 = vmatpush1.msra.mxu0 0.0
    %1444 = vmatprep.subr.mxu0 0.0
    %1445 = vmatpush1.msra.mxu0 0.0
    %1446 = vmatprep.subr.mxu0 0.0
    %1447 = vmatpush1.msra.mxu0 0.0
    %1448 = vmatprep.subr.mxu0 0.0
    %1449 = vmatpush1.msra.mxu0 0.0
    %1450 = vmatprep.subr.mxu0 0.0
    %1451 = vmatpush1.msra.mxu0 0.0
    %1452 = vmatprep.subr.mxu0 0.0
    %1453 = vmatpush1.msra.mxu0 0.0
    %1454 = vmatprep.subr.mxu0 0.0
    %1455 = vmatpush1.msra.mxu0 0.0
    %1456 = vmatprep.subr.mxu0 0.0
    %1457 = vmatpush1.msra.mxu0 0.0
    %1458 = vmatprep.subr.mxu0 0.0
    %1459 = vmatpush1.msra.mxu0 0.0
    %1460 = vmatprep.subr.mxu0 0.0
    %1461 = vmatpush1.msra.mxu0 0.0
    %1462 = vmatprep.subr.mxu0 0.0
    %1463 = vmatpush1.msra.mxu0 0.0
    %1464 = vmatprep.subr.mxu0 0.0
    %1465 = vmatpush1.msra.mxu0 0.0
    %1466 = vmatprep.subr.mxu0 0.0
    %1467 = vmatpush1.msra.mxu0 0.0
    %1468 = vmatprep.mubr.f32.mxu0 0.0
    %1469 = vmatmul.mubr.f32.gmra.mrb[0].mxu0 %v1402
    %v1470 = vpop.f32.mrb[0].mxu0
    %v1471 = vadd.f32 0.0, %v1470
    %v1472 = vpop.f32.mrb[0].mxu0
    %1473 = vdwg.mxu0
    %1474 = vrot.lane.b32.xlu0 %v206, 40
    %v1475 = vpop.permute.xlu0 %1474
    %v1478 = vsel %vm218, %v1397, 0
    %1480 = vmatprep.subr.mxu0 0.0
    %1481 = vmatpush1.msra.mxu0 %v1475
    %1482 = vmatprep.subr.mxu0 0.0
    %1483 = vmatpush1.msra.mxu0 0.0
    %1484 = vmatprep.subr.mxu0 0.0
    %1485 = vmatpush1.msra.mxu0 0.0
    %1486 = vmatprep.subr.mxu0 0.0
    %1487 = vmatpush1.msra.mxu0 0.0
    %1488 = vmatprep.subr.mxu0 0.0
    %1489 = vmatpush1.msra.mxu0 0.0
    %1490 = vmatprep.subr.mxu0 0.0
    %1491 = vmatpush1.msra.mxu0 0.0
    %1492 = vmatprep.subr.mxu0 0.0
    %1493 = vmatpush1.msra.mxu0 0.0
    %1494 = vmatprep.subr.mxu0 0.0
    %1495 = vmatpush1.msra.mxu0 0.0
    %1496 = vmatprep.subr.mxu0 0.0
    %1497 = vmatpush1.msra.mxu0 0.0
    %1498 = vmatprep.subr.mxu0 0.0
    %1499 = vmatpush1.msra.mxu0 0.0
    %1500 = vmatprep.subr.mxu0 0.0
    %1501 = vmatpush1.msra.mxu0 0.0
    %1502 = vmatprep.subr.mxu0 0.0
    %1503 = vmatpush1.msra.mxu0 0.0
    %1504 = vmatprep.subr.mxu0 0.0
    %1505 = vmatpush1.msra.mxu0 0.0
    %1506 = vmatprep.subr.mxu0 0.0
    %1507 = vmatpush1.msra.mxu0 0.0
    %1508 = vmatprep.subr.mxu0 0.0
    %1509 = vmatpush1.msra.mxu0 0.0
    %1510 = vmatprep.subr.mxu0 0.0
    %1511 = vmatpush1.msra.mxu0 0.0
    %1512 = vmatprep.subr.mxu0 0.0
    %1513 = vmatpush1.msra.mxu0 0.0
    %1514 = vmatprep.subr.mxu0 0.0
    %1515 = vmatpush1.msra.mxu0 0.0
    %1516 = vmatprep.subr.mxu0 0.0
    %1517 = vmatpush1.msra.mxu0 0.0
    %1518 = vmatprep.subr.mxu0 0.0
    %1519 = vmatpush1.msra.mxu0 0.0
    %1520 = vmatprep.subr.mxu0 0.0
    %1521 = vmatpush1.msra.mxu0 0.0
    %1522 = vmatprep.subr.mxu0 0.0
    %1523 = vmatpush1.msra.mxu0 0.0
    %1524 = vmatprep.subr.mxu0 0.0
    %1525 = vmatpush1.msra.mxu0 0.0
    %1526 = vmatprep.subr.mxu0 0.0
    %1527 = vmatpush1.msra.mxu0 0.0
    %1528 = vmatprep.subr.mxu0 0.0
    %1529 = vmatpush1.msra.mxu0 0.0
    %1530 = vmatprep.subr.mxu0 0.0
    %1531 = vmatpush1.msra.mxu0 0.0
    %1532 = vmatprep.subr.mxu0 0.0
    %1533 = vmatpush1.msra.mxu0 0.0
    %1534 = vmatprep.subr.mxu0 0.0
    %1535 = vmatpush1.msra.mxu0 0.0
    %1536 = vmatprep.subr.mxu0 0.0
    %1537 = vmatpush1.msra.mxu0 0.0
    %1538 = vmatprep.subr.mxu0 0.0
    %1539 = vmatpush1.msra.mxu0 0.0
    %1540 = vmatprep.subr.mxu0 0.0
    %1541 = vmatpush1.msra.mxu0 0.0
    %1542 = vmatprep.subr.mxu0 0.0
    %1543 = vmatpush1.msra.mxu0 0.0
    %1544 = vmatprep.mubr.f32.mxu0 0.0
    %1545 = vmatmul.mubr.f32.gmra.mrb[0].mxu0 %v1478
    %v1546 = vpop.f32.mrb[0].mxu0
    %v1547 = vadd.f32 0.0, %v1546
    %v1548 = vpop.f32.mrb[0].mxu0
    %1549 = vdwg.mxu0
    %1552 = vrot.lane.b32.xlu0 %v803, 8
    %v1553 = vpop.permute.xlu0 %1552
    %1554 = vrot.lane.b32.xlu0 %v879, 8
    %v1555 = vpop.permute.xlu0 %1554
    %1560 = vrot.lane.b32.xlu0 %v1137, 16
    %v1561 = vpop.permute.xlu0 %1560
    %1562 = vrot.lane.b32.xlu0 %v1213, 16
    %v1563 = vpop.permute.xlu0 %1562
    %1568 = vrot.lane.b32.xlu0 %v1471, 24
    %v1569 = vpop.permute.xlu0 %1568
    %1570 = vrot.lane.b32.xlu0 %v1547, 24
    %v1571 = vpop.permute.xlu0 %1570
    %v1574 = vsel %vm218, %v469, %v1553
    %v1575 = vsel %vm218, %v545, %v1555
    %vm1576 = vcmask 130048
    %v1577 = vsel %vm1576, %v1574, %v1561
    %v1578 = vsel %vm1576, %v1575, %v1563
    %vm1579 = vcmask 195584
    %v1580 = vsel %vm1579, %v1577, %v1569
    %v1581 = vsel %vm1579, %v1578, %v1571
    %v1582 = vlaneseq
    %v1583 = vshrl.u32 %v1582, 7
    %v1584 = vsub.s32 0, %v1583
    %v1585 = vrot.slane %v73, %v1584
    %v1587 = vsel %vm84, %v1580, 0
    %v1590 = vsel %vm84, %v1581, 0
    %1592 = vmatprep.subr.mxu0 0.0
    %1593 = vmatpush1.msra.mxu0 %v54
    %1594 = vmatprep.subr.mxu0 0.0
    %1595 = vmatpush1.msra.mxu0 %v55
    %1596 = vmatprep.subr.mxu0 0.0
    %1597 = vmatpush1.msra.mxu0 %v56
    %1598 = vmatprep.subr.mxu0 0.0
    %1599 = vmatpush1.msra.mxu0 %v57
    %1600 = vmatprep.subr.mxu0 0.0
    %1601 = vmatpush1.msra.mxu0 0.0
    %1602 = vmatprep.subr.mxu0 0.0
    %1603 = vmatpush1.msra.mxu0 0.0
    %1604 = vmatprep.subr.mxu0 0.0
    %1605 = vmatpush1.msra.mxu0 0.0
    %1606 = vmatprep.subr.mxu0 0.0
    %1607 = vmatpush1.msra.mxu0 0.0
    %1608 = vmatprep.subr.mxu0 0.0
    %1609 = vmatpush1.msra.mxu0 0.0
    %1610 = vmatprep.subr.mxu0 0.0
    %1611 = vmatpush1.msra.mxu0 0.0
    %1612 = vmatprep.subr.mxu0 0.0
    %1613 = vmatpush1.msra.mxu0 0.0
    %1614 = vmatprep.subr.mxu0 0.0
    %1615 = vmatpush1.msra.mxu0 0.0
    %1616 = vmatprep.subr.mxu0 0.0
    %1617 = vmatpush1.msra.mxu0 0.0
    %1618 = vmatprep.subr.mxu0 0.0
    %1619 = vmatpush1.msra.mxu0 0.0
    %1620 = vmatprep.subr.mxu0 0.0
    %1621 = vmatpush1.msra.mxu0 0.0
    %1622 = vmatprep.subr.mxu0 0.0
    %1623 = vmatpush1.msra.mxu0 0.0
    %1624 = vmatprep.subr.mxu0 0.0
    %1625 = vmatpush1.msra.mxu0 0.0
    %1626 = vmatprep.subr.mxu0 0.0
    %1627 = vmatpush1.msra.mxu0 0.0
    %1628 = vmatprep.subr.mxu0 0.0
    %1629 = vmatpush1.msra.mxu0 0.0
    %1630 = vmatprep.subr.mxu0 0.0
    %1631 = vmatpush1.msra.mxu0 0.0
    %1632 = vmatprep.subr.mxu0 0.0
    %1633 = vmatpush1.msra.mxu0 0.0
    %1634 = vmatprep.subr.mxu0 0.0
    %1635 = vmatpush1.msra.mxu0 0.0
    %1636 = vmatprep.subr.mxu0 0.0
    %1637 = vmatpush1.msra.mxu0 0.0
    %1638 = vmatprep.subr.mxu0 0.0
    %1639 = vmatpush1.msra.mxu0 0.0
    %1640 = vmatprep.subr.mxu0 0.0
    %1641 = vmatpush1.msra.mxu0 0.0
    %1642 = vmatprep.subr.mxu0 0.0
    %1643 = vmatpush1.msra.mxu0 0.0
    %1644 = vmatprep.subr.mxu0 0.0
    %1645 = vmatpush1.msra.mxu0 0.0
    %1646 = vmatprep.subr.mxu0 0.0
    %1647 = vmatpush1.msra.mxu0 0.0
    %1648 = vmatprep.subr.mxu0 0.0
    %1649 = vmatpush1.msra.mxu0 0.0
    %1650 = vmatprep.subr.mxu0 0.0
    %1651 = vmatpush1.msra.mxu0 0.0
    %1652 = vmatprep.subr.mxu0 0.0
    %1653 = vmatpush1.msra.mxu0 0.0
    %1654 = vmatprep.subr.mxu0 0.0
    %1655 = vmatpush1.msra.mxu0 0.0
    %1656 = vmatprep.mubr.f32.mxu0 0.0
    %1657 = vmatmul.mubr.f32.gmra.mrb[0].mxu0 %v1587
    %v1658 = vpop.f32.mrb[0].mxu0
    %v1659 = vadd.f32 %v1585, %v1658
    %v1660 = vpop.f32.mrb[0].mxu0
    %1661 = vmatprep.mubr.f32.mxu0 0.0
    %1662 = vmatmul.mubr.f32.gmra.mrb[0].mxu0 %v1590
    %v1663 = vpop.f32.mrb[0].mxu0
    %v1664 = vadd.f32 %v1585, %v1663
    %v1665 = vpop.f32.mrb[0].mxu0
    %1666 = vdwg.mxu0
    %v1667 = vadd.f32 %v1659, %v122
    %v1668 = vadd.f32 %v1664, %v123
    %v1669 = vld [vmem:[%s2 + $0x9] sm:$0x1]
    %v1670 = vld [vmem:[%s2 + $0xd] sm:$0x1]
    %v1671 = vsel %vm84, %v1667, 0.0
    %1672 = vadd.xlane.f32.xlu0 %v1671
    %v1673 = vpop.xlane.xlu0 %1672
    %v1674 = vsel %vm84, %v1668, 0.0
    %1675 = vadd.xlane.f32.xlu0 %v1674
    %v1676 = vpop.xlane.xlu0 %1675
    %v1677 = vmul.f32 %v1673, %v91
    %v1678 = vmul.f32 %v1676, %v91
    %v1679 = vsub.f32 %v1667, %v1677
    %v1680 = vsub.f32 %v1668, %v1678
    %v1681 = vmul.f32 %v1679, %v1679
    %v1682 = vmul.f32 %v1680, %v1680
    %v1683 = vsel %vm84, %v1681, 0.0
    %1684 = vadd.xlane.f32.xlu0 %v1683
    %v1685 = vpop.xlane.xlu0 %1684
    %v1686 = vsel %vm84, %v1682, 0.0
    %1687 = vadd.xlane.f32.xlu0 %v1686
    %v1688 = vpop.xlane.xlu0 %1687
    %v1689 = vmul.f32 %v1685, %v91
    %v1690 = vmul.f32 %v1688, %v91
    %v1691 = vadd.f32 %v1689, 1e-12
    %v1692 = vadd.f32 %v1690, 1e-12
    %v1693 = vrsqrt.pop %v1691
    %v1694 = vrsqrt.pop %v1692
    %v1695 = vmul.f32 %v1679, %v1693
    %v1696 = vmul.f32 %v1680, %v1694
    %v1697 = vlaneseq
    %v1698 = vshrl.u32 %v1697, 7
    %v1699 = vsub.s32 0, %v1698
    %v1700 = vrot.slane %v1669, %v1699
    %v1701 = vmul.f32 %v1695, %v1700
    %v1702 = vmul.f32 %v1696, %v1700
    %v1703 = vlaneseq
    %v1704 = vshrl.u32 %v1703, 7
    %v1705 = vsub.s32 0, %v1704
    %v1706 = vrot.slane %v1670, %v1705
    %v1707 = vadd.f32 %v1701, %v1706
    %v1708 = vadd.f32 %v1702, %v1706
    %v1709 = vld [vmem:[%s1] sm:$0xff]
    %v1710 = vld [vmem:[%s1 + $0x8] sm:$0xff]
    %v1711 = vld [vmem:[%s1 + $0x10] sm:$0xff]
    %v1712 = vld [vmem:[%s1 + $0x18] sm:$0xff]
    %v1713 = vlaneseq
    %v1714 = vshrl.u32 %v1713, 7
    %v1715 = vsub.s32 0, %v1714
    %v1716 = vrot.slane %v74, %v1715
    %v1718 = vsel %vm84, %v1707, 0
    %v1721 = vsel %vm84, %v1708, 0
    %1723 = vmatprep.subr.mxu0 0.0
    %1724 = vmatpush1.msra.mxu0 %v58
    %1725 = vmatprep.subr.mxu0 0.0
    %1726 = vmatpush1.msra.mxu0 %v59
    %1727 = vmatprep.subr.mxu0 0.0
    %1728 = vmatpush1.msra.mxu0 %v60
    %1729 = vmatprep.subr.mxu0 0.0
    %1730 = vmatpush1.msra.mxu0 %v61
    %1731 = vmatprep.subr.mxu0 0.0
    %1732 = vmatpush1.msra.mxu0 0.0
    %1733 = vmatprep.subr.mxu0 0.0
    %1734 = vmatpush1.msra.mxu0 0.0
    %1735 = vmatprep.subr.mxu0 0.0
    %1736 = vmatpush1.msra.mxu0 0.0
    %1737 = vmatprep.subr.mxu0 0.0
    %1738 = vmatpush1.msra.mxu0 0.0
    %1739 = vmatprep.subr.mxu0 0.0
    %1740 = vmatpush1.msra.mxu0 0.0
    %1741 = vmatprep.subr.mxu0 0.0
    %1742 = vmatpush1.msra.mxu0 0.0
    %1743 = vmatprep.subr.mxu0 0.0
    %1744 = vmatpush1.msra.mxu0 0.0
    %1745 = vmatprep.subr.mxu0 0.0
    %1746 = vmatpush1.msra.mxu0 0.0
    %1747 = vmatprep.subr.mxu0 0.0
    %1748 = vmatpush1.msra.mxu0 0.0
    %1749 = vmatprep.subr.mxu0 0.0
    %1750 = vmatpush1.msra.mxu0 0.0
    %1751 = vmatprep.subr.mxu0 0.0
    %1752 = vmatpush1.msra.mxu0 0.0
    %1753 = vmatprep.subr.mxu0 0.0
    %1754 = vmatpush1.msra.mxu0 0.0
    %1755 = vmatprep.subr.mxu0 0.0
    %1756 = vmatpush1.msra.mxu0 0.0
    %1757 = vmatprep.subr.mxu0 0.0
    %1758 = vmatpush1.msra.mxu0 0.0
    %1759 = vmatprep.subr.mxu0 0.0
    %1760 = vmatpush1.msra.mxu0 0.0
    %1761 = vmatprep.subr.mxu0 0.0
    %1762 = vmatpush1.msra.mxu0 0.0
    %1763 = vmatprep.subr.mxu0 0.0
    %1764 = vmatpush1.msra.mxu0 0.0
    %1765 = vmatprep.subr.mxu0 0.0
    %1766 = vmatpush1.msra.mxu0 0.0
    %1767 = vmatprep.subr.mxu0 0.0
    %1768 = vmatpush1.msra.mxu0 0.0
    %1769 = vmatprep.subr.mxu0 0.0
    %1770 = vmatpush1.msra.mxu0 0.0
    %1771 = vmatprep.subr.mxu0 0.0
    %1772 = vmatpush1.msra.mxu0 0.0
    %1773 = vmatprep.subr.mxu0 0.0
    %1774 = vmatpush1.msra.mxu0 0.0
    %1775 = vmatprep.subr.mxu0 0.0
    %1776 = vmatpush1.msra.mxu0 0.0
    %1777 = vmatprep.subr.mxu0 0.0
    %1778 = vmatpush1.msra.mxu0 0.0
    %1779 = vmatprep.subr.mxu0 0.0
    %1780 = vmatpush1.msra.mxu0 0.0
    %1781 = vmatprep.subr.mxu0 0.0
    %1782 = vmatpush1.msra.mxu0 0.0
    %1783 = vmatprep.subr.mxu0 0.0
    %1784 = vmatpush1.msra.mxu0 0.0
    %1785 = vmatprep.subr.mxu0 0.0
    %1786 = vmatpush1.msra.mxu0 0.0
    %1787 = vmatprep.mubr.f32.mxu0 0.0
    %1788 = vmatmul.mubr.f32.gmra.mrb[0].mxu0 %v1718
    %v1789 = vpop.f32.mrb[0].mxu0
    %v1790 = vadd.f32 %v1716, %v1789
    %v1791 = vpop.f32.mrb[0].mxu0
    %1792 = vmatprep.mubr.f32.mxu0 0.0
    %1793 = vmatmul.mubr.f32.gmra.mrb[0].mxu0 %v1721
    %v1794 = vpop.f32.mrb[0].mxu0
    %v1795 = vadd.f32 %v1716, %v1794
    %v1796 = vpop.f32.mrb[0].mxu0
    %1797 = vdwg.mxu0
    %v1798 = vlaneseq
    %v1799 = vshrl.u32 %v1798, 7
    %v1800 = vsub.s32 0, %v1799
    %v1801 = vrot.slane %v71, %v1800
    %v1803 = vsel %vm84, %v1709, 0
    %v1806 = vsel %vm84, %v1710, 0
    %v1809 = vsel %vm84, %v1711, 0
    %v1812 = vsel %vm84, %v1712, 0
    %1814 = vmatprep.subr.mxu0 0.0
    %1815 = vmatpush1.msra.mxu0 %v38
    %1816 = vmatprep.subr.mxu0 0.0
    %1817 = vmatpush1.msra.mxu0 %v39
    %1818 = vmatprep.subr.mxu0 0.0
    %1819 = vmatpush1.msra.mxu0 %v40
    %1820 = vmatprep.subr.mxu0 0.0
    %1821 = vmatpush1.msra.mxu0 %v41
    %1822 = vmatprep.subr.mxu0 0.0
    %1823 = vmatpush1.msra.mxu0 0.0
    %1824 = vmatprep.subr.mxu0 0.0
    %1825 = vmatpush1.msra.mxu0 0.0
    %1826 = vmatprep.subr.mxu0 0.0
    %1827 = vmatpush1.msra.mxu0 0.0
    %1828 = vmatprep.subr.mxu0 0.0
    %1829 = vmatpush1.msra.mxu0 0.0
    %1830 = vmatprep.subr.mxu0 0.0
    %1831 = vmatpush1.msra.mxu0 0.0
    %1832 = vmatprep.subr.mxu0 0.0
    %1833 = vmatpush1.msra.mxu0 0.0
    %1834 = vmatprep.subr.mxu0 0.0
    %1835 = vmatpush1.msra.mxu0 0.0
    %1836 = vmatprep.subr.mxu0 0.0
    %1837 = vmatpush1.msra.mxu0 0.0
    %1838 = vmatprep.subr.mxu0 0.0
    %1839 = vmatpush1.msra.mxu0 0.0
    %1840 = vmatprep.subr.mxu0 0.0
    %1841 = vmatpush1.msra.mxu0 0.0
    %1842 = vmatprep.subr.mxu0 0.0
    %1843 = vmatpush1.msra.mxu0 0.0
    %1844 = vmatprep.subr.mxu0 0.0
    %1845 = vmatpush1.msra.mxu0 0.0
    %1846 = vmatprep.subr.mxu0 0.0
    %1847 = vmatpush1.msra.mxu0 0.0
    %1848 = vmatprep.subr.mxu0 0.0
    %1849 = vmatpush1.msra.mxu0 0.0
    %1850 = vmatprep.subr.mxu0 0.0
    %1851 = vmatpush1.msra.mxu0 0.0
    %1852 = vmatprep.subr.mxu0 0.0
    %1853 = vmatpush1.msra.mxu0 0.0
    %1854 = vmatprep.subr.mxu0 0.0
    %1855 = vmatpush1.msra.mxu0 0.0
    %1856 = vmatprep.subr.mxu0 0.0
    %1857 = vmatpush1.msra.mxu0 0.0
    %1858 = vmatprep.subr.mxu0 0.0
    %1859 = vmatpush1.msra.mxu0 0.0
    %1860 = vmatprep.subr.mxu0 0.0
    %1861 = vmatpush1.msra.mxu0 0.0
    %1862 = vmatprep.subr.mxu0 0.0
    %1863 = vmatpush1.msra.mxu0 0.0
    %1864 = vmatprep.subr.mxu0 0.0
    %1865 = vmatpush1.msra.mxu0 0.0
    %1866 = vmatprep.subr.mxu0 0.0
    %1867 = vmatpush1.msra.mxu0 0.0
    %1868 = vmatprep.subr.mxu0 0.0
    %1869 = vmatpush1.msra.mxu0 0.0
    %1870 = vmatprep.subr.mxu0 0.0
    %1871 = vmatpush1.msra.mxu0 0.0
    %1872 = vmatprep.subr.mxu0 0.0
    %1873 = vmatpush1.msra.mxu0 0.0
    %1874 = vmatprep.subr.mxu0 0.0
    %1875 = vmatpush1.msra.mxu0 0.0
    %1876 = vmatprep.subr.mxu0 0.0
    %1877 = vmatpush1.msra.mxu0 0.0
    %1878 = vmatprep.mubr.f32.mxu0 0.0
    %1879 = vmatmul.mubr.f32.gmra.mrb[0].mxu0 %v1803
    %v1880 = vpop.f32.mrb[0].mxu0
    %v1881 = vadd.f32 %v1801, %v1880
    %v1882 = vpop.f32.mrb[0].mxu0
    %1883 = vmatprep.mubr.f32.mxu0 0.0
    %1884 = vmatmul.mubr.f32.gmra.mrb[0].mxu0 %v1806
    %v1885 = vpop.f32.mrb[0].mxu0
    %v1886 = vadd.f32 %v1801, %v1885
    %v1887 = vpop.f32.mrb[0].mxu0
    %1888 = vmatprep.mubr.f32.mxu0 0.0
    %1889 = vmatmul.mubr.f32.gmra.mrb[0].mxu0 %v1809
    %v1890 = vpop.f32.mrb[0].mxu0
    %v1891 = vadd.f32 %v1801, %v1890
    %v1892 = vpop.f32.mrb[0].mxu0
    %1893 = vmatprep.mubr.f32.mxu0 0.0
    %1894 = vmatmul.mubr.f32.gmra.mrb[0].mxu0 %v1812
    %v1895 = vpop.f32.mrb[0].mxu0
    %v1896 = vadd.f32 %v1801, %v1895
    %v1897 = vpop.f32.mrb[0].mxu0
    %1898 = vdwg.mxu0
    %v1900 = vsel %vm218, %v1790, 0
    %v1903 = vsel %vm218, %v1881, 0
    %v1906 = vsel %vm218, %v1886, 0
    %1908 = vmatprep.subr.mxu0 0.0
    %1909 = vmatpush1.xpose.msra.mxu0 %v1903
    %1910 = vmatprep.subr.mxu0 0.0
    %1911 = vmatpush1.xpose.msra.mxu0 %v1906
    %1912 = vmatprep.subr.mxu0 0.0
    %1913 = vmatpush1.xpose.msra.mxu0 0.0
    %1914 = vmatprep.subr.mxu0 0.0
    %1915 = vmatpush1.xpose.msra.mxu0 0.0
    %1916 = vmatprep.subr.mxu0 0.0
    %1917 = vmatpush1.xpose.msra.mxu0 0.0
    %1918 = vmatprep.subr.mxu0 0.0
    %1919 = vmatpush1.xpose.msra.mxu0 0.0
    %1920 = vmatprep.subr.mxu0 0.0
    %1921 = vmatpush1.xpose.msra.mxu0 0.0
    %1922 = vmatprep.subr.mxu0 0.0
    %1923 = vmatpush1.xpose.msra.mxu0 0.0
    %1924 = vmatprep.subr.mxu0 0.0
    %1925 = vmatpush1.xpose.msra.mxu0 0.0
    %1926 = vmatprep.subr.mxu0 0.0
    %1927 = vmatpush1.xpose.msra.mxu0 0.0
    %1928 = vmatprep.subr.mxu0 0.0
    %1929 = vmatpush1.xpose.msra.mxu0 0.0
    %1930 = vmatprep.subr.mxu0 0.0
    %1931 = vmatpush1.xpose.msra.mxu0 0.0
    %1932 = vmatprep.subr.mxu0 0.0
    %1933 = vmatpush1.xpose.msra.mxu0 0.0
    %1934 = vmatprep.subr.mxu0 0.0
    %1935 = vmatpush1.xpose.msra.mxu0 0.0
    %1936 = vmatprep.subr.mxu0 0.0
    %1937 = vmatpush1.xpose.msra.mxu0 0.0
    %1938 = vmatprep.subr.mxu0 0.0
    %1939 = vmatpush1.xpose.msra.mxu0 0.0
    %1940 = vmatprep.subr.mxu0 0.0
    %1941 = vmatpush1.xpose.msra.mxu0 0.0
    %1942 = vmatprep.subr.mxu0 0.0
    %1943 = vmatpush1.xpose.msra.mxu0 0.0
    %1944 = vmatprep.subr.mxu0 0.0
    %1945 = vmatpush1.xpose.msra.mxu0 0.0
    %1946 = vmatprep.subr.mxu0 0.0
    %1947 = vmatpush1.xpose.msra.mxu0 0.0
    %1948 = vmatprep.subr.mxu0 0.0
    %1949 = vmatpush1.xpose.msra.mxu0 0.0
    %1950 = vmatprep.subr.mxu0 0.0
    %1951 = vmatpush1.xpose.msra.mxu0 0.0
    %1952 = vmatprep.subr.mxu0 0.0
    %1953 = vmatpush1.xpose.msra.mxu0 0.0
    %1954 = vmatprep.subr.mxu0 0.0
    %1955 = vmatpush1.xpose.msra.mxu0 0.0
    %1956 = vmatprep.subr.mxu0 0.0
    %1957 = vmatpush1.xpose.msra.mxu0 0.0
    %1958 = vmatprep.subr.mxu0 0.0
    %1959 = vmatpush1.xpose.msra.mxu0 0.0
    %1960 = vmatprep.subr.mxu0 0.0
    %1961 = vmatpush1.xpose.msra.mxu0 0.0
    %1962 = vmatprep.subr.mxu0 0.0
    %1963 = vmatpush1.xpose.msra.mxu0 0.0
    %1964 = vmatprep.subr.mxu0 0.0
    %1965 = vmatpush1.xpose.msra.mxu0 0.0
    %1966 = vmatprep.subr.mxu0 0.0
    %1967 = vmatpush1.xpose.msra.mxu0 0.0
    %1968 = vmatprep.subr.mxu0 0.0
    %1969 = vmatpush1.xpose.msra.mxu0 0.0
    %1970 = vmatprep.subr.mxu0 0.0
    %1971 = vmatpush1.xpose.msra.mxu0 0.0
    %1972 = vmatprep.mubr.f32.mxu0 0.0
    %1973 = vmatmul.mubr.f32.gmra.mrb[0].mxu0 %v1900
    %v1974 = vpop.f32.mrb[0].mxu0
    %v1975 = vadd.f32 0.0, %v1974
    %v1976 = vpop.f32.mrb[0].mxu0
    %1977 = vdwg.mxu0
    %v1979 = vsel %vm218, %v1795, 0
    %v1982 = vsel %vm218, %v1891, 0
    %v1985 = vsel %vm218, %v1896, 0
    %1987 = vmatprep.subr.mxu0 0.0
    %1988 = vmatpush1.xpose.msra.mxu0 %v1982
    %1989 = vmatprep.subr.mxu0 0.0
    %1990 = vmatpush1.xpose.msra.mxu0 %v1985
    %1991 = vmatprep.subr.mxu0 0.0
    %1992 = vmatpush1.xpose.msra.mxu0 0.0
    %1993 = vmatprep.subr.mxu0 0.0
    %1994 = vmatpush1.xpose.msra.mxu0 0.0
    %1995 = vmatprep.subr.mxu0 0.0
    %1996 = vmatpush1.xpose.msra.mxu0 0.0
    %1997 = vmatprep.subr.mxu0 0.0
    %1998 = vmatpush1.xpose.msra.mxu0 0.0
    %1999 = vmatprep.subr.mxu0 0.0
    %2000 = vmatpush1.xpose.msra.mxu0 0.0
    %2001 = vmatprep.subr.mxu0 0.0
    %2002 = vmatpush1.xpose.msra.mxu0 0.0
    %2003 = vmatprep.subr.mxu0 0.0
    %2004 = vmatpush1.xpose.msra.mxu0 0.0
    %2005 = vmatprep.subr.mxu0 0.0
    %2006 = vmatpush1.xpose.msra.mxu0 0.0
    %2007 = vmatprep.subr.mxu0 0.0
    %2008 = vmatpush1.xpose.msra.mxu0 0.0
    %2009 = vmatprep.subr.mxu0 0.0
    %2010 = vmatpush1.xpose.msra.mxu0 0.0
    %2011 = vmatprep.subr.mxu0 0.0
    %2012 = vmatpush1.xpose.msra.mxu0 0.0
    %2013 = vmatprep.subr.mxu0 0.0
    %2014 = vmatpush1.xpose.msra.mxu0 0.0
    %2015 = vmatprep.subr.mxu0 0.0
    %2016 = vmatpush1.xpose.msra.mxu0 0.0
    %2017 = vmatprep.subr.mxu0 0.0
    %2018 = vmatpush1.xpose.msra.mxu0 0.0
    %2019 = vmatprep.subr.mxu0 0.0
    %2020 = vmatpush1.xpose.msra.mxu0 0.0
    %2021 = vmatprep.subr.mxu0 0.0
    %2022 = vmatpush1.xpose.msra.mxu0 0.0
    %2023 = vmatprep.subr.mxu0 0.0
    %2024 = vmatpush1.xpose.msra.mxu0 0.0
    %2025 = vmatprep.subr.mxu0 0.0
    %2026 = vmatpush1.xpose.msra.mxu0 0.0
    %2027 = vmatprep.subr.mxu0 0.0
    %2028 = vmatpush1.xpose.msra.mxu0 0.0
    %2029 = vmatprep.subr.mxu0 0.0
    %2030 = vmatpush1.xpose.msra.mxu0 0.0
    %2031 = vmatprep.subr.mxu0 0.0
    %2032 = vmatpush1.xpose.msra.mxu0 0.0
    %2033 = vmatprep.subr.mxu0 0.0
    %2034 = vmatpush1.xpose.msra.mxu0 0.0
    %2035 = vmatprep.subr.mxu0 0.0
    %2036 = vmatpush1.xpose.msra.mxu0 0.0
    %2037 = vmatprep.subr.mxu0 0.0
    %2038 = vmatpush1.xpose.msra.mxu0 0.0
    %2039 = vmatprep.subr.mxu0 0.0
    %2040 = vmatpush1.xpose.msra.mxu0 0.0
    %2041 = vmatprep.subr.mxu0 0.0
    %2042 = vmatpush1.xpose.msra.mxu0 0.0
    %2043 = vmatprep.subr.mxu0 0.0
    %2044 = vmatpush1.xpose.msra.mxu0 0.0
    %2045 = vmatprep.subr.mxu0 0.0
    %2046 = vmatpush1.xpose.msra.mxu0 0.0
    %2047 = vmatprep.subr.mxu0 0.0
    %2048 = vmatpush1.xpose.msra.mxu0 0.0
    %2049 = vmatprep.subr.mxu0 0.0
    %2050 = vmatpush1.xpose.msra.mxu0 0.0
    %2051 = vmatprep.mubr.f32.mxu0 0.0
    %2052 = vmatmul.mubr.f32.gmra.mrb[0].mxu0 %v1979
    %v2053 = vpop.f32.mrb[0].mxu0
    %v2054 = vadd.f32 0.0, %v2053
    %v2055 = vpop.f32.mrb[0].mxu0
    %2056 = vdwg.mxu0
    %v2057 = vmul.f32 %v1975, 0.35355338
    %v2058 = vmul.f32 %v2054, 0.35355338
    %v2059 = vsel %vm1576, %v2057, -inf
    %2060 = vmax.xlane.f32.xlu0 %v2059
    %v2061 = vpop.xlane.xlu0 %2060
    %v2062 = vsel %vm1576, %v2058, -inf
    %2063 = vmax.xlane.f32.xlu0 %v2062
    %v2064 = vpop.xlane.xlu0 %2063
    %v2065 = vsub.f32 %v2057, %v2061
    %v2066 = vsub.f32 %v2058, %v2064
    %v2067 = vmul.f32 %v2065, 1.442695
    %v2068 = vpow.pop %v2067
    %v2069 = vmul.f32 %v2066, 1.442695
    %v2070 = vpow.pop %v2069
    %v2071 = vsel %vm1576, %v2068, 0.0
    %2072 = vadd.xlane.f32.xlu0 %v2071
    %v2073 = vpop.xlane.xlu0 %2072
    %v2074 = vsel %vm1576, %v2070, 0.0
    %2075 = vadd.xlane.f32.xlu0 %v2074
    %v2076 = vpop.xlane.xlu0 %2075
    %v2077 = vrcp.pop %v2073
    %v2078 = vrcp.pop %v2076
    %v2079 = vmul.f32 %v2068, %v2077
    %v2080 = vmul.f32 %v2070, %v2078
    %2081 = vrot.lane.b32.xlu0 %v1881, 96
    %v2082 = vpop.permute.xlu0 %2081
    %2083 = vrot.lane.b32.xlu0 %v1886, 96
    %v2084 = vpop.permute.xlu0 %2083
    %v2088 = vsel %vm1576, %v2079, 0
    %2090 = vmatprep.subr.mxu0 0.0
    %2091 = vmatpush1.msra.mxu0 %v2082
    %2092 = vmatprep.subr.mxu0 0.0
    %2093 = vmatpush1.msra.mxu0 %v2084
    %2094 = vmatprep.subr.mxu0 0.0
    %2095 = vmatpush1.msra.mxu0 0.0
    %2096 = vmatprep.subr.mxu0 0.0
    %2097 = vmatpush1.msra.mxu0 0.0
    %2098 = vmatprep.subr.mxu0 0.0
    %2099 = vmatpush1.msra.mxu0 0.0
    %2100 = vmatprep.subr.mxu0 0.0
    %2101 = vmatpush1.msra.mxu0 0.0
    %2102 = vmatprep.subr.mxu0 0.0
    %2103 = vmatpush1.msra.mxu0 0.0
    %2104 = vmatprep.subr.mxu0 0.0
    %2105 = vmatpush1.msra.mxu0 0.0
    %2106 = vmatprep.subr.mxu0 0.0
    %2107 = vmatpush1.msra.mxu0 0.0
    %2108 = vmatprep.subr.mxu0 0.0
    %2109 = vmatpush1.msra.mxu0 0.0
    %2110 = vmatprep.subr.mxu0 0.0
    %2111 = vmatpush1.msra.mxu0 0.0
    %2112 = vmatprep.subr.mxu0 0.0
    %2113 = vmatpush1.msra.mxu0 0.0
    %2114 = vmatprep.subr.mxu0 0.0
    %2115 = vmatpush1.msra.mxu0 0.0
    %2116 = vmatprep.subr.mxu0 0.0
    %2117 = vmatpush1.msra.mxu0 0.0
    %2118 = vmatprep.subr.mxu0 0.0
    %2119 = vmatpush1.msra.mxu0 0.0
    %2120 = vmatprep.subr.mxu0 0.0
    %2121 = vmatpush1.msra.mxu0 0.0
    %2122 = vmatprep.subr.mxu0 0.0
    %2123 = vmatpush1.msra.mxu0 0.0
    %2124 = vmatprep.subr.mxu0 0.0
    %2125 = vmatpush1.msra.mxu0 0.0
    %2126 = vmatprep.subr.mxu0 0.0
    %2127 = vmatpush1.msra.mxu0 0.0
    %2128 = vmatprep.subr.mxu0 0.0
    %2129 = vmatpush1.msra.mxu0 0.0
    %2130 = vmatprep.subr.mxu0 0.0
    %2131 = vmatpush1.msra.mxu0 0.0
    %2132 = vmatprep.subr.mxu0 0.0
    %2133 = vmatpush1.msra.mxu0 0.0
    %2134 = vmatprep.subr.mxu0 0.0
    %2135 = vmatpush1.msra.mxu0 0.0
    %2136 = vmatprep.subr.mxu0 0.0
    %2137 = vmatpush1.msra.mxu0 0.0
    %2138 = vmatprep.subr.mxu0 0.0
    %2139 = vmatpush1.msra.mxu0 0.0
    %2140 = vmatprep.subr.mxu0 0.0
    %2141 = vmatpush1.msra.mxu0 0.0
    %2142 = vmatprep.subr.mxu0 0.0
    %2143 = vmatpush1.msra.mxu0 0.0
    %2144 = vmatprep.subr.mxu0 0.0
    %2145 = vmatpush1.msra.mxu0 0.0
    %2146 = vmatprep.subr.mxu0 0.0
    %2147 = vmatpush1.msra.mxu0 0.0
    %2148 = vmatprep.subr.mxu0 0.0
    %2149 = vmatpush1.msra.mxu0 0.0
    %2150 = vmatprep.subr.mxu0 0.0
    %2151 = vmatpush1.msra.mxu0 0.0
    %2152 = vmatprep.subr.mxu0 0.0
    %2153 = vmatpush1.msra.mxu0 0.0
    %2154 = vmatprep.mubr.f32.mxu0 0.0
    %2155 = vmatmul.mubr.f32.gmra.mrb[0].mxu0 %v2088
    %v2156 = vpop.f32.mrb[0].mxu0
    %v2157 = vadd.f32 0.0, %v2156
    %v2158 = vpop.f32.mrb[0].mxu0
    %2159 = vdwg.mxu0
    %2160 = vrot.lane.b32.xlu0 %v1891, 96
    %v2161 = vpop.permute.xlu0 %2160
    %2162 = vrot.lane.b32.xlu0 %v1896, 96
    %v2163 = vpop.permute.xlu0 %2162
    %v2167 = vsel %vm1576, %v2080, 0
    %2169 = vmatprep.subr.mxu0 0.0
    %2170 = vmatpush1.msra.mxu0 %v2161
    %2171 = vmatprep.subr.mxu0 0.0
    %2172 = vmatpush1.msra.mxu0 %v2163
    %2173 = vmatprep.subr.mxu0 0.0
    %2174 = vmatpush1.msra.mxu0 0.0
    %2175 = vmatprep.subr.mxu0 0.0
    %2176 = vmatpush1.msra.mxu0 0.0
    %2177 = vmatprep.subr.mxu0 0.0
    %2178 = vmatpush1.msra.mxu0 0.0
    %2179 = vmatprep.subr.mxu0 0.0
    %2180 = vmatpush1.msra.mxu0 0.0
    %2181 = vmatprep.subr.mxu0 0.0
    %2182 = vmatpush1.msra.mxu0 0.0
    %2183 = vmatprep.subr.mxu0 0.0
    %2184 = vmatpush1.msra.mxu0 0.0
    %2185 = vmatprep.subr.mxu0 0.0
    %2186 = vmatpush1.msra.mxu0 0.0
    %2187 = vmatprep.subr.mxu0 0.0
    %2188 = vmatpush1.msra.mxu0 0.0
    %2189 = vmatprep.subr.mxu0 0.0
    %2190 = vmatpush1.msra.mxu0 0.0
    %2191 = vmatprep.subr.mxu0 0.0
    %2192 = vmatpush1.msra.mxu0 0.0
    %2193 = vmatprep.subr.mxu0 0.0
    %2194 = vmatpush1.msra.mxu0 0.0
    %2195 = vmatprep.subr.mxu0 0.0
    %2196 = vmatpush1.msra.mxu0 0.0
    %2197 = vmatprep.subr.mxu0 0.0
    %2198 = vmatpush1.msra.mxu0 0.0
    %2199 = vmatprep.subr.mxu0 0.0
    %2200 = vmatpush1.msra.mxu0 0.0
    %2201 = vmatprep.subr.mxu0 0.0
    %2202 = vmatpush1.msra.mxu0 0.0
    %2203 = vmatprep.subr.mxu0 0.0
    %2204 = vmatpush1.msra.mxu0 0.0
    %2205 = vmatprep.subr.mxu0 0.0
    %2206 = vmatpush1.msra.mxu0 0.0
    %2207 = vmatprep.subr.mxu0 0.0
    %2208 = vmatpush1.msra.mxu0 0.0
    %2209 = vmatprep.subr.mxu0 0.0
    %2210 = vmatpush1.msra.mxu0 0.0
    %2211 = vmatprep.subr.mxu0 0.0
    %2212 = vmatpush1.msra.mxu0 0.0
    %2213 = vmatprep.subr.mxu0 0.0
    %2214 = vmatpush1.msra.mxu0 0.0
    %2215 = vmatprep.subr.mxu0 0.0
    %2216 = vmatpush1.msra.mxu0 0.0
    %2217 = vmatprep.subr.mxu0 0.0
    %2218 = vmatpush1.msra.mxu0 0.0
    %2219 = vmatprep.subr.mxu0 0.0
    %2220 = vmatpush1.msra.mxu0 0.0
    %2221 = vmatprep.subr.mxu0 0.0
    %2222 = vmatpush1.msra.mxu0 0.0
    %2223 = vmatprep.subr.mxu0 0.0
    %2224 = vmatpush1.msra.mxu0 0.0
    %2225 = vmatprep.subr.mxu0 0.0
    %2226 = vmatpush1.msra.mxu0 0.0
    %2227 = vmatprep.subr.mxu0 0.0
    %2228 = vmatpush1.msra.mxu0 0.0
    %2229 = vmatprep.subr.mxu0 0.0
    %2230 = vmatpush1.msra.mxu0 0.0
    %2231 = vmatprep.subr.mxu0 0.0
    %2232 = vmatpush1.msra.mxu0 0.0
    %2233 = vmatprep.mubr.f32.mxu0 0.0
    %2234 = vmatmul.mubr.f32.gmra.mrb[0].mxu0 %v2167
    %v2235 = vpop.f32.mrb[0].mxu0
    %v2236 = vadd.f32 0.0, %v2235
    %v2237 = vpop.f32.mrb[0].mxu0
    %2238 = vdwg.mxu0
    %2239 = vrot.lane.b32.xlu0 %v1790, 120
    %v2240 = vpop.permute.xlu0 %2239
    %2241 = vrot.lane.b32.xlu0 %v1881, 120
    %v2242 = vpop.permute.xlu0 %2241
    %2243 = vrot.lane.b32.xlu0 %v1886, 120
    %v2244 = vpop.permute.xlu0 %2243
    %v2245 = vsel %vm218, %v2240, 0
    %v2247 = vsel %vm218, %v2242, 0
    %v2249 = vsel %vm218, %v2244, 0
    %2251 = vmatprep.subr.mxu0 0.0
    %2252 = vmatpush1.xpose.msra.mxu0 %v2247
    %2253 = vmatprep.subr.mxu0 0.0
    %2254 = vmatpush1.xpose.msra.mxu0 %v2249
    %2255 = vmatprep.subr.mxu0 0.0
    %2256 = vmatpush1.xpose.msra.mxu0 0.0
    %2257 = vmatprep.subr.mxu0 0.0
    %2258 = vmatpush1.xpose.msra.mxu0 0.0
    %2259 = vmatprep.subr.mxu0 0.0
    %2260 = vmatpush1.xpose.msra.mxu0 0.0
    %2261 = vmatprep.subr.mxu0 0.0
    %2262 = vmatpush1.xpose.msra.mxu0 0.0
    %2263 = vmatprep.subr.mxu0 0.0
    %2264 = vmatpush1.xpose.msra.mxu0 0.0
    %2265 = vmatprep.subr.mxu0 0.0
    %2266 = vmatpush1.xpose.msra.mxu0 0.0
    %2267 = vmatprep.subr.mxu0 0.0
    %2268 = vmatpush1.xpose.msra.mxu0 0.0
    %2269 = vmatprep.subr.mxu0 0.0
    %2270 = vmatpush1.xpose.msra.mxu0 0.0
    %2271 = vmatprep.subr.mxu0 0.0
    %2272 = vmatpush1.xpose.msra.mxu0 0.0
    %2273 = vmatprep.subr.mxu0 0.0
    %2274 = vmatpush1.xpose.msra.mxu0 0.0
    %2275 = vmatprep.subr.mxu0 0.0
    %2276 = vmatpush1.xpose.msra.mxu0 0.0
    %2277 = vmatprep.subr.mxu0 0.0
    %2278 = vmatpush1.xpose.msra.mxu0 0.0
    %2279 = vmatprep.subr.mxu0 0.0
    %2280 = vmatpush1.xpose.msra.mxu0 0.0
    %2281 = vmatprep.subr.mxu0 0.0
    %2282 = vmatpush1.xpose.msra.mxu0 0.0
    %2283 = vmatprep.subr.mxu0 0.0
    %2284 = vmatpush1.xpose.msra.mxu0 0.0
    %2285 = vmatprep.subr.mxu0 0.0
    %2286 = vmatpush1.xpose.msra.mxu0 0.0
    %2287 = vmatprep.subr.mxu0 0.0
    %2288 = vmatpush1.xpose.msra.mxu0 0.0
    %2289 = vmatprep.subr.mxu0 0.0
    %2290 = vmatpush1.xpose.msra.mxu0 0.0
    %2291 = vmatprep.subr.mxu0 0.0
    %2292 = vmatpush1.xpose.msra.mxu0 0.0
    %2293 = vmatprep.subr.mxu0 0.0
    %2294 = vmatpush1.xpose.msra.mxu0 0.0
    %2295 = vmatprep.subr.mxu0 0.0
    %2296 = vmatpush1.xpose.msra.mxu0 0.0
    %2297 = vmatprep.subr.mxu0 0.0
    %2298 = vmatpush1.xpose.msra.mxu0 0.0
    %2299 = vmatprep.subr.mxu0 0.0
    %2300 = vmatpush1.xpose.msra.mxu0 0.0
    %2301 = vmatprep.subr.mxu0 0.0
    %2302 = vmatpush1.xpose.msra.mxu0 0.0
    %2303 = vmatprep.subr.mxu0 0.0
    %2304 = vmatpush1.xpose.msra.mxu0 0.0
    %2305 = vmatprep.subr.mxu0 0.0
    %2306 = vmatpush1.xpose.msra.mxu0 0.0
    %2307 = vmatprep.subr.mxu0 0.0
    %2308 = vmatpush1.xpose.msra.mxu0 0.0
    %2309 = vmatprep.subr.mxu0 0.0
    %2310 = vmatpush1.xpose.msra.mxu0 0.0
    %2311 = vmatprep.subr.mxu0 0.0
    %2312 = vmatpush1.xpose.msra.mxu0 0.0
    %2313 = vmatprep.subr.mxu0 0.0
    %2314 = vmatpush1.xpose.msra.mxu0 0.0
    %2315 = vmatprep.mubr.f32.mxu0 0.0
    %2316 = vmatmul.mubr.f32.gmra.mrb[0].mxu0 %v2245
    %v2317 = vpop.f32.mrb[0].mxu0
    %v2318 = vadd.f32 0.0, %v2317
    %v2319 = vpop.f32.mrb[0].mxu0
    %2320 = vdwg.mxu0
    %2321 = vrot.lane.b32.xlu0 %v1795, 120
    %v2322 = vpop.permute.xlu0 %2321
    %2323 = vrot.lane.b32.xlu0 %v1891, 120
    %v2324 = vpop.permute.xlu0 %2323
    %2325 = vrot.lane.b32.xlu0 %v1896, 120
    %v2326 = vpop.permute.xlu0 %2325
    %v2327 = vsel %vm218, %v2322, 0
    %v2329 = vsel %vm218, %v2324, 0
    %v2331 = vsel %vm218, %v2326, 0
    %2333 = vmatprep.subr.mxu0 0.0
    %2334 = vmatpush1.xpose.msra.mxu0 %v2329
    %2335 = vmatprep.subr.mxu0 0.0
    %2336 = vmatpush1.xpose.msra.mxu0 %v2331
    %2337 = vmatprep.subr.mxu0 0.0
    %2338 = vmatpush1.xpose.msra.mxu0 0.0
    %2339 = vmatprep.subr.mxu0 0.0
    %2340 = vmatpush1.xpose.msra.mxu0 0.0
    %2341 = vmatprep.subr.mxu0 0.0
    %2342 = vmatpush1.xpose.msra.mxu0 0.0
    %2343 = vmatprep.subr.mxu0 0.0
    %2344 = vmatpush1.xpose.msra.mxu0 0.0
    %2345 = vmatprep.subr.mxu0 0.0
    %2346 = vmatpush1.xpose.msra.mxu0 0.0
    %2347 = vmatprep.subr.mxu0 0.0
    %2348 = vmatpush1.xpose.msra.mxu0 0.0
    %2349 = vmatprep.subr.mxu0 0.0
    %2350 = vmatpush1.xpose.msra.mxu0 0.0
    %2351 = vmatprep.subr.mxu0 0.0
    %2352 = vmatpush1.xpose.msra.mxu0 0.0
    %2353 = vmatprep.subr.mxu0 0.0
    %2354 = vmatpush1.xpose.msra.mxu0 0.0
    %2355 = vmatprep.subr.mxu0 0.0
    %2356 = vmatpush1.xpose.msra.mxu0 0.0
    %2357 = vmatprep.subr.mxu0 0.0
    %2358 = vmatpush1.xpose.msra.mxu0 0.0
    %2359 = vmatprep.subr.mxu0 0.0
    %2360 = vmatpush1.xpose.msra.mxu0 0.0
    %2361 = vmatprep.subr.mxu0 0.0
    %2362 = vmatpush1.xpose.msra.mxu0 0.0
    %2363 = vmatprep.subr.mxu0 0.0
    %2364 = vmatpush1.xpose.msra.mxu0 0.0
    %2365 = vmatprep.subr.mxu0 0.0
    %2366 = vmatpush1.xpose.msra.mxu0 0.0
    %2367 = vmatprep.subr.mxu0 0.0
    %2368 = vmatpush1.xpose.msra.mxu0 0.0
    %2369 = vmatprep.subr.mxu0 0.0
    %2370 = vmatpush1.xpose.msra.mxu0 0.0
    %2371 = vmatprep.subr.mxu0 0.0
    %2372 = vmatpush1.xpose.msra.mxu0 0.0
    %2373 = vmatprep.subr.mxu0 0.0
    %2374 = vmatpush1.xpose.msra.mxu0 0.0
    %2375 = vmatprep.subr.mxu0 0.0
    %2376 = vmatpush1.xpose.msra.mxu0 0.0
    %2377 = vmatprep.subr.mxu0 0.0
    %2378 = vmatpush1.xpose.msra.mxu0 0.0
    %2379 = vmatprep.subr.mxu0 0.0
    %2380 = vmatpush1.xpose.msra.mxu0 0.0
    %2381 = vmatprep.subr.mxu0 0.0
    %2382 = vmatpush1.xpose.msra.mxu0 0.0
    %2383 = vmatprep.subr.mxu0 0.0
    %2384 = vmatpush1.xpose.msra.mxu0 0.0
    %2385 = vmatprep.subr.mxu0 0.0
    %2386 = vmatpush1.xpose.msra.mxu0 0.0
    %2387 = vmatprep.subr.mxu0 0.0
    %2388 = vmatpush1.xpose.msra.mxu0 0.0
    %2389 = vmatprep.subr.mxu0 0.0
    %2390 = vmatpush1.xpose.msra.mxu0 0.0
    %2391 = vmatprep.subr.mxu0 0.0
    %2392 = vmatpush1.xpose.msra.mxu0 0.0
    %2393 = vmatprep.subr.mxu0 0.0
    %2394 = vmatpush1.xpose.msra.mxu0 0.0
    %2395 = vmatprep.subr.mxu0 0.0
    %2396 = vmatpush1.xpose.msra.mxu0 0.0
    %2397 = vmatprep.mubr.f32.mxu0 0.0
    %2398 = vmatmul.mubr.f32.gmra.mrb[0].mxu0 %v2327
    %v2399 = vpop.f32.mrb[0].mxu0
    %v2400 = vadd.f32 0.0, %v2399
    %v2401 = vpop.f32.mrb[0].mxu0
    %2402 = vdwg.mxu0
    %v2403 = vmul.f32 %v2318, 0.35355338
    %v2404 = vmul.f32 %v2400, 0.35355338
    %v2405 = vsel %vm1576, %v2403, -inf
    %2406 = vmax.xlane.f32.xlu0 %v2405
    %v2407 = vpop.xlane.xlu0 %2406
    %v2408 = vsel %vm1576, %v2404, -inf
    %2409 = vmax.xlane.f32.xlu0 %v2408
    %v2410 = vpop.xlane.xlu0 %2409
    %v2411 = vsub.f32 %v2403, %v2407
    %v2412 = vsub.f32 %v2404, %v2410
    %v2413 = vmul.f32 %v2411, 1.442695
    %v2414 = vpow.pop %v2413
    %v2415 = vmul.f32 %v2412, 1.442695
    %v2416 = vpow.pop %v2415
    %v2417 = vsel %vm1576, %v2414, 0.0
    %2418 = vadd.xlane.f32.xlu0 %v2417
    %v2419 = vpop.xlane.xlu0 %2418
    %v2420 = vsel %vm1576, %v2416, 0.0
    %2421 = vadd.xlane.f32.xlu0 %v2420
    %v2422 = vpop.xlane.xlu0 %2421
    %v2423 = vrcp.pop %v2419
    %v2424 = vrcp.pop %v2422
    %v2425 = vmul.f32 %v2414, %v2423
    %v2426 = vmul.f32 %v2416, %v2424
    %2427 = vrot.lane.b32.xlu0 %v1881, 88
    %v2428 = vpop.permute.xlu0 %2427
    %2429 = vrot.lane.b32.xlu0 %v1886, 88
    %v2430 = vpop.permute.xlu0 %2429
    %v2434 = vsel %vm1576, %v2425, 0
    %2436 = vmatprep.subr.mxu0 0.0
    %2437 = vmatpush1.msra.mxu0 %v2428
    %2438 = vmatprep.subr.mxu0 0.0
    %2439 = vmatpush1.msra.mxu0 %v2430
    %2440 = vmatprep.subr.mxu0 0.0
    %2441 = vmatpush1.msra.mxu0 0.0
    %2442 = vmatprep.subr.mxu0 0.0
    %2443 = vmatpush1.msra.mxu0 0.0
    %2444 = vmatprep.subr.mxu0 0.0
    %2445 = vmatpush1.msra.mxu0 0.0
    %2446 = vmatprep.subr.mxu0 0.0
    %2447 = vmatpush1.msra.mxu0 0.0
    %2448 = vmatprep.subr.mxu0 0.0
    %2449 = vmatpush1.msra.mxu0 0.0
    %2450 = vmatprep.subr.mxu0 0.0
    %2451 = vmatpush1.msra.mxu0 0.0
    %2452 = vmatprep.subr.mxu0 0.0
    %2453 = vmatpush1.msra.mxu0 0.0
    %2454 = vmatprep.subr.mxu0 0.0
    %2455 = vmatpush1.msra.mxu0 0.0
    %2456 = vmatprep.subr.mxu0 0.0
    %2457 = vmatpush1.msra.mxu0 0.0
    %2458 = vmatprep.subr.mxu0 0.0
    %2459 = vmatpush1.msra.mxu0 0.0
    %2460 = vmatprep.subr.mxu0 0.0
    %2461 = vmatpush1.msra.mxu0 0.0
    %2462 = vmatprep.subr.mxu0 0.0
    %2463 = vmatpush1.msra.mxu0 0.0
    %2464 = vmatprep.subr.mxu0 0.0
    %2465 = vmatpush1.msra.mxu0 0.0
    %2466 = vmatprep.subr.mxu0 0.0
    %2467 = vmatpush1.msra.mxu0 0.0
    %2468 = vmatprep.subr.mxu0 0.0
    %2469 = vmatpush1.msra.mxu0 0.0
    %2470 = vmatprep.subr.mxu0 0.0
    %2471 = vmatpush1.msra.mxu0 0.0
    %2472 = vmatprep.subr.mxu0 0.0
    %2473 = vmatpush1.msra.mxu0 0.0
    %2474 = vmatprep.subr.mxu0 0.0
    %2475 = vmatpush1.msra.mxu0 0.0
    %2476 = vmatprep.subr.mxu0 0.0
    %2477 = vmatpush1.msra.mxu0 0.0
    %2478 = vmatprep.subr.mxu0 0.0
    %2479 = vmatpush1.msra.mxu0 0.0
    %2480 = vmatprep.subr.mxu0 0.0
    %2481 = vmatpush1.msra.mxu0 0.0
    %2482 = vmatprep.subr.mxu0 0.0
    %2483 = vmatpush1.msra.mxu0 0.0
    %2484 = vmatprep.subr.mxu0 0.0
    %2485 = vmatpush1.msra.mxu0 0.0
    %2486 = vmatprep.subr.mxu0 0.0
    %2487 = vmatpush1.msra.mxu0 0.0
    %2488 = vmatprep.subr.mxu0 0.0
    %2489 = vmatpush1.msra.mxu0 0.0
    %2490 = vmatprep.subr.mxu0 0.0
    %2491 = vmatpush1.msra.mxu0 0.0
    %2492 = vmatprep.subr.mxu0 0.0
    %2493 = vmatpush1.msra.mxu0 0.0
    %2494 = vmatprep.subr.mxu0 0.0
    %2495 = vmatpush1.msra.mxu0 0.0
    %2496 = vmatprep.subr.mxu0 0.0
    %2497 = vmatpush1.msra.mxu0 0.0
    %2498 = vmatprep.subr.mxu0 0.0
    %2499 = vmatpush1.msra.mxu0 0.0
    %2500 = vmatprep.mubr.f32.mxu0 0.0
    %2501 = vmatmul.mubr.f32.gmra.mrb[0].mxu0 %v2434
    %v2502 = vpop.f32.mrb[0].mxu0
    %v2503 = vadd.f32 0.0, %v2502
    %v2504 = vpop.f32.mrb[0].mxu0
    %2505 = vdwg.mxu0
    %2506 = vrot.lane.b32.xlu0 %v1891, 88
    %v2507 = vpop.permute.xlu0 %2506
    %2508 = vrot.lane.b32.xlu0 %v1896, 88
    %v2509 = vpop.permute.xlu0 %2508
    %v2513 = vsel %vm1576, %v2426, 0
    %2515 = vmatprep.subr.mxu0 0.0
    %2516 = vmatpush1.msra.mxu0 %v2507
    %2517 = vmatprep.subr.mxu0 0.0
    %2518 = vmatpush1.msra.mxu0 %v2509
    %2519 = vmatprep.subr.mxu0 0.0
    %2520 = vmatpush1.msra.mxu0 0.0
    %2521 = vmatprep.subr.mxu0 0.0
    %2522 = vmatpush1.msra.mxu0 0.0
    %2523 = vmatprep.subr.mxu0 0.0
    %2524 = vmatpush1.msra.mxu0 0.0
    %2525 = vmatprep.subr.mxu0 0.0
    %2526 = vmatpush1.msra.mxu0 0.0
    %2527 = vmatprep.subr.mxu0 0.0
    %2528 = vmatpush1.msra.mxu0 0.0
    %2529 = vmatprep.subr.mxu0 0.0
    %2530 = vmatpush1.msra.mxu0 0.0
    %2531 = vmatprep.subr.mxu0 0.0
    %2532 = vmatpush1.msra.mxu0 0.0
    %2533 = vmatprep.subr.mxu0 0.0
    %2534 = vmatpush1.msra.mxu0 0.0
    %2535 = vmatprep.subr.mxu0 0.0
    %2536 = vmatpush1.msra.mxu0 0.0
    %2537 = vmatprep.subr.mxu0 0.0
    %2538 = vmatpush1.msra.mxu0 0.0
    %2539 = vmatprep.subr.mxu0 0.0
    %2540 = vmatpush1.msra.mxu0 0.0
    %2541 = vmatprep.subr.mxu0 0.0
    %2542 = vmatpush1.msra.mxu0 0.0
    %2543 = vmatprep.subr.mxu0 0.0
    %2544 = vmatpush1.msra.mxu0 0.0
    %2545 = vmatprep.subr.mxu0 0.0
    %2546 = vmatpush1.msra.mxu0 0.0
    %2547 = vmatprep.subr.mxu0 0.0
    %2548 = vmatpush1.msra.mxu0 0.0
    %2549 = vmatprep.subr.mxu0 0.0
    %2550 = vmatpush1.msra.mxu0 0.0
    %2551 = vmatprep.subr.mxu0 0.0
    %2552 = vmatpush1.msra.mxu0 0.0
    %2553 = vmatprep.subr.mxu0 0.0
    %2554 = vmatpush1.msra.mxu0 0.0
    %2555 = vmatprep.subr.mxu0 0.0
    %2556 = vmatpush1.msra.mxu0 0.0
    %2557 = vmatprep.subr.mxu0 0.0
    %2558 = vmatpush1.msra.mxu0 0.0
    %2559 = vmatprep.subr.mxu0 0.0
    %2560 = vmatpush1.msra.mxu0 0.0
    %2561 = vmatprep.subr.mxu0 0.0
    %2562 = vmatpush1.msra.mxu0 0.0
    %2563 = vmatprep.subr.mxu0 0.0
    %2564 = vmatpush1.msra.mxu0 0.0
    %2565 = vmatprep.subr.mxu0 0.0
    %2566 = vmatpush1.msra.mxu0 0.0
    %2567 = vmatprep.subr.mxu0 0.0
    %2568 = vmatpush1.msra.mxu0 0.0
    %2569 = vmatprep.subr.mxu0 0.0
    %2570 = vmatpush1.msra.mxu0 0.0
    %2571 = vmatprep.subr.mxu0 0.0
    %2572 = vmatpush1.msra.mxu0 0.0
    %2573 = vmatprep.subr.mxu0 0.0
    %2574 = vmatpush1.msra.mxu0 0.0
    %2575 = vmatprep.subr.mxu0 0.0
    %2576 = vmatpush1.msra.mxu0 0.0
    %2577 = vmatprep.subr.mxu0 0.0
    %2578 = vmatpush1.msra.mxu0 0.0
    %2579 = vmatprep.mubr.f32.mxu0 0.0
    %2580 = vmatmul.mubr.f32.gmra.mrb[0].mxu0 %v2513
    %v2581 = vpop.f32.mrb[0].mxu0
    %v2582 = vadd.f32 0.0, %v2581
    %v2583 = vpop.f32.mrb[0].mxu0
    %2584 = vdwg.mxu0
    %2585 = vrot.lane.b32.xlu0 %v1790, 112
    %v2586 = vpop.permute.xlu0 %2585
    %2587 = vrot.lane.b32.xlu0 %v1881, 112
    %v2588 = vpop.permute.xlu0 %2587
    %2589 = vrot.lane.b32.xlu0 %v1886, 112
    %v2590 = vpop.permute.xlu0 %2589
    %v2591 = vsel %vm218, %v2586, 0
    %v2593 = vsel %vm218, %v2588, 0
    %v2595 = vsel %vm218, %v2590, 0
    %2597 = vmatprep.subr.mxu0 0.0
    %2598 = vmatpush1.xpose.msra.mxu0 %v2593
    %2599 = vmatprep.subr.mxu0 0.0
    %2600 = vmatpush1.xpose.msra.mxu0 %v2595
    %2601 = vmatprep.subr.mxu0 0.0
    %2602 = vmatpush1.xpose.msra.mxu0 0.0
    %2603 = vmatprep.subr.mxu0 0.0
    %2604 = vmatpush1.xpose.msra.mxu0 0.0
    %2605 = vmatprep.subr.mxu0 0.0
    %2606 = vmatpush1.xpose.msra.mxu0 0.0
    %2607 = vmatprep.subr.mxu0 0.0
    %2608 = vmatpush1.xpose.msra.mxu0 0.0
    %2609 = vmatprep.subr.mxu0 0.0
    %2610 = vmatpush1.xpose.msra.mxu0 0.0
    %2611 = vmatprep.subr.mxu0 0.0
    %2612 = vmatpush1.xpose.msra.mxu0 0.0
    %2613 = vmatprep.subr.mxu0 0.0
    %2614 = vmatpush1.xpose.msra.mxu0 0.0
    %2615 = vmatprep.subr.mxu0 0.0
    %2616 = vmatpush1.xpose.msra.mxu0 0.0
    %2617 = vmatprep.subr.mxu0 0.0
    %2618 = vmatpush1.xpose.msra.mxu0 0.0
    %2619 = vmatprep.subr.mxu0 0.0
    %2620 = vmatpush1.xpose.msra.mxu0 0.0
    %2621 = vmatprep.subr.mxu0 0.0
    %2622 = vmatpush1.xpose.msra.mxu0 0.0
    %2623 = vmatprep.subr.mxu0 0.0
    %2624 = vmatpush1.xpose.msra.mxu0 0.0
    %2625 = vmatprep.subr.mxu0 0.0
    %2626 = vmatpush1.xpose.msra.mxu0 0.0
    %2627 = vmatprep.subr.mxu0 0.0
    %2628 = vmatpush1.xpose.msra.mxu0 0.0
    %2629 = vmatprep.subr.mxu0 0.0
    %2630 = vmatpush1.xpose.msra.mxu0 0.0
    %2631 = vmatprep.subr.mxu0 0.0
    %2632 = vmatpush1.xpose.msra.mxu0 0.0
    %2633 = vmatprep.subr.mxu0 0.0
    %2634 = vmatpush1.xpose.msra.mxu0 0.0
    %2635 = vmatprep.subr.mxu0 0.0
    %2636 = vmatpush1.xpose.msra.mxu0 0.0
    %2637 = vmatprep.subr.mxu0 0.0
    %2638 = vmatpush1.xpose.msra.mxu0 0.0
    %2639 = vmatprep.subr.mxu0 0.0
    %2640 = vmatpush1.xpose.msra.mxu0 0.0
    %2641 = vmatprep.subr.mxu0 0.0
    %2642 = vmatpush1.xpose.msra.mxu0 0.0
    %2643 = vmatprep.subr.mxu0 0.0
    %2644 = vmatpush1.xpose.msra.mxu0 0.0
    %2645 = vmatprep.subr.mxu0 0.0
    %2646 = vmatpush1.xpose.msra.mxu0 0.0
    %2647 = vmatprep.subr.mxu0 0.0
    %2648 = vmatpush1.xpose.msra.mxu0 0.0
    %2649 = vmatprep.subr.mxu0 0.0
    %2650 = vmatpush1.xpose.msra.mxu0 0.0
    %2651 = vmatprep.subr.mxu0 0.0
    %2652 = vmatpush1.xpose.msra.mxu0 0.0
    %2653 = vmatprep.subr.mxu0 0.0
    %2654 = vmatpush1.xpose.msra.mxu0 0.0
    %2655 = vmatprep.subr.mxu0 0.0
    %2656 = vmatpush1.xpose.msra.mxu0 0.0
    %2657 = vmatprep.subr.mxu0 0.0
    %2658 = vmatpush1.xpose.msra.mxu0 0.0
    %2659 = vmatprep.subr.mxu0 0.0
    %2660 = vmatpush1.xpose.msra.mxu0 0.0
    %2661 = vmatprep.mubr.f32.mxu0 0.0
    %2662 = vmatmul.mubr.f32.gmra.mrb[0].mxu0 %v2591
    %v2663 = vpop.f32.mrb[0].mxu0
    %v2664 = vadd.f32 0.0, %v2663
    %v2665 = vpop.f32.mrb[0].mxu0
    %2666 = vdwg.mxu0
    %2667 = vrot.lane.b32.xlu0 %v1795, 112
    %v2668 = vpop.permute.xlu0 %2667
    %2669 = vrot.lane.b32.xlu0 %v1891, 112
    %v2670 = vpop.permute.xlu0 %2669
    %2671 = vrot.lane.b32.xlu0 %v1896, 112
    %v2672 = vpop.permute.xlu0 %2671
    %v2673 = vsel %vm218, %v2668, 0
    %v2675 = vsel %vm218, %v2670, 0
    %v2677 = vsel %vm218, %v2672, 0
    %2679 = vmatprep.subr.mxu0 0.0
    %2680 = vmatpush1.xpose.msra.mxu0 %v2675
    %2681 = vmatprep.subr.mxu0 0.0
    %2682 = vmatpush1.xpose.msra.mxu0 %v2677
    %2683 = vmatprep.subr.mxu0 0.0
    %2684 = vmatpush1.xpose.msra.mxu0 0.0
    %2685 = vmatprep.subr.mxu0 0.0
    %2686 = vmatpush1.xpose.msra.mxu0 0.0
    %2687 = vmatprep.subr.mxu0 0.0
    %2688 = vmatpush1.xpose.msra.mxu0 0.0
    %2689 = vmatprep.subr.mxu0 0.0
    %2690 = vmatpush1.xpose.msra.mxu0 0.0
    %2691 = vmatprep.subr.mxu0 0.0
    %2692 = vmatpush1.xpose.msra.mxu0 0.0
    %2693 = vmatprep.subr.mxu0 0.0
    %2694 = vmatpush1.xpose.msra.mxu0 0.0
    %2695 = vmatprep.subr.mxu0 0.0
    %2696 = vmatpush1.xpose.msra.mxu0 0.0
    %2697 = vmatprep.subr.mxu0 0.0
    %2698 = vmatpush1.xpose.msra.mxu0 0.0
    %2699 = vmatprep.subr.mxu0 0.0
    %2700 = vmatpush1.xpose.msra.mxu0 0.0
    %2701 = vmatprep.subr.mxu0 0.0
    %2702 = vmatpush1.xpose.msra.mxu0 0.0
    %2703 = vmatprep.subr.mxu0 0.0
    %2704 = vmatpush1.xpose.msra.mxu0 0.0
    %2705 = vmatprep.subr.mxu0 0.0
    %2706 = vmatpush1.xpose.msra.mxu0 0.0
    %2707 = vmatprep.subr.mxu0 0.0
    %2708 = vmatpush1.xpose.msra.mxu0 0.0
    %2709 = vmatprep.subr.mxu0 0.0
    %2710 = vmatpush1.xpose.msra.mxu0 0.0
    %2711 = vmatprep.subr.mxu0 0.0
    %2712 = vmatpush1.xpose.msra.mxu0 0.0
    %2713 = vmatprep.subr.mxu0 0.0
    %2714 = vmatpush1.xpose.msra.mxu0 0.0
    %2715 = vmatprep.subr.mxu0 0.0
    %2716 = vmatpush1.xpose.msra.mxu0 0.0
    %2717 = vmatprep.subr.mxu0 0.0
    %2718 = vmatpush1.xpose.msra.mxu0 0.0
    %2719 = vmatprep.subr.mxu0 0.0
    %2720 = vmatpush1.xpose.msra.mxu0 0.0
    %2721 = vmatprep.subr.mxu0 0.0
    %2722 = vmatpush1.xpose.msra.mxu0 0.0
    %2723 = vmatprep.subr.mxu0 0.0
    %2724 = vmatpush1.xpose.msra.mxu0 0.0
    %2725 = vmatprep.subr.mxu0 0.0
    %2726 = vmatpush1.xpose.msra.mxu0 0.0
    %2727 = vmatprep.subr.mxu0 0.0
    %2728 = vmatpush1.xpose.msra.mxu0 0.0
    %2729 = vmatprep.subr.mxu0 0.0
    %2730 = vmatpush1.xpose.msra.mxu0 0.0
    %2731 = vmatprep.subr.mxu0 0.0
    %2732 = vmatpush1.xpose.msra.mxu0 0.0
    %2733 = vmatprep.subr.mxu0 0.0
    %2734 = vmatpush1.xpose.msra.mxu0 0.0
    %2735 = vmatprep.subr.mxu0 0.0
    %2736 = vmatpush1.xpose.msra.mxu0 0.0
    %2737 = vmatprep.subr.mxu0 0.0
    %2738 = vmatpush1.xpose.msra.mxu0 0.0
    %2739 = vmatprep.subr.mxu0 0.0
    %2740 = vmatpush1.xpose.msra.mxu0 0.0
    %2741 = vmatprep.subr.mxu0 0.0
    %2742 = vmatpush1.xpose.msra.mxu0 0.0
    %2743 = vmatprep.mubr.f32.mxu0 0.0
    %2744 = vmatmul.mubr.f32.gmra.mrb[0].mxu0 %v2673
    %v2745 = vpop.f32.mrb[0].mxu0
    %v2746 = vadd.f32 0.0, %v2745
    %v2747 = vpop.f32.mrb[0].mxu0
    %2748 = vdwg.mxu0
    %v2749 = vmul.f32 %v2664, 0.35355338
    %v2750 = vmul.f32 %v2746, 0.35355338
    %v2751 = vsel %vm1576, %v2749, -inf
    %2752 = vmax.xlane.f32.xlu0 %v2751
    %v2753 = vpop.xlane.xlu0 %2752
    %v2754 = vsel %vm1576, %v2750, -inf
    %2755 = vmax.xlane.f32.xlu0 %v2754
    %v2756 = vpop.xlane.xlu0 %2755
    %v2757 = vsub.f32 %v2749, %v2753
    %v2758 = vsub.f32 %v2750, %v2756
    %v2759 = vmul.f32 %v2757, 1.442695
    %v2760 = vpow.pop %v2759
    %v2761 = vmul.f32 %v2758, 1.442695
    %v2762 = vpow.pop %v2761
    %v2763 = vsel %vm1576, %v2760, 0.0
    %2764 = vadd.xlane.f32.xlu0 %v2763
    %v2765 = vpop.xlane.xlu0 %2764
    %v2766 = vsel %vm1576, %v2762, 0.0
    %2767 = vadd.xlane.f32.xlu0 %v2766
    %v2768 = vpop.xlane.xlu0 %2767
    %v2769 = vrcp.pop %v2765
    %v2770 = vrcp.pop %v2768
    %v2771 = vmul.f32 %v2760, %v2769
    %v2772 = vmul.f32 %v2762, %v2770
    %2773 = vrot.lane.b32.xlu0 %v1881, 80
    %v2774 = vpop.permute.xlu0 %2773
    %2775 = vrot.lane.b32.xlu0 %v1886, 80
    %v2776 = vpop.permute.xlu0 %2775
    %v2780 = vsel %vm1576, %v2771, 0
    %2782 = vmatprep.subr.mxu0 0.0
    %2783 = vmatpush1.msra.mxu0 %v2774
    %2784 = vmatprep.subr.mxu0 0.0
    %2785 = vmatpush1.msra.mxu0 %v2776
    %2786 = vmatprep.subr.mxu0 0.0
    %2787 = vmatpush1.msra.mxu0 0.0
    %2788 = vmatprep.subr.mxu0 0.0
    %2789 = vmatpush1.msra.mxu0 0.0
    %2790 = vmatprep.subr.mxu0 0.0
    %2791 = vmatpush1.msra.mxu0 0.0
    %2792 = vmatprep.subr.mxu0 0.0
    %2793 = vmatpush1.msra.mxu0 0.0
    %2794 = vmatprep.subr.mxu0 0.0
    %2795 = vmatpush1.msra.mxu0 0.0
    %2796 = vmatprep.subr.mxu0 0.0
    %2797 = vmatpush1.msra.mxu0 0.0
    %2798 = vmatprep.subr.mxu0 0.0
    %2799 = vmatpush1.msra.mxu0 0.0
    %2800 = vmatprep.subr.mxu0 0.0
    %2801 = vmatpush1.msra.mxu0 0.0
    %2802 = vmatprep.subr.mxu0 0.0
    %2803 = vmatpush1.msra.mxu0 0.0
    %2804 = vmatprep.subr.mxu0 0.0
    %2805 = vmatpush1.msra.mxu0 0.0
    %2806 = vmatprep.subr.mxu0 0.0
    %2807 = vmatpush1.msra.mxu0 0.0
    %2808 = vmatprep.subr.mxu0 0.0
    %2809 = vmatpush1.msra.mxu0 0.0
    %2810 = vmatprep.subr.mxu0 0.0
    %2811 = vmatpush1.msra.mxu0 0.0
    %2812 = vmatprep.subr.mxu0 0.0
    %2813 = vmatpush1.msra.mxu0 0.0
    %2814 = vmatprep.subr.mxu0 0.0
    %2815 = vmatpush1.msra.mxu0 0.0
    %2816 = vmatprep.subr.mxu0 0.0
    %2817 = vmatpush1.msra.mxu0 0.0
    %2818 = vmatprep.subr.mxu0 0.0
    %2819 = vmatpush1.msra.mxu0 0.0
    %2820 = vmatprep.subr.mxu0 0.0
    %2821 = vmatpush1.msra.mxu0 0.0
    %2822 = vmatprep.subr.mxu0 0.0
    %2823 = vmatpush1.msra.mxu0 0.0
    %2824 = vmatprep.subr.mxu0 0.0
    %2825 = vmatpush1.msra.mxu0 0.0
    %2826 = vmatprep.subr.mxu0 0.0
    %2827 = vmatpush1.msra.mxu0 0.0
    %2828 = vmatprep.subr.mxu0 0.0
    %2829 = vmatpush1.msra.mxu0 0.0
    %2830 = vmatprep.subr.mxu0 0.0
    %2831 = vmatpush1.msra.mxu0 0.0
    %2832 = vmatprep.subr.mxu0 0.0
    %2833 = vmatpush1.msra.mxu0 0.0
    %2834 = vmatprep.subr.mxu0 0.0
    %2835 = vmatpush1.msra.mxu0 0.0
    %2836 = vmatprep.subr.mxu0 0.0
    %2837 = vmatpush1.msra.mxu0 0.0
    %2838 = vmatprep.subr.mxu0 0.0
    %2839 = vmatpush1.msra.mxu0 0.0
    %2840 = vmatprep.subr.mxu0 0.0
    %2841 = vmatpush1.msra.mxu0 0.0
    %2842 = vmatprep.subr.mxu0 0.0
    %2843 = vmatpush1.msra.mxu0 0.0
    %2844 = vmatprep.subr.mxu0 0.0
    %2845 = vmatpush1.msra.mxu0 0.0
    %2846 = vmatprep.mubr.f32.mxu0 0.0
    %2847 = vmatmul.mubr.f32.gmra.mrb[0].mxu0 %v2780
    %v2848 = vpop.f32.mrb[0].mxu0
    %v2849 = vadd.f32 0.0, %v2848
    %v2850 = vpop.f32.mrb[0].mxu0
    %2851 = vdwg.mxu0
    %2852 = vrot.lane.b32.xlu0 %v1891, 80
    %v2853 = vpop.permute.xlu0 %2852
    %2854 = vrot.lane.b32.xlu0 %v1896, 80
    %v2855 = vpop.permute.xlu0 %2854
    %v2859 = vsel %vm1576, %v2772, 0
    %2861 = vmatprep.subr.mxu0 0.0
    %2862 = vmatpush1.msra.mxu0 %v2853
    %2863 = vmatprep.subr.mxu0 0.0
    %2864 = vmatpush1.msra.mxu0 %v2855
    %2865 = vmatprep.subr.mxu0 0.0
    %2866 = vmatpush1.msra.mxu0 0.0
    %2867 = vmatprep.subr.mxu0 0.0
    %2868 = vmatpush1.msra.mxu0 0.0
    %2869 = vmatprep.subr.mxu0 0.0
    %2870 = vmatpush1.msra.mxu0 0.0
    %2871 = vmatprep.subr.mxu0 0.0
    %2872 = vmatpush1.msra.mxu0 0.0
    %2873 = vmatprep.subr.mxu0 0.0
    %2874 = vmatpush1.msra.mxu0 0.0
    %2875 = vmatprep.subr.mxu0 0.0
    %2876 = vmatpush1.msra.mxu0 0.0
    %2877 = vmatprep.subr.mxu0 0.0
    %2878 = vmatpush1.msra.mxu0 0.0
    %2879 = vmatprep.subr.mxu0 0.0
    %2880 = vmatpush1.msra.mxu0 0.0
    %2881 = vmatprep.subr.mxu0 0.0
    %2882 = vmatpush1.msra.mxu0 0.0
    %2883 = vmatprep.subr.mxu0 0.0
    %2884 = vmatpush1.msra.mxu0 0.0
    %2885 = vmatprep.subr.mxu0 0.0
    %2886 = vmatpush1.msra.mxu0 0.0
    %2887 = vmatprep.subr.mxu0 0.0
    %2888 = vmatpush1.msra.mxu0 0.0
    %2889 = vmatprep.subr.mxu0 0.0
    %2890 = vmatpush1.msra.mxu0 0.0
    %2891 = vmatprep.subr.mxu0 0.0
    %2892 = vmatpush1.msra.mxu0 0.0
    %2893 = vmatprep.subr.mxu0 0.0
    %2894 = vmatpush1.msra.mxu0 0.0
    %2895 = vmatprep.subr.mxu0 0.0
    %2896 = vmatpush1.msra.mxu0 0.0
    %2897 = vmatprep.subr.mxu0 0.0
    %2898 = vmatpush1.msra.mxu0 0.0
    %2899 = vmatprep.subr.mxu0 0.0
    %2900 = vmatpush1.msra.mxu0 0.0
    %2901 = vmatprep.subr.mxu0 0.0
    %2902 = vmatpush1.msra.mxu0 0.0
    %2903 = vmatprep.subr.mxu0 0.0
    %2904 = vmatpush1.msra.mxu0 0.0
    %2905 = vmatprep.subr.mxu0 0.0
    %2906 = vmatpush1.msra.mxu0 0.0
    %2907 = vmatprep.subr.mxu0 0.0
    %2908 = vmatpush1.msra.mxu0 0.0
    %2909 = vmatprep.subr.mxu0 0.0
    %2910 = vmatpush1.msra.mxu0 0.0
    %2911 = vmatprep.subr.mxu0 0.0
    %2912 = vmatpush1.msra.mxu0 0.0
    %2913 = vmatprep.subr.mxu0 0.0
    %2914 = vmatpush1.msra.mxu0 0.0
    %2915 = vmatprep.subr.mxu0 0.0
    %2916 = vmatpush1.msra.mxu0 0.0
    %2917 = vmatprep.subr.mxu0 0.0
    %2918 = vmatpush1.msra.mxu0 0.0
    %2919 = vmatprep.subr.mxu0 0.0
    %2920 = vmatpush1.msra.mxu0 0.0
    %2921 = vmatprep.subr.mxu0 0.0
    %2922 = vmatpush1.msra.mxu0 0.0
    %2923 = vmatprep.subr.mxu0 0.0
    %2924 = vmatpush1.msra.mxu0 0.0
    %2925 = vmatprep.mubr.f32.mxu0 0.0
    %2926 = vmatmul.mubr.f32.gmra.mrb[0].mxu0 %v2859
    %v2927 = vpop.f32.mrb[0].mxu0
    %v2928 = vadd.f32 0.0, %v2927
    %v2929 = vpop.f32.mrb[0].mxu0
    %2930 = vdwg.mxu0
    %2931 = vrot.lane.b32.xlu0 %v1790, 104
    %v2932 = vpop.permute.xlu0 %2931
    %2933 = vrot.lane.b32.xlu0 %v1881, 104
    %v2934 = vpop.permute.xlu0 %2933
    %2935 = vrot.lane.b32.xlu0 %v1886, 104
    %v2936 = vpop.permute.xlu0 %2935
    %v2937 = vsel %vm218, %v2932, 0
    %v2939 = vsel %vm218, %v2934, 0
    %v2941 = vsel %vm218, %v2936, 0
    %2943 = vmatprep.subr.mxu0 0.0
    %2944 = vmatpush1.xpose.msra.mxu0 %v2939
    %2945 = vmatprep.subr.mxu0 0.0
    %2946 = vmatpush1.xpose.msra.mxu0 %v2941
    %2947 = vmatprep.subr.mxu0 0.0
    %2948 = vmatpush1.xpose.msra.mxu0 0.0
    %2949 = vmatprep.subr.mxu0 0.0
    %2950 = vmatpush1.xpose.msra.mxu0 0.0
    %2951 = vmatprep.subr.mxu0 0.0
    %2952 = vmatpush1.xpose.msra.mxu0 0.0
    %2953 = vmatprep.subr.mxu0 0.0
    %2954 = vmatpush1.xpose.msra.mxu0 0.0
    %2955 = vmatprep.subr.mxu0 0.0
    %2956 = vmatpush1.xpose.msra.mxu0 0.0
    %2957 = vmatprep.subr.mxu0 0.0
    %2958 = vmatpush1.xpose.msra.mxu0 0.0
    %2959 = vmatprep.subr.mxu0 0.0
    %2960 = vmatpush1.xpose.msra.mxu0 0.0
    %2961 = vmatprep.subr.mxu0 0.0
    %2962 = vmatpush1.xpose.msra.mxu0 0.0
    %2963 = vmatprep.subr.mxu0 0.0
    %2964 = vmatpush1.xpose.msra.mxu0 0.0
    %2965 = vmatprep.subr.mxu0 0.0
    %2966 = vmatpush1.xpose.msra.mxu0 0.0
    %2967 = vmatprep.subr.mxu0 0.0
    %2968 = vmatpush1.xpose.msra.mxu0 0.0
    %2969 = vmatprep.subr.mxu0 0.0
    %2970 = vmatpush1.xpose.msra.mxu0 0.0
    %2971 = vmatprep.subr.mxu0 0.0
    %2972 = vmatpush1.xpose.msra.mxu0 0.0
    %2973 = vmatprep.subr.mxu0 0.0
    %2974 = vmatpush1.xpose.msra.mxu0 0.0
    %2975 = vmatprep.subr.mxu0 0.0
    %2976 = vmatpush1.xpose.msra.mxu0 0.0
    %2977 = vmatprep.subr.mxu0 0.0
    %2978 = vmatpush1.xpose.msra.mxu0 0.0
    %2979 = vmatprep.subr.mxu0 0.0
    %2980 = vmatpush1.xpose.msra.mxu0 0.0
    %2981 = vmatprep.subr.mxu0 0.0
    %2982 = vmatpush1.xpose.msra.mxu0 0.0
    %2983 = vmatprep.subr.mxu0 0.0
    %2984 = vmatpush1.xpose.msra.mxu0 0.0
    %2985 = vmatprep.subr.mxu0 0.0
    %2986 = vmatpush1.xpose.msra.mxu0 0.0
    %2987 = vmatprep.subr.mxu0 0.0
    %2988 = vmatpush1.xpose.msra.mxu0 0.0
    %2989 = vmatprep.subr.mxu0 0.0
    %2990 = vmatpush1.xpose.msra.mxu0 0.0
    %2991 = vmatprep.subr.mxu0 0.0
    %2992 = vmatpush1.xpose.msra.mxu0 0.0
    %2993 = vmatprep.subr.mxu0 0.0
    %2994 = vmatpush1.xpose.msra.mxu0 0.0
    %2995 = vmatprep.subr.mxu0 0.0
    %2996 = vmatpush1.xpose.msra.mxu0 0.0
    %2997 = vmatprep.subr.mxu0 0.0
    %2998 = vmatpush1.xpose.msra.mxu0 0.0
    %2999 = vmatprep.subr.mxu0 0.0
    %3000 = vmatpush1.xpose.msra.mxu0 0.0
    %3001 = vmatprep.subr.mxu0 0.0
    %3002 = vmatpush1.xpose.msra.mxu0 0.0
    %3003 = vmatprep.subr.mxu0 0.0
    %3004 = vmatpush1.xpose.msra.mxu0 0.0
    %3005 = vmatprep.subr.mxu0 0.0
    %3006 = vmatpush1.xpose.msra.mxu0 0.0
    %3007 = vmatprep.mubr.f32.mxu0 0.0
    %3008 = vmatmul.mubr.f32.gmra.mrb[0].mxu0 %v2937
    %v3009 = vpop.f32.mrb[0].mxu0
    %v3010 = vadd.f32 0.0, %v3009
    %v3011 = vpop.f32.mrb[0].mxu0
    %3012 = vdwg.mxu0
    %3013 = vrot.lane.b32.xlu0 %v1795, 104
    %v3014 = vpop.permute.xlu0 %3013
    %3015 = vrot.lane.b32.xlu0 %v1891, 104
    %v3016 = vpop.permute.xlu0 %3015
    %3017 = vrot.lane.b32.xlu0 %v1896, 104
    %v3018 = vpop.permute.xlu0 %3017
    %v3019 = vsel %vm218, %v3014, 0
    %v3021 = vsel %vm218, %v3016, 0
    %v3023 = vsel %vm218, %v3018, 0
    %3025 = vmatprep.subr.mxu0 0.0
    %3026 = vmatpush1.xpose.msra.mxu0 %v3021
    %3027 = vmatprep.subr.mxu0 0.0
    %3028 = vmatpush1.xpose.msra.mxu0 %v3023
    %3029 = vmatprep.subr.mxu0 0.0
    %3030 = vmatpush1.xpose.msra.mxu0 0.0
    %3031 = vmatprep.subr.mxu0 0.0
    %3032 = vmatpush1.xpose.msra.mxu0 0.0
    %3033 = vmatprep.subr.mxu0 0.0
    %3034 = vmatpush1.xpose.msra.mxu0 0.0
    %3035 = vmatprep.subr.mxu0 0.0
    %3036 = vmatpush1.xpose.msra.mxu0 0.0
    %3037 = vmatprep.subr.mxu0 0.0
    %3038 = vmatpush1.xpose.msra.mxu0 0.0
    %3039 = vmatprep.subr.mxu0 0.0
    %3040 = vmatpush1.xpose.msra.mxu0 0.0
    %3041 = vmatprep.subr.mxu0 0.0
    %3042 = vmatpush1.xpose.msra.mxu0 0.0
    %3043 = vmatprep.subr.mxu0 0.0
    %3044 = vmatpush1.xpose.msra.mxu0 0.0
    %3045 = vmatprep.subr.mxu0 0.0
    %3046 = vmatpush1.xpose.msra.mxu0 0.0
    %3047 = vmatprep.subr.mxu0 0.0
    %3048 = vmatpush1.xpose.msra.mxu0 0.0
    %3049 = vmatprep.subr.mxu0 0.0
    %3050 = vmatpush1.xpose.msra.mxu0 0.0
    %3051 = vmatprep.subr.mxu0 0.0
    %3052 = vmatpush1.xpose.msra.mxu0 0.0
    %3053 = vmatprep.subr.mxu0 0.0
    %3054 = vmatpush1.xpose.msra.mxu0 0.0
    %3055 = vmatprep.subr.mxu0 0.0
    %3056 = vmatpush1.xpose.msra.mxu0 0.0
    %3057 = vmatprep.subr.mxu0 0.0
    %3058 = vmatpush1.xpose.msra.mxu0 0.0
    %3059 = vmatprep.subr.mxu0 0.0
    %3060 = vmatpush1.xpose.msra.mxu0 0.0
    %3061 = vmatprep.subr.mxu0 0.0
    %3062 = vmatpush1.xpose.msra.mxu0 0.0
    %3063 = vmatprep.subr.mxu0 0.0
    %3064 = vmatpush1.xpose.msra.mxu0 0.0
    %3065 = vmatprep.subr.mxu0 0.0
    %3066 = vmatpush1.xpose.msra.mxu0 0.0
    %3067 = vmatprep.subr.mxu0 0.0
    %3068 = vmatpush1.xpose.msra.mxu0 0.0
    %3069 = vmatprep.subr.mxu0 0.0
    %3070 = vmatpush1.xpose.msra.mxu0 0.0
    %3071 = vmatprep.subr.mxu0 0.0
    %3072 = vmatpush1.xpose.msra.mxu0 0.0
    %3073 = vmatprep.subr.mxu0 0.0
    %3074 = vmatpush1.xpose.msra.mxu0 0.0
    %3075 = vmatprep.subr.mxu0 0.0
    %3076 = vmatpush1.xpose.msra.mxu0 0.0
    %3077 = vmatprep.subr.mxu0 0.0
    %3078 = vmatpush1.xpose.msra.mxu0 0.0
    %3079 = vmatprep.subr.mxu0 0.0
    %3080 = vmatpush1.xpose.msra.mxu0 0.0
    %3081 = vmatprep.subr.mxu0 0.0
    %3082 = vmatpush1.xpose.msra.mxu0 0.0
    %3083 = vmatprep.subr.mxu0 0.0
    %3084 = vmatpush1.xpose.msra.mxu0 0.0
    %3085 = vmatprep.subr.mxu0 0.0
    %3086 = vmatpush1.xpose.msra.mxu0 0.0
    %3087 = vmatprep.subr.mxu0 0.0
    %3088 = vmatpush1.xpose.msra.mxu0 0.0
    %3089 = vmatprep.mubr.f32.mxu0 0.0
    %3090 = vmatmul.mubr.f32.gmra.mrb[0].mxu0 %v3019
    %v3091 = vpop.f32.mrb[0].mxu0
    %v3092 = vadd.f32 0.0, %v3091
    %v3093 = vpop.f32.mrb[0].mxu0
    %3094 = vdwg.mxu0
    %v3095 = vmul.f32 %v3010, 0.35355338
    %v3096 = vmul.f32 %v3092, 0.35355338
    %v3097 = vsel %vm1576, %v3095, -inf
    %3098 = vmax.xlane.f32.xlu0 %v3097
    %v3099 = vpop.xlane.xlu0 %3098
    %v3100 = vsel %vm1576, %v3096, -inf
    %3101 = vmax.xlane.f32.xlu0 %v3100
    %v3102 = vpop.xlane.xlu0 %3101
    %v3103 = vsub.f32 %v3095, %v3099
    %v3104 = vsub.f32 %v3096, %v3102
    %v3105 = vmul.f32 %v3103, 1.442695
    %v3106 = vpow.pop %v3105
    %v3107 = vmul.f32 %v3104, 1.442695
    %v3108 = vpow.pop %v3107
    %v3109 = vsel %vm1576, %v3106, 0.0
    %3110 = vadd.xlane.f32.xlu0 %v3109
    %v3111 = vpop.xlane.xlu0 %3110
    %v3112 = vsel %vm1576, %v3108, 0.0
    %3113 = vadd.xlane.f32.xlu0 %v3112
    %v3114 = vpop.xlane.xlu0 %3113
    %v3115 = vrcp.pop %v3111
    %v3116 = vrcp.pop %v3114
    %v3117 = vmul.f32 %v3106, %v3115
    %v3118 = vmul.f32 %v3108, %v3116
    %3119 = vrot.lane.b32.xlu0 %v1881, 72
    %v3120 = vpop.permute.xlu0 %3119
    %3121 = vrot.lane.b32.xlu0 %v1886, 72
    %v3122 = vpop.permute.xlu0 %3121
    %v3126 = vsel %vm1576, %v3117, 0
    %3128 = vmatprep.subr.mxu0 0.0
    %3129 = vmatpush1.msra.mxu0 %v3120
    %3130 = vmatprep.subr.mxu0 0.0
    %3131 = vmatpush1.msra.mxu0 %v3122
    %3132 = vmatprep.subr.mxu0 0.0
    %3133 = vmatpush1.msra.mxu0 0.0
    %3134 = vmatprep.subr.mxu0 0.0
    %3135 = vmatpush1.msra.mxu0 0.0
    %3136 = vmatprep.subr.mxu0 0.0
    %3137 = vmatpush1.msra.mxu0 0.0
    %3138 = vmatprep.subr.mxu0 0.0
    %3139 = vmatpush1.msra.mxu0 0.0
    %3140 = vmatprep.subr.mxu0 0.0
    %3141 = vmatpush1.msra.mxu0 0.0
    %3142 = vmatprep.subr.mxu0 0.0
    %3143 = vmatpush1.msra.mxu0 0.0
    %3144 = vmatprep.subr.mxu0 0.0
    %3145 = vmatpush1.msra.mxu0 0.0
    %3146 = vmatprep.subr.mxu0 0.0
    %3147 = vmatpush1.msra.mxu0 0.0
    %3148 = vmatprep.subr.mxu0 0.0
    %3149 = vmatpush1.msra.mxu0 0.0
    %3150 = vmatprep.subr.mxu0 0.0
    %3151 = vmatpush1.msra.mxu0 0.0
    %3152 = vmatprep.subr.mxu0 0.0
    %3153 = vmatpush1.msra.mxu0 0.0
    %3154 = vmatprep.subr.mxu0 0.0
    %3155 = vmatpush1.msra.mxu0 0.0
    %3156 = vmatprep.subr.mxu0 0.0
    %3157 = vmatpush1.msra.mxu0 0.0
    %3158 = vmatprep.subr.mxu0 0.0
    %3159 = vmatpush1.msra.mxu0 0.0
    %3160 = vmatprep.subr.mxu0 0.0
    %3161 = vmatpush1.msra.mxu0 0.0
    %3162 = vmatprep.subr.mxu0 0.0
    %3163 = vmatpush1.msra.mxu0 0.0
    %3164 = vmatprep.subr.mxu0 0.0
    %3165 = vmatpush1.msra.mxu0 0.0
    %3166 = vmatprep.subr.mxu0 0.0
    %3167 = vmatpush1.msra.mxu0 0.0
    %3168 = vmatprep.subr.mxu0 0.0
    %3169 = vmatpush1.msra.mxu0 0.0
    %3170 = vmatprep.subr.mxu0 0.0
    %3171 = vmatpush1.msra.mxu0 0.0
    %3172 = vmatprep.subr.mxu0 0.0
    %3173 = vmatpush1.msra.mxu0 0.0
    %3174 = vmatprep.subr.mxu0 0.0
    %3175 = vmatpush1.msra.mxu0 0.0
    %3176 = vmatprep.subr.mxu0 0.0
    %3177 = vmatpush1.msra.mxu0 0.0
    %3178 = vmatprep.subr.mxu0 0.0
    %3179 = vmatpush1.msra.mxu0 0.0
    %3180 = vmatprep.subr.mxu0 0.0
    %3181 = vmatpush1.msra.mxu0 0.0
    %3182 = vmatprep.subr.mxu0 0.0
    %3183 = vmatpush1.msra.mxu0 0.0
    %3184 = vmatprep.subr.mxu0 0.0
    %3185 = vmatpush1.msra.mxu0 0.0
    %3186 = vmatprep.subr.mxu0 0.0
    %3187 = vmatpush1.msra.mxu0 0.0
    %3188 = vmatprep.subr.mxu0 0.0
    %3189 = vmatpush1.msra.mxu0 0.0
    %3190 = vmatprep.subr.mxu0 0.0
    %3191 = vmatpush1.msra.mxu0 0.0
    %3192 = vmatprep.mubr.f32.mxu0 0.0
    %3193 = vmatmul.mubr.f32.gmra.mrb[0].mxu0 %v3126
    %v3194 = vpop.f32.mrb[0].mxu0
    %v3195 = vadd.f32 0.0, %v3194
    %v3196 = vpop.f32.mrb[0].mxu0
    %3197 = vdwg.mxu0
    %3198 = vrot.lane.b32.xlu0 %v1891, 72
    %v3199 = vpop.permute.xlu0 %3198
    %3200 = vrot.lane.b32.xlu0 %v1896, 72
    %v3201 = vpop.permute.xlu0 %3200
    %v3205 = vsel %vm1576, %v3118, 0
    %3207 = vmatprep.subr.mxu0 0.0
    %3208 = vmatpush1.msra.mxu0 %v3199
    %3209 = vmatprep.subr.mxu0 0.0
    %3210 = vmatpush1.msra.mxu0 %v3201
    %3211 = vmatprep.subr.mxu0 0.0
    %3212 = vmatpush1.msra.mxu0 0.0
    %3213 = vmatprep.subr.mxu0 0.0
    %3214 = vmatpush1.msra.mxu0 0.0
    %3215 = vmatprep.subr.mxu0 0.0
    %3216 = vmatpush1.msra.mxu0 0.0
    %3217 = vmatprep.subr.mxu0 0.0
    %3218 = vmatpush1.msra.mxu0 0.0
    %3219 = vmatprep.subr.mxu0 0.0
    %3220 = vmatpush1.msra.mxu0 0.0
    %3221 = vmatprep.subr.mxu0 0.0
    %3222 = vmatpush1.msra.mxu0 0.0
    %3223 = vmatprep.subr.mxu0 0.0
    %3224 = vmatpush1.msra.mxu0 0.0
    %3225 = vmatprep.subr.mxu0 0.0
    %3226 = vmatpush1.msra.mxu0 0.0
    %3227 = vmatprep.subr.mxu0 0.0
    %3228 = vmatpush1.msra.mxu0 0.0
    %3229 = vmatprep.subr.mxu0 0.0
    %3230 = vmatpush1.msra.mxu0 0.0
    %3231 = vmatprep.subr.mxu0 0.0
    %3232 = vmatpush1.msra.mxu0 0.0
    %3233 = vmatprep.subr.mxu0 0.0
    %3234 = vmatpush1.msra.mxu0 0.0
    %3235 = vmatprep.subr.mxu0 0.0
    %3236 = vmatpush1.msra.mxu0 0.0
    %3237 = vmatprep.subr.mxu0 0.0
    %3238 = vmatpush1.msra.mxu0 0.0
    %3239 = vmatprep.subr.mxu0 0.0
    %3240 = vmatpush1.msra.mxu0 0.0
    %3241 = vmatprep.subr.mxu0 0.0
    %3242 = vmatpush1.msra.mxu0 0.0
    %3243 = vmatprep.subr.mxu0 0.0
    %3244 = vmatpush1.msra.mxu0 0.0
    %3245 = vmatprep.subr.mxu0 0.0
    %3246 = vmatpush1.msra.mxu0 0.0
    %3247 = vmatprep.subr.mxu0 0.0
    %3248 = vmatpush1.msra.mxu0 0.0
    %3249 = vmatprep.subr.mxu0 0.0
    %3250 = vmatpush1.msra.mxu0 0.0
    %3251 = vmatprep.subr.mxu0 0.0
    %3252 = vmatpush1.msra.mxu0 0.0
    %3253 = vmatprep.subr.mxu0 0.0
    %3254 = vmatpush1.msra.mxu0 0.0
    %3255 = vmatprep.subr.mxu0 0.0
    %3256 = vmatpush1.msra.mxu0 0.0
    %3257 = vmatprep.subr.mxu0 0.0
    %3258 = vmatpush1.msra.mxu0 0.0
    %3259 = vmatprep.subr.mxu0 0.0
    %3260 = vmatpush1.msra.mxu0 0.0
    %3261 = vmatprep.subr.mxu0 0.0
    %3262 = vmatpush1.msra.mxu0 0.0
    %3263 = vmatprep.subr.mxu0 0.0
    %3264 = vmatpush1.msra.mxu0 0.0
    %3265 = vmatprep.subr.mxu0 0.0
    %3266 = vmatpush1.msra.mxu0 0.0
    %3267 = vmatprep.subr.mxu0 0.0
    %3268 = vmatpush1.msra.mxu0 0.0
    %3269 = vmatprep.subr.mxu0 0.0
    %3270 = vmatpush1.msra.mxu0 0.0
    %3271 = vmatprep.mubr.f32.mxu0 0.0
    %3272 = vmatmul.mubr.f32.gmra.mrb[0].mxu0 %v3205
    %v3273 = vpop.f32.mrb[0].mxu0
    %v3274 = vadd.f32 0.0, %v3273
    %v3275 = vpop.f32.mrb[0].mxu0
    %3276 = vdwg.mxu0
    %3279 = vrot.lane.b32.xlu0 %v2503, 8
    %v3280 = vpop.permute.xlu0 %3279
    %3281 = vrot.lane.b32.xlu0 %v2582, 8
    %v3282 = vpop.permute.xlu0 %3281
    %3287 = vrot.lane.b32.xlu0 %v2849, 16
    %v3288 = vpop.permute.xlu0 %3287
    %3289 = vrot.lane.b32.xlu0 %v2928, 16
    %v3290 = vpop.permute.xlu0 %3289
    %3295 = vrot.lane.b32.xlu0 %v3195, 24
    %v3296 = vpop.permute.xlu0 %3295
    %3297 = vrot.lane.b32.xlu0 %v3274, 24
    %v3298 = vpop.permute.xlu0 %3297
    %v3301 = vsel %vm218, %v2157, %v3280
    %v3302 = vsel %vm218, %v2236, %v3282
    %v3303 = vsel %vm1576, %v3301, %v3288
    %v3304 = vsel %vm1576, %v3302, %v3290
    %v3305 = vsel %vm1579, %v3303, %v3296
    %v3306 = vsel %vm1579, %v3304, %v3298
    %v3307 = vlaneseq
    %v3308 = vshrl.u32 %v3307, 7
    %v3309 = vsub.s32 0, %v3308
    %v3310 = vrot.slane %v75, %v3309
    %v3312 = vsel %vm84, %v3305, 0
    %v3315 = vsel %vm84, %v3306, 0
    %3317 = vmatprep.subr.mxu0 0.0
    %3318 = vmatpush1.msra.mxu0 %v62
    %3319 = vmatprep.subr.mxu0 0.0
    %3320 = vmatpush1.msra.mxu0 %v63
    %3321 = vmatprep.subr.mxu0 0.0
    %3322 = vmatpush1.msra.mxu0 %v64
    %3323 = vmatprep.subr.mxu0 0.0
    %3324 = vmatpush1.msra.mxu0 %v65
    %3325 = vmatprep.subr.mxu0 0.0
    %3326 = vmatpush1.msra.mxu0 0.0
    %3327 = vmatprep.subr.mxu0 0.0
    %3328 = vmatpush1.msra.mxu0 0.0
    %3329 = vmatprep.subr.mxu0 0.0
    %3330 = vmatpush1.msra.mxu0 0.0
    %3331 = vmatprep.subr.mxu0 0.0
    %3332 = vmatpush1.msra.mxu0 0.0
    %3333 = vmatprep.subr.mxu0 0.0
    %3334 = vmatpush1.msra.mxu0 0.0
    %3335 = vmatprep.subr.mxu0 0.0
    %3336 = vmatpush1.msra.mxu0 0.0
    %3337 = vmatprep.subr.mxu0 0.0
    %3338 = vmatpush1.msra.mxu0 0.0
    %3339 = vmatprep.subr.mxu0 0.0
    %3340 = vmatpush1.msra.mxu0 0.0
    %3341 = vmatprep.subr.mxu0 0.0
    %3342 = vmatpush1.msra.mxu0 0.0
    %3343 = vmatprep.subr.mxu0 0.0
    %3344 = vmatpush1.msra.mxu0 0.0
    %3345 = vmatprep.subr.mxu0 0.0
    %3346 = vmatpush1.msra.mxu0 0.0
    %3347 = vmatprep.subr.mxu0 0.0
    %3348 = vmatpush1.msra.mxu0 0.0
    %3349 = vmatprep.subr.mxu0 0.0
    %3350 = vmatpush1.msra.mxu0 0.0
    %3351 = vmatprep.subr.mxu0 0.0
    %3352 = vmatpush1.msra.mxu0 0.0
    %3353 = vmatprep.subr.mxu0 0.0
    %3354 = vmatpush1.msra.mxu0 0.0
    %3355 = vmatprep.subr.mxu0 0.0
    %3356 = vmatpush1.msra.mxu0 0.0
    %3357 = vmatprep.subr.mxu0 0.0
    %3358 = vmatpush1.msra.mxu0 0.0
    %3359 = vmatprep.subr.mxu0 0.0
    %3360 = vmatpush1.msra.mxu0 0.0
    %3361 = vmatprep.subr.mxu0 0.0
    %3362 = vmatpush1.msra.mxu0 0.0
    %3363 = vmatprep.subr.mxu0 0.0
    %3364 = vmatpush1.msra.mxu0 0.0
    %3365 = vmatprep.subr.mxu0 0.0
    %3366 = vmatpush1.msra.mxu0 0.0
    %3367 = vmatprep.subr.mxu0 0.0
    %3368 = vmatpush1.msra.mxu0 0.0
    %3369 = vmatprep.subr.mxu0 0.0
    %3370 = vmatpush1.msra.mxu0 0.0
    %3371 = vmatprep.subr.mxu0 0.0
    %3372 = vmatpush1.msra.mxu0 0.0
    %3373 = vmatprep.subr.mxu0 0.0
    %3374 = vmatpush1.msra.mxu0 0.0
    %3375 = vmatprep.subr.mxu0 0.0
    %3376 = vmatpush1.msra.mxu0 0.0
    %3377 = vmatprep.subr.mxu0 0.0
    %3378 = vmatpush1.msra.mxu0 0.0
    %3379 = vmatprep.subr.mxu0 0.0
    %3380 = vmatpush1.msra.mxu0 0.0
    %3381 = vmatprep.mubr.f32.mxu0 0.0
    %3382 = vmatmul.mubr.f32.gmra.mrb[0].mxu0 %v3312
    %v3383 = vpop.f32.mrb[0].mxu0
    %v3384 = vadd.f32 %v3310, %v3383
    %v3385 = vpop.f32.mrb[0].mxu0
    %3386 = vmatprep.mubr.f32.mxu0 0.0
    %3387 = vmatmul.mubr.f32.gmra.mrb[0].mxu0 %v3315
    %v3388 = vpop.f32.mrb[0].mxu0
    %v3389 = vadd.f32 %v3310, %v3388
    %v3390 = vpop.f32.mrb[0].mxu0
    %3391 = vdwg.mxu0
    %v3392 = vadd.f32 %v3384, %v1707
    %v3393 = vadd.f32 %v3389, %v1708
    %v3394 = vld [vmem:[%s2 + $0xa] sm:$0x1]
    %v3395 = vld [vmem:[%s2 + $0xe] sm:$0x1]
    %v3396 = vsel %vm84, %v3392, 0.0
    %3397 = vadd.xlane.f32.xlu0 %v3396
    %v3398 = vpop.xlane.xlu0 %3397
    %v3399 = vsel %vm84, %v3393, 0.0
    %3400 = vadd.xlane.f32.xlu0 %v3399
    %v3401 = vpop.xlane.xlu0 %3400
    %v3402 = vmul.f32 %v3398, %v91
    %v3403 = vmul.f32 %v3401, %v91
    %v3404 = vsub.f32 %v3392, %v3402
    %v3405 = vsub.f32 %v3393, %v3403
    %v3406 = vmul.f32 %v3404, %v3404
    %v3407 = vmul.f32 %v3405, %v3405
    %v3408 = vsel %vm84, %v3406, 0.0
    %3409 = vadd.xlane.f32.xlu0 %v3408
    %v3410 = vpop.xlane.xlu0 %3409
    %v3411 = vsel %vm84, %v3407, 0.0
    %3412 = vadd.xlane.f32.xlu0 %v3411
    %v3413 = vpop.xlane.xlu0 %3412
    %v3414 = vmul.f32 %v3410, %v91
    %v3415 = vmul.f32 %v3413, %v91
    %v3416 = vadd.f32 %v3414, 1e-12
    %v3417 = vadd.f32 %v3415, 1e-12
    %v3418 = vrsqrt.pop %v3416
    %v3419 = vrsqrt.pop %v3417
    %v3420 = vmul.f32 %v3404, %v3418
    %v3421 = vmul.f32 %v3405, %v3419
    %v3422 = vlaneseq
    %v3423 = vshrl.u32 %v3422, 7
    %v3424 = vsub.s32 0, %v3423
    %v3425 = vrot.slane %v3394, %v3424
    %v3426 = vmul.f32 %v3420, %v3425
    %v3427 = vmul.f32 %v3421, %v3425
    %v3428 = vlaneseq
    %v3429 = vshrl.u32 %v3428, 7
    %v3430 = vsub.s32 0, %v3429
    %v3431 = vrot.slane %v3395, %v3430
    %v3432 = vadd.f32 %v3426, %v3431
    %v3433 = vadd.f32 %v3427, %v3431
    %v3434 = vlaneseq
    %v3435 = vshrl.u32 %v3434, 7
    %v3436 = vsub.s32 0, %v3435
    %v3437 = vrot.slane %v72, %v3436
    %v3439 = vsel %vm84, %v3432, 0
    %v3442 = vsel %vm84, %v3433, 0
    %3444 = vmatprep.subr.mxu0 0.0
    %3445 = vmatpush1.msra.mxu0 %v42
    %3446 = vmatprep.subr.mxu0 0.0
    %3447 = vmatpush1.msra.mxu0 %v43
    %3448 = vmatprep.subr.mxu0 0.0
    %3449 = vmatpush1.msra.mxu0 %v44
    %3450 = vmatprep.subr.mxu0 0.0
    %3451 = vmatpush1.msra.mxu0 %v45
    %3452 = vmatprep.subr.mxu0 0.0
    %3453 = vmatpush1.msra.mxu0 0.0
    %3454 = vmatprep.subr.mxu0 0.0
    %3455 = vmatpush1.msra.mxu0 0.0
    %3456 = vmatprep.subr.mxu0 0.0
    %3457 = vmatpush1.msra.mxu0 0.0
    %3458 = vmatprep.subr.mxu0 0.0
    %3459 = vmatpush1.msra.mxu0 0.0
    %3460 = vmatprep.subr.mxu0 0.0
    %3461 = vmatpush1.msra.mxu0 0.0
    %3462 = vmatprep.subr.mxu0 0.0
    %3463 = vmatpush1.msra.mxu0 0.0
    %3464 = vmatprep.subr.mxu0 0.0
    %3465 = vmatpush1.msra.mxu0 0.0
    %3466 = vmatprep.subr.mxu0 0.0
    %3467 = vmatpush1.msra.mxu0 0.0
    %3468 = vmatprep.subr.mxu0 0.0
    %3469 = vmatpush1.msra.mxu0 0.0
    %3470 = vmatprep.subr.mxu0 0.0
    %3471 = vmatpush1.msra.mxu0 0.0
    %3472 = vmatprep.subr.mxu0 0.0
    %3473 = vmatpush1.msra.mxu0 0.0
    %3474 = vmatprep.subr.mxu0 0.0
    %3475 = vmatpush1.msra.mxu0 0.0
    %3476 = vmatprep.subr.mxu0 0.0
    %3477 = vmatpush1.msra.mxu0 0.0
    %3478 = vmatprep.subr.mxu0 0.0
    %3479 = vmatpush1.msra.mxu0 0.0
    %3480 = vmatprep.subr.mxu0 0.0
    %3481 = vmatpush1.msra.mxu0 0.0
    %3482 = vmatprep.subr.mxu0 0.0
    %3483 = vmatpush1.msra.mxu0 0.0
    %3484 = vmatprep.subr.mxu0 0.0
    %3485 = vmatpush1.msra.mxu0 0.0
    %3486 = vmatprep.subr.mxu0 0.0
    %3487 = vmatpush1.msra.mxu0 0.0
    %3488 = vmatprep.subr.mxu0 0.0
    %3489 = vmatpush1.msra.mxu0 0.0
    %3490 = vmatprep.subr.mxu0 0.0
    %3491 = vmatpush1.msra.mxu0 0.0
    %3492 = vmatprep.subr.mxu0 0.0
    %3493 = vmatpush1.msra.mxu0 0.0
    %3494 = vmatprep.subr.mxu0 0.0
    %3495 = vmatpush1.msra.mxu0 0.0
    %3496 = vmatprep.subr.mxu0 0.0
    %3497 = vmatpush1.msra.mxu0 0.0
    %3498 = vmatprep.subr.mxu0 0.0
    %3499 = vmatpush1.msra.mxu0 0.0
    %3500 = vmatprep.subr.mxu0 0.0
    %3501 = vmatpush1.msra.mxu0 0.0
    %3502 = vmatprep.subr.mxu0 0.0
    %3503 = vmatpush1.msra.mxu0 0.0
    %3504 = vmatprep.subr.mxu0 0.0
    %3505 = vmatpush1.msra.mxu0 0.0
    %3506 = vmatprep.subr.mxu0 0.0
    %3507 = vmatpush1.msra.mxu0 0.0
    %3508 = vmatprep.mubr.f32.mxu0 0.0
    %3509 = vmatmul.mubr.f32.gmra.mrb[0].mxu0 %v3439
    %v3510 = vpop.f32.mrb[0].mxu0
    %v3511 = vadd.f32 %v3437, %v3510
    %v3512 = vpop.f32.mrb[0].mxu0
    %3513 = vmatprep.mubr.f32.mxu0 0.0
    %3514 = vmatmul.mubr.f32.gmra.mrb[0].mxu0 %v3442
    %v3515 = vpop.f32.mrb[0].mxu0
    %v3516 = vadd.f32 %v3437, %v3515
    %v3517 = vpop.f32.mrb[0].mxu0
    %3518 = vdwg.mxu0
    %v3519 = vmul.f32 %v3511, 0.5
    %v3520 = vmul.f32 %v3516, 0.5
    %v3521 = vmul.f32 %v3511, 0.70710677
    %v3522 = vmul.f32 %v3516, 0.70710677
    %v3523 = verf.f32.pop %v3521
    %v3524 = verf.f32.pop %v3522
    %v3525 = vadd.f32 %v3523, 1.0
    %v3526 = vadd.f32 %v3524, 1.0
    %v3527 = vmul.f32 %v3519, %v3525
    %v3528 = vmul.f32 %v3520, %v3526
    %v3529 = vlaneseq
    %v3530 = vshrl.u32 %v3529, 7
    %v3531 = vsub.s32 0, %v3530
    %v3532 = vrot.slane %v76, %v3531
    %vm3533 = vcmask 523264
    %v3535 = vsel %vm3533, %v3527, 0
    %v3538 = vsel %vm3533, %v3528, 0
    %3540 = vmatprep.subr.mxu0 0.0
    %3541 = vmatpush1.msra.mxu0 %v46
    %3542 = vmatprep.subr.mxu0 0.0
    %3543 = vmatpush1.msra.mxu0 %v47
    %3544 = vmatprep.subr.mxu0 0.0
    %3545 = vmatpush1.msra.mxu0 %v48
    %3546 = vmatprep.subr.mxu0 0.0
    %3547 = vmatpush1.msra.mxu0 %v49
    %3548 = vmatprep.subr.mxu0 0.0
    %3549 = vmatpush1.msra.mxu0 %v50
    %3550 = vmatprep.subr.mxu0 0.0
    %3551 = vmatpush1.msra.mxu0 %v51
    %3552 = vmatprep.subr.mxu0 0.0
    %3553 = vmatpush1.msra.mxu0 %v52
    %3554 = vmatprep.subr.mxu0 0.0
    %3555 = vmatpush1.msra.mxu0 %v53
    %3556 = vmatprep.subr.mxu0 0.0
    %3557 = vmatpush1.msra.mxu0 0.0
    %3558 = vmatprep.subr.mxu0 0.0
    %3559 = vmatpush1.msra.mxu0 0.0
    %3560 = vmatprep.subr.mxu0 0.0
    %3561 = vmatpush1.msra.mxu0 0.0
    %3562 = vmatprep.subr.mxu0 0.0
    %3563 = vmatpush1.msra.mxu0 0.0
    %3564 = vmatprep.subr.mxu0 0.0
    %3565 = vmatpush1.msra.mxu0 0.0
    %3566 = vmatprep.subr.mxu0 0.0
    %3567 = vmatpush1.msra.mxu0 0.0
    %3568 = vmatprep.subr.mxu0 0.0
    %3569 = vmatpush1.msra.mxu0 0.0
    %3570 = vmatprep.subr.mxu0 0.0
    %3571 = vmatpush1.msra.mxu0 0.0
    %3572 = vmatprep.subr.mxu0 0.0
    %3573 = vmatpush1.msra.mxu0 0.0
    %3574 = vmatprep.subr.mxu0 0.0
    %3575 = vmatpush1.msra.mxu0 0.0
    %3576 = vmatprep.subr.mxu0 0.0
    %3577 = vmatpush1.msra.mxu0 0.0
    %3578 = vmatprep.subr.mxu0 0.0
    %3579 = vmatpush1.msra.mxu0 0.0
    %3580 = vmatprep.subr.mxu0 0.0
    %3581 = vmatpush1.msra.mxu0 0.0
    %3582 = vmatprep.subr.mxu0 0.0
    %3583 = vmatpush1.msra.mxu0 0.0
    %3584 = vmatprep.subr.mxu0 0.0
    %3585 = vmatpush1.msra.mxu0 0.0
    %3586 = vmatprep.subr.mxu0 0.0
    %3587 = vmatpush1.msra.mxu0 0.0
    %3588 = vmatprep.subr.mxu0 0.0
    %3589 = vmatpush1.msra.mxu0 0.0
    %3590 = vmatprep.subr.mxu0 0.0
    %3591 = vmatpush1.msra.mxu0 0.0
    %3592 = vmatprep.subr.mxu0 0.0
    %3593 = vmatpush1.msra.mxu0 0.0
    %3594 = vmatprep.subr.mxu0 0.0
    %3595 = vmatpush1.msra.mxu0 0.0
    %3596 = vmatprep.subr.mxu0 0.0
    %3597 = vmatpush1.msra.mxu0 0.0
    %3598 = vmatprep.subr.mxu0 0.0
    %3599 = vmatpush1.msra.mxu0 0.0
    %3600 = vmatprep.subr.mxu0 0.0
    %3601 = vmatpush1.msra.mxu0 0.0
    %3602 = vmatprep.subr.mxu0 0.0
    %3603 = vmatpush1.msra.mxu0 0.0
    %3604 = vmatprep.mubr.f32.mxu0 0.0
    %3605 = vmatmul.mubr.f32.gmra.mrb[0].mxu0 %v3535
    %v3606 = vpop.f32.mrb[0].mxu0
    %v3607 = vadd.f32 %v3532, %v3606
    %v3608 = vpop.f32.mrb[0].mxu0
    %3609 = vmatprep.mubr.f32.mxu0 0.0
    %3610 = vmatmul.mubr.f32.gmra.mrb[0].mxu0 %v3538
    %v3611 = vpop.f32.mrb[0].mxu0
    %v3612 = vadd.f32 %v3532, %v3611
    %v3613 = vpop.f32.mrb[0].mxu0
    %3614 = vdwg.mxu0
    %v3615 = vadd.f32 %v3607, %v3432
    %v3616 = vadd.f32 %v3612, %v3433
    %v3617 = vld [vmem:[%s2 + $0xb] sm:$0x1]
    %v3618 = vld [vmem:[%s2 + $0xf] sm:$0x1]
    %v3619 = vsel %vm84, %v3615, 0.0
    %3620 = vadd.xlane.f32.xlu0 %v3619
    %v3621 = vpop.xlane.xlu0 %3620
    %v3622 = vsel %vm84, %v3616, 0.0
    %3623 = vadd.xlane.f32.xlu0 %v3622
    %v3624 = vpop.xlane.xlu0 %3623
    %v3625 = vmul.f32 %v3621, %v91
    %v3626 = vmul.f32 %v3624, %v91
    %v3627 = vsub.f32 %v3615, %v3625
    %v3628 = vsub.f32 %v3616, %v3626
    %v3629 = vmul.f32 %v3627, %v3627
    %v3630 = vmul.f32 %v3628, %v3628
    %v3631 = vsel %vm84, %v3629, 0.0
    %3632 = vadd.xlane.f32.xlu0 %v3631
    %v3633 = vpop.xlane.xlu0 %3632
    %v3634 = vsel %vm84, %v3630, 0.0
    %3635 = vadd.xlane.f32.xlu0 %v3634
    %v3636 = vpop.xlane.xlu0 %3635
    %v3637 = vmul.f32 %v3633, %v91
    %v3638 = vmul.f32 %v3636, %v91
    %v3639 = vadd.f32 %v3637, 1e-12
    %v3640 = vadd.f32 %v3638, 1e-12
    %v3641 = vrsqrt.pop %v3639
    %v3642 = vrsqrt.pop %v3640
    %v3643 = vmul.f32 %v3627, %v3641
    %v3644 = vmul.f32 %v3628, %v3642
    %v3645 = vlaneseq
    %v3646 = vshrl.u32 %v3645, 7
    %v3647 = vsub.s32 0, %v3646
    %v3648 = vrot.slane %v3617, %v3647
    %v3649 = vmul.f32 %v3643, %v3648
    %v3650 = vmul.f32 %v3644, %v3648
    %v3651 = vlaneseq
    %v3652 = vshrl.u32 %v3651, 7
    %v3653 = vsub.s32 0, %v3652
    %v3654 = vrot.slane %v3618, %v3653
    %v3655 = vadd.f32 %v3649, %v3654
    %v3656 = vadd.f32 %v3650, %v3654
    %3657 = vst.msk [vmem:[#allocation2] sm:$0xff] %vm84, %v3655
    %3658 = vst.msk [vmem:[#allocation2 + $0x8] sm:$0xff] %vm84, %v3656
    %v3660 = vrot.slane %v3656, 7
    %vm3662 = vcmask 1040384
    %v3663 = vsel %vm3662, %v3655, %v3660
    %v3664 = vlaneseq
    %v3665 = vshrl.u32 %v3664, 7
    %v3666 = vsub.s32 0, %v3665
    %v3667 = vrot.slane %v77, %v3666
    %v3669 = vsel %vm84, %v3663, 0
    %3671 = vmatprep.subr.mxu0 0.0
    %3672 = vmatpush1.msra.mxu0 %v66
    %3673 = vmatprep.subr.mxu0 0.0
    %3674 = vmatpush1.msra.mxu0 %v67
    %3675 = vmatprep.subr.mxu0 0.0
    %3676 = vmatpush1.msra.mxu0 %v68
    %3677 = vmatprep.subr.mxu0 0.0
    %3678 = vmatpush1.msra.mxu0 %v69
    %3679 = vmatprep.subr.mxu0 0.0
    %3680 = vmatpush1.msra.mxu0 0.0
    %3681 = vmatprep.subr.mxu0 0.0
    %3682 = vmatpush1.msra.mxu0 0.0
    %3683 = vmatprep.subr.mxu0 0.0
    %3684 = vmatpush1.msra.mxu0 0.0
    %3685 = vmatprep.subr.mxu0 0.0
    %3686 = vmatpush1.msra.mxu0 0.0
    %3687 = vmatprep.subr.mxu0 0.0
    %3688 = vmatpush1.msra.mxu0 0.0
    %3689 = vmatprep.subr.mxu0 0.0
    %3690 = vmatpush1.msra.mxu0 0.0
    %3691 = vmatprep.subr.mxu0 0.0
    %3692 = vmatpush1.msra.mxu0 0.0
    %3693 = vmatprep.subr.mxu0 0.0
    %3694 = vmatpush1.msra.mxu0 0.0
    %3695 = vmatprep.subr.mxu0 0.0
    %3696 = vmatpush1.msra.mxu0 0.0
    %3697 = vmatprep.subr.mxu0 0.0
    %3698 = vmatpush1.msra.mxu0 0.0
    %3699 = vmatprep.subr.mxu0 0.0
    %3700 = vmatpush1.msra.mxu0 0.0
    %3701 = vmatprep.subr.mxu0 0.0
    %3702 = vmatpush1.msra.mxu0 0.0
    %3703 = vmatprep.subr.mxu0 0.0
    %3704 = vmatpush1.msra.mxu0 0.0
    %3705 = vmatprep.subr.mxu0 0.0
    %3706 = vmatpush1.msra.mxu0 0.0
    %3707 = vmatprep.subr.mxu0 0.0
    %3708 = vmatpush1.msra.mxu0 0.0
    %3709 = vmatprep.subr.mxu0 0.0
    %3710 = vmatpush1.msra.mxu0 0.0
    %3711 = vmatprep.subr.mxu0 0.0
    %3712 = vmatpush1.msra.mxu0 0.0
    %3713 = vmatprep.subr.mxu0 0.0
    %3714 = vmatpush1.msra.mxu0 0.0
    %3715 = vmatprep.subr.mxu0 0.0
    %3716 = vmatpush1.msra.mxu0 0.0
    %3717 = vmatprep.subr.mxu0 0.0
    %3718 = vmatpush1.msra.mxu0 0.0
    %3719 = vmatprep.subr.mxu0 0.0
    %3720 = vmatpush1.msra.mxu0 0.0
    %3721 = vmatprep.subr.mxu0 0.0
    %3722 = vmatpush1.msra.mxu0 0.0
    %3723 = vmatprep.subr.mxu0 0.0
    %3724 = vmatpush1.msra.mxu0 0.0
    %3725 = vmatprep.subr.mxu0 0.0
    %3726 = vmatpush1.msra.mxu0 0.0
    %3727 = vmatprep.subr.mxu0 0.0
    %3728 = vmatpush1.msra.mxu0 0.0
    %3729 = vmatprep.subr.mxu0 0.0
    %3730 = vmatpush1.msra.mxu0 0.0
    %3731 = vmatprep.subr.mxu0 0.0
    %3732 = vmatpush1.msra.mxu0 0.0
    %3733 = vmatprep.subr.mxu0 0.0
    %3734 = vmatpush1.msra.mxu0 0.0
    %3735 = vmatprep.mubr.f32.mxu0 0.0
    %3736 = vmatmul.mubr.f32.gmra.mrb[0].mxu0 %v3669
    %v3737 = vpop.f32.mrb[0].mxu0
    %v3738 = vadd.f32 %v3667, %v3737
    %v3739 = vpop.f32.mrb[0].mxu0
    %3740 = vdwg.mxu0
    %v3741 = vtanh.pop %v3738
    %vm3742 = vcmask 254976
    %3743 = vst.msk [vmem:[#allocation4] sm:$0x3] %vm3742, %v3741
    // Predicated region
    $region34: #{cross_attention_forward.1} parent=1 // pred_check
      _
    $region35: #{cross_attention_forward.1} parent=1 // pred_check_branch
      %3745 = sbr.rel (0) target = $region37
    $region36: #{cross_attention_forward.1} parent=1 // pred_region
      %s3747 = ssub.s32 256, 256
      %3748 = vsyncadd [#allocation3], %s3747
      %s3749 = sshll.u32 [#allocation2], 4
      %s3750 = int_to_ptr.vmem [resolvable:$true] %s3749
      %3755 = dma.vmem_to_hbm [thread:$0]  %s3750, 256, %s8, [#allocation3], 128, 128, 8
    $region37: #{cross_attention_forward.1} parent=1 // pred_fallthru
      _
    // Predicated region
    $region38: #{cross_attention_forward.1} parent=1 // pred_check
      _
    $region39: #{cross_attention_forward.1} parent=1 // pred_check_branch
      %3757 = sbr.rel (0) target = $region41
    $region40: #{cross_attention_forward.1} parent=1 // pred_region
      %s3759 = ssub.s32 32, 32
      %3760 = vsyncadd [#allocation5], %s3759
      %s3762 = sshll.u32 [#allocation4], 4
      %s3763 = int_to_ptr.vmem [resolvable:$true] %s3762
      %3765 = dma.vmem_to_hbm [thread:$0]  %s3763, 32, %s9, [#allocation5]
    $region41: #{cross_attention_forward.1} parent=1 // pred_fallthru
      _
    // Predicated region
    $region42: #{cross_attention_forward.1} parent=1 // pred_check
      _
    $region43: #{cross_attention_forward.1} parent=1 // pred_check_branch
      %3767 = sbr.rel (0) target = $region45
    $region44: #{cross_attention_forward.1} parent=1 // pred_region
      %3768 = dma.done [#allocation3], 256
    $region45: #{cross_attention_forward.1} parent=1 // pred_fallthru
      _
    // Predicated region
    $region46: #{cross_attention_forward.1} parent=1 // pred_check
      _
    $region47: #{cross_attention_forward.1} parent=1 // pred_check_branch
      %3770 = sbr.rel (0) target = $region49
    $region48: #{cross_attention_forward.1} parent=1 // pred_region
      %3771 = dma.done [#allocation5], 32
    $region49: #{cross_attention_forward.1} parent=1 // pred_fallthru
      _
    %3772 = vsyncpa [#allocation3], 1
    %3773 = vsyncpa [#allocation5], 1

</llo_original>
